<compile_context>
chip_gen: v5e
topology: v5e:2x2
jax: 0.10.0
libtpu: 0.0.40
codegen_flags: <defaults>
</compile_context>

<pallas_src>
import jax
import jax.numpy as jnp
from jax import lax
from jax.experimental import pallas as pl
from jax.experimental.pallas import tpu as pltpu


BN_EPS = 1e-5
LEAKY_SLOPE = 0.2


def _bn_lrelu_block(x, w, g_ref, be_ref):
    """Linear (no bias) -> BatchNorm1d (train mode) -> LeakyReLU(0.2)."""
    # bf16 x bf16 matmul on the MXU, f32 accumulation.
    h = jnp.dot(x.astype(jnp.bfloat16), w,
                preferred_element_type=jnp.float32)
    # One-pass biased batch statistics: var = E[h^2] - mu^2.
    mu = jnp.mean(h, axis=0, keepdims=True)
    var = jnp.mean(h * h, axis=0, keepdims=True) - mu * mu
    # Fold gamma * rsqrt(var+eps) into one per-feature scale/shift.
    scale = g_ref[...].astype(jnp.float32) * lax.rsqrt(var + BN_EPS)
    shift = be_ref[...].astype(jnp.float32) - mu * scale
    hn = h * scale + shift
    return jnp.where(hn > 0, hn, LEAKY_SLOPE * hn)


def generator_kernel(z_ref,
                     w1, g1, be1,
                     w2, g2, be2,
                     g3, be3,
                     g4, be4,
                     b5,
                     w3_hbm, w4_hbm, w5_hbm,
                     out_ref,
                     w3_buf, w4_buf, w5_buf, sem):
    # Kick off DMAs for the three largest weights immediately; layers 1-2
    # (and 3, 4) compute under the remaining transfer time.
    cp3 = pltpu.make_async_copy(w3_hbm, w3_buf, sem.at[0])
    cp4 = pltpu.make_async_copy(w4_hbm, w4_buf, sem.at[1])
    cp5 = pltpu.make_async_copy(w5_hbm, w5_buf, sem.at[2])
    cp3.start()
    cp4.start()
    cp5.start()

    x = z_ref[...].astype(jnp.float32)
    x = _bn_lrelu_block(x, w1[...], g1, be1)       # C    -> 128
    x = _bn_lrelu_block(x, w2[...], g2, be2)       # 128  -> 256

    cp3.wait()
    x = _bn_lrelu_block(x, w3_buf[...], g3, be3)   # 256  -> 512

    cp4.wait()
    x = _bn_lrelu_block(x, w4_buf[...], g4, be4)   # 512  -> 1024

    cp5.wait()
    y = jnp.dot(x.astype(jnp.bfloat16), w5_buf[...],
                preferred_element_type=jnp.float32) + b5[...]
    out_ref[...] = jnp.tanh(y).astype(out_ref.dtype)


def make_params(key, input_size, img_shape):
    """PyTorch-style init: U(-1/sqrt(fan_in), 1/sqrt(fan_in)) for Linear
    weights (stored bf16); gamma=1, beta=0 for BatchNorm1d.  Biases of the
    four Linear layers followed by BatchNorm are omitted (exactly cancelled
    by the batch-mean subtraction); only the final layer keeps its bias."""
    c_in = input_size[0]
    out_dim = 1
    for d in img_shape:
        out_dim *= d
    dims = [c_in, 128, 256, 512, 1024, out_dim]

    ws, gammas, betas = [], [], []
    b5 = None
    for li in range(5):
        fan_in, fan_out = dims[li], dims[li + 1]
        key, kw, kb = jax.random.split(key, 3)
        bound = 1.0 / (fan_in ** 0.5)
        w = jax.random.uniform(kw, (fan_in, fan_out), jnp.float32, -bound, bound)
        ws.append(w.astype(jnp.bfloat16))
        if li < 4:
            gammas.append(jnp.ones((1, fan_out), jnp.float32))
            betas.append(jnp.zeros((1, fan_out), jnp.float32))
        else:
            b5 = jax.random.uniform(kb, (1, fan_out), jnp.float32, -bound, bound)
    return {"w": ws, "gamma": gammas, "beta": betas, "b5": b5}, out_dim


def generator_forward(z, params, out_dim):
    batch = z.shape[0]
    w, g, be, b5 = params["w"], params["gamma"], params["beta"], params["b5"]

    vmem = pl.BlockSpec(memory_space=pltpu.MemorySpace.VMEM)
    hbm = pl.BlockSpec(memory_space=pl.ANY)

    inputs = (z,
              w[0], g[0], be[0],
              w[1], g[1], be[1],
              g[2], be[2],
              g[3], be[3],
              b5,
              w[2], w[3], w[4])
    in_specs = [vmem] * 12 + [hbm, hbm, hbm]

    return pl.pallas_call(
        generator_kernel,
        out_shape=jax.ShapeDtypeStruct((batch, out_dim), jnp.float32),
        in_specs=in_specs,
        out_specs=vmem,
        scratch_shapes=[
            pltpu.VMEM(w[2].shape, jnp.bfloat16),   # w3 VMEM home
            pltpu.VMEM(w[3].shape, jnp.bfloat16),   # w4
            pltpu.VMEM(w[4].shape, jnp.bfloat16),   # w5
            pltpu.SemaphoreType.DMA((3,)),
        ],
        # Keep scoped VMEM well under every generation's budget (v7x = 64 MiB
        # physical); total live data here is ~3 MiB.
        compiler_params=pltpu.CompilerParams(vmem_limit_bytes=16 << 20),
    )(*inputs)


def generator_reference(z, params):
    """Pure-JAX reference mirroring the kernel's numerics (bf16 weights,
    f32 accumulation, folded BN affine)."""
    w, g, be, b5 = params["w"], params["gamma"], params["beta"], params["b5"]
    x = z.astype(jnp.float32)
    for li in range(4):
        h = jnp.dot(x.astype(jnp.bfloat16), w[li],
                    preferred_element_type=jnp.float32)
        mu = jnp.mean(h, axis=0, keepdims=True)
        var = jnp.mean(h * h, axis=0, keepdims=True) - mu * mu
        scale = g[li] * lax.rsqrt(var + BN_EPS)
        shift = be[li] - mu * scale
        hn = h * scale + shift
        x = jnp.where(hn > 0, hn, LEAKY_SLOPE * hn)
    y = jnp.dot(x.astype(jnp.bfloat16), w[4],
                preferred_element_type=jnp.float32) + b5
    return jnp.tanh(y)


if __name__ == "__main__":
    key = jax.random.PRNGKey(0)
    input_size = (10,)          # one-hot digit vector
    img_shape = (1, 16, 16)     # prod = 256
    batch = 8

    kp, kz = jax.random.split(key)
    params, out_dim = make_params(kp, input_size, img_shape)
    z = jax.random.uniform(kz, (batch, input_size[0]), jnp.float32)

    out = generator_forward(z, params, out_dim)
    out = jax.block_until_ready(out)

    ref = generator_reference(z, params)
    assert out.shape == (batch, out_dim)
    assert bool(jnp.allclose(out, ref, atol=2e-3, rtol=2e-3))

    print("KERNEL_OK")
</pallas_src>

<mosaic_0001>
module attributes {stable_mosaic.version = 11 : i64} {
  func.func @generator_kernel(%arg0: memref<8x10xf32, #tpu.memory_space<vmem>>, %arg1: memref<10x128xbf16, #tpu.memory_space<vmem>>, %arg2: memref<1x128xf32, #tpu.memory_space<vmem>>, %arg3: memref<1x128xf32, #tpu.memory_space<vmem>>, %arg4: memref<128x256xbf16, #tpu.memory_space<vmem>>, %arg5: memref<1x256xf32, #tpu.memory_space<vmem>>, %arg6: memref<1x256xf32, #tpu.memory_space<vmem>>, %arg7: memref<1x512xf32, #tpu.memory_space<vmem>>, %arg8: memref<1x512xf32, #tpu.memory_space<vmem>>, %arg9: memref<1x1024xf32, #tpu.memory_space<vmem>>, %arg10: memref<1x1024xf32, #tpu.memory_space<vmem>>, %arg11: memref<1x256xf32, #tpu.memory_space<vmem>>, %arg12: memref<256x512xbf16, #tpu.memory_space<any>>, %arg13: memref<512x1024xbf16, #tpu.memory_space<any>>, %arg14: memref<1024x256xbf16, #tpu.memory_space<any>>, %arg15: memref<8x256xf32, #tpu.memory_space<vmem>>, %arg16: memref<256x512xbf16, #tpu.memory_space<vmem>>, %arg17: memref<512x1024xbf16, #tpu.memory_space<vmem>>, %arg18: memref<1024x256xbf16, #tpu.memory_space<vmem>>, %arg19: memref<3x!tpu.dma_semaphore, #tpu.memory_space<semaphore_mem>>) attributes {dimension_semantics = [], scalar_prefetch = 0 : i64, scratch_operands = 4 : i64, tpu.core_type = #tpu.core_type<tc>} {
    %c0_i32 = arith.constant 0 : i32
    %0 = tpu.memref_slice %arg19[%c0_i32] : memref<3x!tpu.dma_semaphore, #tpu.memory_space<semaphore_mem>> -> memref<1x!tpu.dma_semaphore, #tpu.memory_space<semaphore_mem>>
    %1 = tpu.memref_squeeze %0 : memref<1x!tpu.dma_semaphore, #tpu.memory_space<semaphore_mem>> -> memref<!tpu.dma_semaphore, #tpu.memory_space<semaphore_mem>>
    tpu.enqueue_dma source(%arg12 : memref<256x512xbf16, #tpu.memory_space<any>>) target(%arg16 : memref<256x512xbf16, #tpu.memory_space<vmem>>) target_semaphore(%1 : memref<!tpu.dma_semaphore, #tpu.memory_space<semaphore_mem>>)
    %c1_i32 = arith.constant 1 : i32
    %2 = tpu.memref_slice %arg19[%c1_i32] : memref<3x!tpu.dma_semaphore, #tpu.memory_space<semaphore_mem>> -> memref<1x!tpu.dma_semaphore, #tpu.memory_space<semaphore_mem>>
    %3 = tpu.memref_squeeze %2 : memref<1x!tpu.dma_semaphore, #tpu.memory_space<semaphore_mem>> -> memref<!tpu.dma_semaphore, #tpu.memory_space<semaphore_mem>>
    tpu.enqueue_dma source(%arg13 : memref<512x1024xbf16, #tpu.memory_space<any>>) target(%arg17 : memref<512x1024xbf16, #tpu.memory_space<vmem>>) target_semaphore(%3 : memref<!tpu.dma_semaphore, #tpu.memory_space<semaphore_mem>>)
    %c2_i32 = arith.constant 2 : i32
    %4 = tpu.memref_slice %arg19[%c2_i32] : memref<3x!tpu.dma_semaphore, #tpu.memory_space<semaphore_mem>> -> memref<1x!tpu.dma_semaphore, #tpu.memory_space<semaphore_mem>>
    %5 = tpu.memref_squeeze %4 : memref<1x!tpu.dma_semaphore, #tpu.memory_space<semaphore_mem>> -> memref<!tpu.dma_semaphore, #tpu.memory_space<semaphore_mem>>
    tpu.enqueue_dma source(%arg14 : memref<1024x256xbf16, #tpu.memory_space<any>>) target(%arg18 : memref<1024x256xbf16, #tpu.memory_space<vmem>>) target_semaphore(%5 : memref<!tpu.dma_semaphore, #tpu.memory_space<semaphore_mem>>)
    %c0 = arith.constant 0 : index
    %c0_0 = arith.constant 0 : index
    %6 = vector.load %arg0[%c0, %c0_0] : memref<8x10xf32, #tpu.memory_space<vmem>>, vector<8x10xf32>
    %c0_1 = arith.constant 0 : index
    %c0_2 = arith.constant 0 : index
    %7 = vector.load %arg1[%c0_1, %c0_2] : memref<10x128xbf16, #tpu.memory_space<vmem>>, vector<10x128xbf16>
    %8 = arith.truncf %6 : vector<8x10xf32> to vector<8x10xbf16>
    %cst = arith.constant dense<0.000000e+00> : vector<8x128xf32>
    %9 = tpu.matmul %8, %7, %cst {dimension_numbers = #tpu.dot_dimension_numbers<[1], [0], [0], [1], [0, 0, 1, 1], [], []>} : vector<8x10xbf16>, vector<10x128xbf16>, vector<8x128xf32> -> vector<8x128xf32>
    %cst_3 = arith.constant dense<0.000000e+00> : vector<128xf32>
    %10 = vector.multi_reduction <add>, %9, %cst_3 [0] : vector<8x128xf32> to vector<128xf32>
    %11 = vector.shape_cast %10 : vector<128xf32> to vector<1x128xf32>
    %cst_4 = arith.constant 8.000000e+00 : f32
    %12 = vector.broadcast %cst_4 : f32 to vector<1x128xf32>
    %13 = arith.divf %11, %12 : vector<1x128xf32>
    %14 = arith.mulf %9, %9 : vector<8x128xf32>
    %cst_5 = arith.constant dense<0.000000e+00> : vector<128xf32>
    %15 = vector.multi_reduction <add>, %14, %cst_5 [0] : vector<8x128xf32> to vector<128xf32>
    %16 = vector.shape_cast %15 : vector<128xf32> to vector<1x128xf32>
    %cst_6 = arith.constant 8.000000e+00 : f32
    %17 = vector.broadcast %cst_6 : f32 to vector<1x128xf32>
    %18 = arith.divf %16, %17 : vector<1x128xf32>
    %19 = arith.mulf %13, %13 : vector<1x128xf32>
    %20 = arith.subf %18, %19 : vector<1x128xf32>
    %c0_7 = arith.constant 0 : index
    %c0_8 = arith.constant 0 : index
    %21 = vector.load %arg2[%c0_7, %c0_8] : memref<1x128xf32, #tpu.memory_space<vmem>>, vector<1x128xf32>
    %cst_9 = arith.constant 9.99999974E-6 : f32
    %22 = vector.broadcast %cst_9 : f32 to vector<1x128xf32>
    %23 = arith.addf %20, %22 : vector<1x128xf32>
    %24 = math.rsqrt %23 : vector<1x128xf32>
    %25 = arith.mulf %21, %24 : vector<1x128xf32>
    %c0_10 = arith.constant 0 : index
    %c0_11 = arith.constant 0 : index
    %26 = vector.load %arg3[%c0_10, %c0_11] : memref<1x128xf32, #tpu.memory_space<vmem>>, vector<1x128xf32>
    %27 = arith.mulf %13, %25 : vector<1x128xf32>
    %28 = arith.subf %26, %27 : vector<1x128xf32>
    %29 = vector.broadcast %25 : vector<1x128xf32> to vector<8x128xf32>
    %30 = arith.mulf %9, %29 : vector<8x128xf32>
    %31 = vector.broadcast %28 : vector<1x128xf32> to vector<8x128xf32>
    %32 = arith.addf %30, %31 : vector<8x128xf32>
    %cst_12 = arith.constant 0.000000e+00 : f32
    %33 = vector.broadcast %cst_12 : f32 to vector<8x128xf32>
    %34 = arith.cmpf ogt, %32, %33 : vector<8x128xf32>
    %cst_13 = arith.constant 2.000000e-01 : f32
    %35 = vector.broadcast %cst_13 : f32 to vector<8x128xf32>
    %36 = arith.mulf %35, %32 : vector<8x128xf32>
    %37 = arith.select %34, %32, %36 : vector<8x128xi1>, vector<8x128xf32>
    %c0_14 = arith.constant 0 : index
    %c0_15 = arith.constant 0 : index
    %38 = vector.load %arg4[%c0_14, %c0_15] : memref<128x256xbf16, #tpu.memory_space<vmem>>, vector<128x256xbf16>
    %39 = arith.truncf %37 : vector<8x128xf32> to vector<8x128xbf16>
    %cst_16 = arith.constant dense<0.000000e+00> : vector<8x256xf32>
    %40 = tpu.matmul %39, %38, %cst_16 {dimension_numbers = #tpu.dot_dimension_numbers<[1], [0], [0], [1], [0, 0, 1, 1], [], []>} : vector<8x128xbf16>, vector<128x256xbf16>, vector<8x256xf32> -> vector<8x256xf32>
    %cst_17 = arith.constant dense<0.000000e+00> : vector<256xf32>
    %41 = vector.multi_reduction <add>, %40, %cst_17 [0] : vector<8x256xf32> to vector<256xf32>
    %42 = vector.shape_cast %41 : vector<256xf32> to vector<1x256xf32>
    %cst_18 = arith.constant 8.000000e+00 : f32
    %43 = vector.broadcast %cst_18 : f32 to vector<1x256xf32>
    %44 = arith.divf %42, %43 : vector<1x256xf32>
    %45 = arith.mulf %40, %40 : vector<8x256xf32>
    %cst_19 = arith.constant dense<0.000000e+00> : vector<256xf32>
    %46 = vector.multi_reduction <add>, %45, %cst_19 [0] : vector<8x256xf32> to vector<256xf32>
    %47 = vector.shape_cast %46 : vector<256xf32> to vector<1x256xf32>
    %cst_20 = arith.constant 8.000000e+00 : f32
    %48 = vector.broadcast %cst_20 : f32 to vector<1x256xf32>
    %49 = arith.divf %47, %48 : vector<1x256xf32>
    %50 = arith.mulf %44, %44 : vector<1x256xf32>
    %51 = arith.subf %49, %50 : vector<1x256xf32>
    %c0_21 = arith.constant 0 : index
    %c0_22 = arith.constant 0 : index
    %52 = vector.load %arg5[%c0_21, %c0_22] : memref<1x256xf32, #tpu.memory_space<vmem>>, vector<1x256xf32>
    %cst_23 = arith.constant 9.99999974E-6 : f32
    %53 = vector.broadcast %cst_23 : f32 to vector<1x256xf32>
    %54 = arith.addf %51, %53 : vector<1x256xf32>
    %55 = math.rsqrt %54 : vector<1x256xf32>
    %56 = arith.mulf %52, %55 : vector<1x256xf32>
    %c0_24 = arith.constant 0 : index
    %c0_25 = arith.constant 0 : index
    %57 = vector.load %arg6[%c0_24, %c0_25] : memref<1x256xf32, #tpu.memory_space<vmem>>, vector<1x256xf32>
    %58 = arith.mulf %44, %56 : vector<1x256xf32>
    %59 = arith.subf %57, %58 : vector<1x256xf32>
    %60 = vector.broadcast %56 : vector<1x256xf32> to vector<8x256xf32>
    %61 = arith.mulf %40, %60 : vector<8x256xf32>
    %62 = vector.broadcast %59 : vector<1x256xf32> to vector<8x256xf32>
    %63 = arith.addf %61, %62 : vector<8x256xf32>
    %cst_26 = arith.constant 0.000000e+00 : f32
    %64 = vector.broadcast %cst_26 : f32 to vector<8x256xf32>
    %65 = arith.cmpf ogt, %63, %64 : vector<8x256xf32>
    %cst_27 = arith.constant 2.000000e-01 : f32
    %66 = vector.broadcast %cst_27 : f32 to vector<8x256xf32>
    %67 = arith.mulf %66, %63 : vector<8x256xf32>
    %68 = arith.select %65, %63, %67 : vector<8x256xi1>, vector<8x256xf32>
    %c0_i32_28 = arith.constant 0 : i32
    %69 = tpu.memref_slice %arg19[%c0_i32_28] : memref<3x!tpu.dma_semaphore, #tpu.memory_space<semaphore_mem>> -> memref<1x!tpu.dma_semaphore, #tpu.memory_space<semaphore_mem>>
    %70 = tpu.memref_squeeze %69 : memref<1x!tpu.dma_semaphore, #tpu.memory_space<semaphore_mem>> -> memref<!tpu.dma_semaphore, #tpu.memory_space<semaphore_mem>>
    tpu.wait_dma2 semaphore(%70 : memref<!tpu.dma_semaphore, #tpu.memory_space<semaphore_mem>>) src(%arg12 : memref<256x512xbf16, #tpu.memory_space<any>>) dst(%arg16 : memref<256x512xbf16, #tpu.memory_space<vmem>>)
    %c0_29 = arith.constant 0 : index
    %c0_30 = arith.constant 0 : index
    %71 = vector.load %arg16[%c0_29, %c0_30] : memref<256x512xbf16, #tpu.memory_space<vmem>>, vector<256x512xbf16>
    %72 = arith.truncf %68 : vector<8x256xf32> to vector<8x256xbf16>
    %cst_31 = arith.constant dense<0.000000e+00> : vector<8x512xf32>
    %73 = tpu.matmul %72, %71, %cst_31 {dimension_numbers = #tpu.dot_dimension_numbers<[1], [0], [0], [1], [0, 0, 1, 1], [], []>} : vector<8x256xbf16>, vector<256x512xbf16>, vector<8x512xf32> -> vector<8x512xf32>
    %cst_32 = arith.constant dense<0.000000e+00> : vector<512xf32>
    %74 = vector.multi_reduction <add>, %73, %cst_32 [0] : vector<8x512xf32> to vector<512xf32>
    %75 = vector.shape_cast %74 : vector<512xf32> to vector<1x512xf32>
    %cst_33 = arith.constant 8.000000e+00 : f32
    %76 = vector.broadcast %cst_33 : f32 to vector<1x512xf32>
    %77 = arith.divf %75, %76 : vector<1x512xf32>
    %78 = arith.mulf %73, %73 : vector<8x512xf32>
    %cst_34 = arith.constant dense<0.000000e+00> : vector<512xf32>
    %79 = vector.multi_reduction <add>, %78, %cst_34 [0] : vector<8x512xf32> to vector<512xf32>
    %80 = vector.shape_cast %79 : vector<512xf32> to vector<1x512xf32>
    %cst_35 = arith.constant 8.000000e+00 : f32
    %81 = vector.broadcast %cst_35 : f32 to vector<1x512xf32>
    %82 = arith.divf %80, %81 : vector<1x512xf32>
    %83 = arith.mulf %77, %77 : vector<1x512xf32>
    %84 = arith.subf %82, %83 : vector<1x512xf32>
    %c0_36 = arith.constant 0 : index
    %c0_37 = arith.constant 0 : index
    %85 = vector.load %arg7[%c0_36, %c0_37] : memref<1x512xf32, #tpu.memory_space<vmem>>, vector<1x512xf32>
    %cst_38 = arith.constant 9.99999974E-6 : f32
    %86 = vector.broadcast %cst_38 : f32 to vector<1x512xf32>
    %87 = arith.addf %84, %86 : vector<1x512xf32>
    %88 = math.rsqrt %87 : vector<1x512xf32>
    %89 = arith.mulf %85, %88 : vector<1x512xf32>
    %c0_39 = arith.constant 0 : index
    %c0_40 = arith.constant 0 : index
    %90 = vector.load %arg8[%c0_39, %c0_40] : memref<1x512xf32, #tpu.memory_space<vmem>>, vector<1x512xf32>
    %91 = arith.mulf %77, %89 : vector<1x512xf32>
    %92 = arith.subf %90, %91 : vector<1x512xf32>
    %93 = vector.broadcast %89 : vector<1x512xf32> to vector<8x512xf32>
    %94 = arith.mulf %73, %93 : vector<8x512xf32>
    %95 = vector.broadcast %92 : vector<1x512xf32> to vector<8x512xf32>
    %96 = arith.addf %94, %95 : vector<8x512xf32>
    %cst_41 = arith.constant 0.000000e+00 : f32
    %97 = vector.broadcast %cst_41 : f32 to vector<8x512xf32>
    %98 = arith.cmpf ogt, %96, %97 : vector<8x512xf32>
    %cst_42 = arith.constant 2.000000e-01 : f32
    %99 = vector.broadcast %cst_42 : f32 to vector<8x512xf32>
    %100 = arith.mulf %99, %96 : vector<8x512xf32>
    %101 = arith.select %98, %96, %100 : vector<8x512xi1>, vector<8x512xf32>
    %c1_i32_43 = arith.constant 1 : i32
    %102 = tpu.memref_slice %arg19[%c1_i32_43] : memref<3x!tpu.dma_semaphore, #tpu.memory_space<semaphore_mem>> -> memref<1x!tpu.dma_semaphore, #tpu.memory_space<semaphore_mem>>
    %103 = tpu.memref_squeeze %102 : memref<1x!tpu.dma_semaphore, #tpu.memory_space<semaphore_mem>> -> memref<!tpu.dma_semaphore, #tpu.memory_space<semaphore_mem>>
    tpu.wait_dma2 semaphore(%103 : memref<!tpu.dma_semaphore, #tpu.memory_space<semaphore_mem>>) src(%arg13 : memref<512x1024xbf16, #tpu.memory_space<any>>) dst(%arg17 : memref<512x1024xbf16, #tpu.memory_space<vmem>>)
    %c0_44 = arith.constant 0 : index
    %c0_45 = arith.constant 0 : index
    %104 = vector.load %arg17[%c0_44, %c0_45] : memref<512x1024xbf16, #tpu.memory_space<vmem>>, vector<512x1024xbf16>
    %105 = arith.truncf %101 : vector<8x512xf32> to vector<8x512xbf16>
    %cst_46 = arith.constant dense<0.000000e+00> : vector<8x1024xf32>
    %106 = tpu.matmul %105, %104, %cst_46 {dimension_numbers = #tpu.dot_dimension_numbers<[1], [0], [0], [1], [0, 0, 1, 1], [], []>} : vector<8x512xbf16>, vector<512x1024xbf16>, vector<8x1024xf32> -> vector<8x1024xf32>
    %cst_47 = arith.constant dense<0.000000e+00> : vector<1024xf32>
    %107 = vector.multi_reduction <add>, %106, %cst_47 [0] : vector<8x1024xf32> to vector<1024xf32>
    %108 = vector.shape_cast %107 : vector<1024xf32> to vector<1x1024xf32>
    %cst_48 = arith.constant 8.000000e+00 : f32
    %109 = vector.broadcast %cst_48 : f32 to vector<1x1024xf32>
    %110 = arith.divf %108, %109 : vector<1x1024xf32>
    %111 = arith.mulf %106, %106 : vector<8x1024xf32>
    %cst_49 = arith.constant dense<0.000000e+00> : vector<1024xf32>
    %112 = vector.multi_reduction <add>, %111, %cst_49 [0] : vector<8x1024xf32> to vector<1024xf32>
    %113 = vector.shape_cast %112 : vector<1024xf32> to vector<1x1024xf32>
    %cst_50 = arith.constant 8.000000e+00 : f32
    %114 = vector.broadcast %cst_50 : f32 to vector<1x1024xf32>
    %115 = arith.divf %113, %114 : vector<1x1024xf32>
    %116 = arith.mulf %110, %110 : vector<1x1024xf32>
    %117 = arith.subf %115, %116 : vector<1x1024xf32>
    %c0_51 = arith.constant 0 : index
    %c0_52 = arith.constant 0 : index
    %118 = vector.load %arg9[%c0_51, %c0_52] : memref<1x1024xf32, #tpu.memory_space<vmem>>, vector<1x1024xf32>
    %cst_53 = arith.constant 9.99999974E-6 : f32
    %119 = vector.broadcast %cst_53 : f32 to vector<1x1024xf32>
    %120 = arith.addf %117, %119 : vector<1x1024xf32>
    %121 = math.rsqrt %120 : vector<1x1024xf32>
    %122 = arith.mulf %118, %121 : vector<1x1024xf32>
    %c0_54 = arith.constant 0 : index
    %c0_55 = arith.constant 0 : index
    %123 = vector.load %arg10[%c0_54, %c0_55] : memref<1x1024xf32, #tpu.memory_space<vmem>>, vector<1x1024xf32>
    %124 = arith.mulf %110, %122 : vector<1x1024xf32>
    %125 = arith.subf %123, %124 : vector<1x1024xf32>
    %126 = vector.broadcast %122 : vector<1x1024xf32> to vector<8x1024xf32>
    %127 = arith.mulf %106, %126 : vector<8x1024xf32>
    %128 = vector.broadcast %125 : vector<1x1024xf32> to vector<8x1024xf32>
    %129 = arith.addf %127, %128 : vector<8x1024xf32>
    %cst_56 = arith.constant 0.000000e+00 : f32
    %130 = vector.broadcast %cst_56 : f32 to vector<8x1024xf32>
    %131 = arith.cmpf ogt, %129, %130 : vector<8x1024xf32>
    %cst_57 = arith.constant 2.000000e-01 : f32
    %132 = vector.broadcast %cst_57 : f32 to vector<8x1024xf32>
    %133 = arith.mulf %132, %129 : vector<8x1024xf32>
    %134 = arith.select %131, %129, %133 : vector<8x1024xi1>, vector<8x1024xf32>
    %c2_i32_58 = arith.constant 2 : i32
    %135 = tpu.memref_slice %arg19[%c2_i32_58] : memref<3x!tpu.dma_semaphore, #tpu.memory_space<semaphore_mem>> -> memref<1x!tpu.dma_semaphore, #tpu.memory_space<semaphore_mem>>
    %136 = tpu.memref_squeeze %135 : memref<1x!tpu.dma_semaphore, #tpu.memory_space<semaphore_mem>> -> memref<!tpu.dma_semaphore, #tpu.memory_space<semaphore_mem>>
    tpu.wait_dma2 semaphore(%136 : memref<!tpu.dma_semaphore, #tpu.memory_space<semaphore_mem>>) src(%arg14 : memref<1024x256xbf16, #tpu.memory_space<any>>) dst(%arg18 : memref<1024x256xbf16, #tpu.memory_space<vmem>>)
    %137 = arith.truncf %134 : vector<8x1024xf32> to vector<8x1024xbf16>
    %c0_59 = arith.constant 0 : index
    %c0_60 = arith.constant 0 : index
    %138 = vector.load %arg18[%c0_59, %c0_60] : memref<1024x256xbf16, #tpu.memory_space<vmem>>, vector<1024x256xbf16>
    %cst_61 = arith.constant dense<0.000000e+00> : vector<8x256xf32>
    %139 = tpu.matmul %137, %138, %cst_61 {dimension_numbers = #tpu.dot_dimension_numbers<[1], [0], [0], [1], [0, 0, 1, 1], [], []>} : vector<8x1024xbf16>, vector<1024x256xbf16>, vector<8x256xf32> -> vector<8x256xf32>
    %c0_62 = arith.constant 0 : index
    %c0_63 = arith.constant 0 : index
    %140 = vector.load %arg11[%c0_62, %c0_63] : memref<1x256xf32, #tpu.memory_space<vmem>>, vector<1x256xf32>
    %141 = vector.broadcast %140 : vector<1x256xf32> to vector<8x256xf32>
    %142 = arith.addf %139, %141 : vector<8x256xf32>
    %143 = math.tanh %142 : vector<8x256xf32>
    %c0_64 = arith.constant 0 : index
    %c0_65 = arith.constant 0 : index
    %144 = vector.load %arg15[%c0_64, %c0_65] : memref<8x256xf32, #tpu.memory_space<vmem>>, vector<8x256xf32>
    tpu.vector_store %arg15[%c0_64, %c0_65], %143 {strides = array<i32>} : memref<8x256xf32, #tpu.memory_space<vmem>>, vector<8x256xf32>,
    return
  }
}

</mosaic_0001>

<llo_original>
// kernel: tpu_custom_call.1
$region0: #{tpu_custom_call.1}
  #allocation0 [shape = 'u32[]', space=smem, size = 0x4, offset = 0x4, fixed_abs, tag = 'smem constant byte address 0x4 - core index']
  #allocation1 [shape = 'u32[72,128]{1,0:T(1,128)}', space=vmem, size = 0x9000, scoped, tag = 'internal scratch']
  #allocation2 [shape = 'bf16[256,512]{1,0:T(8,128)(2,1)}', space=vmem, size = 0x40000, scoped, tag = 'scratch operand']
  #allocation3 [shape = 'bf16[512,1024]{1,0:T(8,128)(2,1)}', space=vmem, size = 0x100000, scoped, tag = 'scratch operand']
  #allocation4 [shape = 'bf16[1024,256]{1,0:T(8,128)(2,1)}', space=vmem, size = 0x80000, scoped, tag = 'scratch operand']
  #allocation5 [shape = 's32[3]{0}', space=sflag, size = 0xc, scoped, tag = 'scratch operand']
  #allocation24 [shape = 's32[]', space=sflag, size = 0x4, offset = 0, fixed_abs, tag = 'sflag constant byte address 0x0 - dummy sync flag']
  #allocation25 [shape = 's32[]', space=sflag, size = 0x4, offset = 0, fixed_abs, tag = 'sflag constant byte address 0x0 - dummy sync flag']
  #allocation26 [shape = 'u32[]', space=smem, size = 0x4, offset = 0x44, fixed_abs, tag = 'smem constant byte address 0x44 - assertion arg 0']
  #allocation27 [shape = 'u32[]', space=smem, size = 0x4, offset = 0x48, fixed_abs, tag = 'smem constant byte address 0x48 - assertion arg 1']
  #allocation28 [shape = 's32[]', space=sflag, size = 0x4, offset = 0, fixed_abs, tag = 'sflag constant byte address 0x0 - dummy sync flag']
  #allocation29 [shape = 's32[]', space=sflag, size = 0x4, offset = 0, fixed_abs, tag = 'sflag constant byte address 0x0 - dummy sync flag']
  #allocation30 [shape = 's32[]', space=sflag, size = 0x4, offset = 0, fixed_abs, tag = 'sflag constant byte address 0x0 - dummy sync flag']
  #allocation31 [shape = 's32[]', space=sflag, size = 0x4, offset = 0, fixed_abs, tag = 'sflag constant byte address 0x0 - dummy sync flag']
  %s0 = inlined_call_operand.hbm [shape: f32[8,10], index: 0, kind: input, shape index: {}]
  %s1 = inlined_call_operand.hbm [shape: bf16[10,128], index: 1, kind: input, shape index: {}]
  %s2 = inlined_call_operand.hbm [shape: f32[1,128], index: 2, kind: input, shape index: {}]
  %s3 = inlined_call_operand.hbm [shape: f32[1,128], index: 3, kind: input, shape index: {}]
  %s4 = inlined_call_operand.hbm [shape: bf16[128,256], index: 4, kind: input, shape index: {}]
  %s5 = inlined_call_operand.hbm [shape: f32[1,256], index: 5, kind: input, shape index: {}]
  %s6 = inlined_call_operand.hbm [shape: f32[1,256], index: 6, kind: input, shape index: {}]
  %s7 = inlined_call_operand.hbm [shape: f32[1,512], index: 7, kind: input, shape index: {}]
  %s8 = inlined_call_operand.hbm [shape: f32[1,512], index: 8, kind: input, shape index: {}]
  %s9 = inlined_call_operand.vmem [shape: f32[1,1024], index: 9, kind: input, shape index: {}]
  %s10 = inlined_call_operand.hbm [shape: f32[1,1024], index: 10, kind: input, shape index: {}]
  %s11 = inlined_call_operand.vmem [shape: f32[1,256], index: 11, kind: input, shape index: {}]
  %s12 = inlined_call_operand.hbm [shape: bf16[256,512], index: 12, kind: input, shape index: {}]
  %s13 = inlined_call_operand.hbm [shape: bf16[512,1024], index: 13, kind: input, shape index: {}]
  %s14 = inlined_call_operand.hbm [shape: bf16[1024,256], index: 14, kind: input, shape index: {}]
  %s15 = inlined_call_operand.hbm [shape: f32[8,256], index: 15, kind: output, shape index: {}]
  %s16 = sld [smem:[#allocation0]]
  $region110: #{tpu_custom_call.1} parent=0
    _
  %s18 = ssub.s32 1, %s16
  %s19 = scalar_select 0, %s18, %s16
  $region1: #{tpu_custom_call.1} parent=0
    #allocation6 [shape = 'u8[4096]{0}', space=vmem, size = 0x1000, scoped, tag = 'input window, operand 0, single buffered']
    #allocation7 [shape = 's32[1]{0}', space=sflag, size = 0x4, scoped, tag = 'scoped memory for tpu_custom_call.1']
    #allocation8 [shape = 's32[1]{0}', space=sflag, size = 0x4, scoped, tag = 'scoped memory for tpu_custom_call.1']
    #allocation9 [shape = 'u8[4096]{0}', space=vmem, size = 0x1000, scoped, tag = 'input window, operand 1, single buffered']
    #allocation10 [shape = 's32[1]{0}', space=sflag, size = 0x4, scoped, tag = 'scoped memory for tpu_custom_call.1']
    #allocation11 [shape = 'u8[512]{0}', space=vmem, size = 0x400, scoped, tag = 'input window, operand 2, single buffered']
    #allocation12 [shape = 'u8[512]{0}', space=vmem, size = 0x400, scoped, tag = 'input window, operand 3, single buffered']
    #allocation13 [shape = 's32[1]{0}', space=sflag, size = 0x4, scoped, tag = 'scoped memory for tpu_custom_call.1']
    #allocation14 [shape = 'u8[65536]{0}', space=vmem, size = 0x10000, scoped, tag = 'input window, operand 4, single buffered']
    #allocation15 [shape = 'u8[1024]{0}', space=vmem, size = 0x400, scoped, tag = 'input window, operand 5, single buffered']
    #allocation16 [shape = 's32[1]{0}', space=sflag, size = 0x4, scoped, tag = 'scoped memory for tpu_custom_call.1']
    #allocation17 [shape = 'u8[1024]{0}', space=vmem, size = 0x400, scoped, tag = 'input window, operand 6, single buffered']
    #allocation18 [shape = 'u8[2048]{0}', space=vmem, size = 0x800, scoped, tag = 'input window, operand 7, single buffered']
    #allocation19 [shape = 's32[1]{0}', space=sflag, size = 0x4, scoped, tag = 'scoped memory for tpu_custom_call.1']
    #allocation20 [shape = 'u8[2048]{0}', space=vmem, size = 0x800, scoped, tag = 'input window, operand 8, single buffered']
    #allocation21 [shape = 'u8[4096]{0}', space=vmem, size = 0x1000, scoped, tag = 'input window, operand 10, single buffered']
    #allocation22 [shape = 's32[1]{0}', space=sflag, size = 0x4, scoped, tag = 'scoped memory for tpu_custom_call.1']
    #allocation23 [shape = 'u8[8192]{0}', space=vmem, size = 0x2000, scoped, tag = 'output window, operand 0, single buffered']
    %20 = vsyncpa [#allocation7], 0
    %21 = vsyncpa [#allocation10], 0
    %22 = vsyncpa [#allocation13], 0
    %23 = vsyncpa [#allocation16], 0
    %24 = vsyncpa [#allocation19], 0
    %25 = vsyncpa [#allocation22], 0
    %26 = vsyncpa [#allocation8], 0
    // Predicated region
    $region2: #{tpu_custom_call.1} parent=1 // pred_check
      _
    $region3: #{tpu_custom_call.1} parent=1 // pred_check_branch
      %28 = sbr.rel (0) target = $region5
    $region4: #{tpu_custom_call.1} parent=1 // pred_region
      %30 = vsyncadd [#allocation7], 0
      %s32 = sshll.u32 %s0, 4
      %s33 = int_to_ptr.hbm [resolvable:$true] %s32
      %s34 = sshll.u32 [#allocation6], 4
      %s35 = int_to_ptr.vmem [resolvable:$true] %s34
      %37 = dma.hbm_to_vmem [thread:$0]  %s33, 128, %s35, [#allocation7]
    $region5: #{tpu_custom_call.1} parent=1 // pred_fallthru
      _
    // Predicated region
    $region6: #{tpu_custom_call.1} parent=1 // pred_check
      _
    $region7: #{tpu_custom_call.1} parent=1 // pred_check_branch
      %39 = sbr.rel (0) target = $region9
    $region8: #{tpu_custom_call.1} parent=1 // pred_region
      %41 = vsyncadd [#allocation10], 0
      %s42 = sshll.u32 %s1, 4
      %s43 = int_to_ptr.hbm [resolvable:$true] %s42
      %s44 = sshll.u32 [#allocation9], 4
      %s45 = int_to_ptr.vmem [resolvable:$true] %s44
      %50 = dma.hbm_to_vmem [thread:$0]  %s43, 128, %s45, [#allocation10], 64, 64, 4
    $region9: #{tpu_custom_call.1} parent=1 // pred_fallthru
      _
    // Predicated region
    $region10: #{tpu_custom_call.1} parent=1 // pred_check
      _
    $region11: #{tpu_custom_call.1} parent=1 // pred_check_branch
      %52 = sbr.rel (0) target = $region13
    $region12: #{tpu_custom_call.1} parent=1 // pred_region
      %54 = vsyncadd [#allocation10], 0
      %s56 = sshll.u32 %s2, 4
      %s57 = int_to_ptr.hbm [resolvable:$true] %s56
      %s58 = sshll.u32 [#allocation11], 4
      %s59 = int_to_ptr.vmem [resolvable:$true] %s58
      %61 = dma.hbm_to_vmem [thread:$0]  %s57, 16, %s59, [#allocation10]
    $region13: #{tpu_custom_call.1} parent=1 // pred_fallthru
      _
    // Predicated region
    $region14: #{tpu_custom_call.1} parent=1 // pred_check
      _
    $region15: #{tpu_custom_call.1} parent=1 // pred_check_branch
      %63 = sbr.rel (0) target = $region17
    $region16: #{tpu_custom_call.1} parent=1 // pred_region
      %65 = vsyncadd [#allocation13], 0
      %s67 = sshll.u32 %s3, 4
      %s68 = int_to_ptr.hbm [resolvable:$true] %s67
      %s69 = sshll.u32 [#allocation12], 4
      %s70 = int_to_ptr.vmem [resolvable:$true] %s69
      %72 = dma.hbm_to_vmem [thread:$0]  %s68, 16, %s70, [#allocation13]
    $region17: #{tpu_custom_call.1} parent=1 // pred_fallthru
      _
    // Predicated region
    $region18: #{tpu_custom_call.1} parent=1 // pred_check
      _
    $region19: #{tpu_custom_call.1} parent=1 // pred_check_branch
      %74 = sbr.rel (0) target = $region21
    $region20: #{tpu_custom_call.1} parent=1 // pred_region
      %76 = vsyncadd [#allocation13], 0
      %s77 = sshll.u32 %s4, 4
      %s78 = int_to_ptr.hbm [resolvable:$true] %s77
      %s79 = sshll.u32 [#allocation14], 4
      %s80 = int_to_ptr.vmem [resolvable:$true] %s79
      %85 = dma.hbm_to_vmem [thread:$0]  %s78, 2048, %s80, [#allocation13], 128, 128, 8
    $region21: #{tpu_custom_call.1} parent=1 // pred_fallthru
      _
    // Predicated region
    $region22: #{tpu_custom_call.1} parent=1 // pred_check
      _
    $region23: #{tpu_custom_call.1} parent=1 // pred_check_branch
      %87 = sbr.rel (0) target = $region25
    $region24: #{tpu_custom_call.1} parent=1 // pred_region
      %89 = vsyncadd [#allocation16], 0
      %s91 = sshll.u32 %s5, 4
      %s92 = int_to_ptr.hbm [resolvable:$true] %s91
      %s93 = sshll.u32 [#allocation15], 4
      %s94 = int_to_ptr.vmem [resolvable:$true] %s93
      %96 = dma.hbm_to_vmem [thread:$0]  %s92, 32, %s94, [#allocation16]
    $region25: #{tpu_custom_call.1} parent=1 // pred_fallthru
      _
    // Predicated region
    $region26: #{tpu_custom_call.1} parent=1 // pred_check
      _
    $region27: #{tpu_custom_call.1} parent=1 // pred_check_branch
      %98 = sbr.rel (0) target = $region29
    $region28: #{tpu_custom_call.1} parent=1 // pred_region
      %100 = vsyncadd [#allocation16], 0
      %s102 = sshll.u32 %s6, 4
      %s103 = int_to_ptr.hbm [resolvable:$true] %s102
      %s104 = sshll.u32 [#allocation17], 4
      %s105 = int_to_ptr.vmem [resolvable:$true] %s104
      %107 = dma.hbm_to_vmem [thread:$0]  %s103, 32, %s105, [#allocation16]
    $region29: #{tpu_custom_call.1} parent=1 // pred_fallthru
      _
    // Predicated region
    $region30: #{tpu_custom_call.1} parent=1 // pred_check
      _
    $region31: #{tpu_custom_call.1} parent=1 // pred_check_branch
      %109 = sbr.rel (0) target = $region33
    $region32: #{tpu_custom_call.1} parent=1 // pred_region
      %111 = vsyncadd [#allocation19], 0
      %s113 = sshll.u32 %s7, 4
      %s114 = int_to_ptr.hbm [resolvable:$true] %s113
      %s115 = sshll.u32 [#allocation18], 4
      %s116 = int_to_ptr.vmem [resolvable:$true] %s115
      %118 = dma.hbm_to_vmem [thread:$0]  %s114, 64, %s116, [#allocation19]
    $region33: #{tpu_custom_call.1} parent=1 // pred_fallthru
      _
    // Predicated region
    $region34: #{tpu_custom_call.1} parent=1 // pred_check
      _
    $region35: #{tpu_custom_call.1} parent=1 // pred_check_branch
      %120 = sbr.rel (0) target = $region37
    $region36: #{tpu_custom_call.1} parent=1 // pred_region
      %122 = vsyncadd [#allocation19], 0
      %s124 = sshll.u32 %s8, 4
      %s125 = int_to_ptr.hbm [resolvable:$true] %s124
      %s126 = sshll.u32 [#allocation20], 4
      %s127 = int_to_ptr.vmem [resolvable:$true] %s126
      %129 = dma.hbm_to_vmem [thread:$0]  %s125, 64, %s127, [#allocation19]
    $region37: #{tpu_custom_call.1} parent=1 // pred_fallthru
      _
    // Predicated region
    $region38: #{tpu_custom_call.1} parent=1 // pred_check
      _
    $region39: #{tpu_custom_call.1} parent=1 // pred_check_branch
      %131 = sbr.rel (0) target = $region41
    $region40: #{tpu_custom_call.1} parent=1 // pred_region
      _
    $region41: #{tpu_custom_call.1} parent=1 // pred_fallthru
      _
    // Predicated region
    $region42: #{tpu_custom_call.1} parent=1 // pred_check
      _
    $region43: #{tpu_custom_call.1} parent=1 // pred_check_branch
      %133 = sbr.rel (0) target = $region45
    $region44: #{tpu_custom_call.1} parent=1 // pred_region
      %135 = vsyncadd [#allocation22], 0
      %s137 = sshll.u32 %s10, 4
      %s138 = int_to_ptr.hbm [resolvable:$true] %s137
      %s139 = sshll.u32 [#allocation21], 4
      %s140 = int_to_ptr.vmem [resolvable:$true] %s139
      %142 = dma.hbm_to_vmem [thread:$0]  %s138, 128, %s140, [#allocation22]
    $region45: #{tpu_custom_call.1} parent=1 // pred_fallthru
      _
    // Predicated region
    $region46: #{tpu_custom_call.1} parent=1 // pred_check
      _
    $region47: #{tpu_custom_call.1} parent=1 // pred_check_branch
      %144 = sbr.rel (0) target = $region49
    $region48: #{tpu_custom_call.1} parent=1 // pred_region
      _
    $region49: #{tpu_custom_call.1} parent=1 // pred_fallthru
      _
    // Predicated region
    $region50: #{tpu_custom_call.1} parent=1 // pred_check
      _
    $region51: #{tpu_custom_call.1} parent=1 // pred_check_branch
      %146 = sbr.rel (0) target = $region53
    $region52: #{tpu_custom_call.1} parent=1 // pred_region
      %148 = dma.done [#allocation7], 128
    $region53: #{tpu_custom_call.1} parent=1 // pred_fallthru
      _
    // Predicated region
    $region54: #{tpu_custom_call.1} parent=1 // pred_check
      _
    $region55: #{tpu_custom_call.1} parent=1 // pred_check_branch
      %150 = sbr.rel (0) target = $region57
    $region56: #{tpu_custom_call.1} parent=1 // pred_region
      %152 = dma.done [#allocation10], 128
    $region57: #{tpu_custom_call.1} parent=1 // pred_fallthru
      _
    // Predicated region
    $region58: #{tpu_custom_call.1} parent=1 // pred_check
      _
    $region59: #{tpu_custom_call.1} parent=1 // pred_check_branch
      %154 = sbr.rel (0) target = $region61
    $region60: #{tpu_custom_call.1} parent=1 // pred_region
      %156 = dma.done [#allocation10], 16
    $region61: #{tpu_custom_call.1} parent=1 // pred_fallthru
      _
    // Predicated region
    $region62: #{tpu_custom_call.1} parent=1 // pred_check
      _
    $region63: #{tpu_custom_call.1} parent=1 // pred_check_branch
      %158 = sbr.rel (0) target = $region65
    $region64: #{tpu_custom_call.1} parent=1 // pred_region
      %160 = dma.done [#allocation13], 16
    $region65: #{tpu_custom_call.1} parent=1 // pred_fallthru
      _
    // Predicated region
    $region66: #{tpu_custom_call.1} parent=1 // pred_check
      _
    $region67: #{tpu_custom_call.1} parent=1 // pred_check_branch
      %162 = sbr.rel (0) target = $region69
    $region68: #{tpu_custom_call.1} parent=1 // pred_region
      %164 = dma.done [#allocation13], 2048
    $region69: #{tpu_custom_call.1} parent=1 // pred_fallthru
      _
    // Predicated region
    $region70: #{tpu_custom_call.1} parent=1 // pred_check
      _
    $region71: #{tpu_custom_call.1} parent=1 // pred_check_branch
      %166 = sbr.rel (0) target = $region73
    $region72: #{tpu_custom_call.1} parent=1 // pred_region
      %168 = dma.done [#allocation16], 32
    $region73: #{tpu_custom_call.1} parent=1 // pred_fallthru
      _
    // Predicated region
    $region74: #{tpu_custom_call.1} parent=1 // pred_check
      _
    $region75: #{tpu_custom_call.1} parent=1 // pred_check_branch
      %170 = sbr.rel (0) target = $region77
    $region76: #{tpu_custom_call.1} parent=1 // pred_region
      %172 = dma.done [#allocation16], 32
    $region77: #{tpu_custom_call.1} parent=1 // pred_fallthru
      _
    // Predicated region
    $region78: #{tpu_custom_call.1} parent=1 // pred_check
      _
    $region79: #{tpu_custom_call.1} parent=1 // pred_check_branch
      %174 = sbr.rel (0) target = $region81
    $region80: #{tpu_custom_call.1} parent=1 // pred_region
      %176 = dma.done [#allocation19], 64
    $region81: #{tpu_custom_call.1} parent=1 // pred_fallthru
      _
    // Predicated region
    $region82: #{tpu_custom_call.1} parent=1 // pred_check
      _
    $region83: #{tpu_custom_call.1} parent=1 // pred_check_branch
      %178 = sbr.rel (0) target = $region85
    $region84: #{tpu_custom_call.1} parent=1 // pred_region
      %180 = dma.done [#allocation19], 64
    $region85: #{tpu_custom_call.1} parent=1 // pred_fallthru
      _
    // Predicated region
    $region86: #{tpu_custom_call.1} parent=1 // pred_check
      _
    $region87: #{tpu_custom_call.1} parent=1 // pred_check_branch
      %182 = sbr.rel (0) target = $region89
    $region88: #{tpu_custom_call.1} parent=1 // pred_region
      %184 = dma.done [#allocation22], 128
    $region89: #{tpu_custom_call.1} parent=1 // pred_fallthru
      _
    // Predicated region
    $region90: #{tpu_custom_call.1} parent=1 // pred_check
      _
    $region91: #{tpu_custom_call.1} parent=1 // pred_check_branch
      %187 = sbr.rel target = $region93
    $region92: #{tpu_custom_call.1} parent=1 // pred_region
      %188 = sst [smem:[#allocation26]] [#allocation25]
      %189 = sst [smem:[#allocation27]] [#allocation24]
    $region93: #{tpu_custom_call.1} parent=1 // pred_fallthru
      _
    %191 = shalt.err (0)
    %s193 = sshll.u32 %s12, 4
    %s194 = int_to_ptr.hbm [resolvable:$true] %s193
    %s195 = sshll.u32 [#allocation2], 4
    %s196 = int_to_ptr.vmem [resolvable:$true] %s195
    %198 = dma.hbm_to_vmem [thread:$0]  %s194, 8192, %s196, [#allocation5]
    %s199 = scalar_lea.sflag [#allocation5], 1
    // Predicated region
    $region94: #{tpu_custom_call.1} parent=1 // pred_check
      _
    $region95: #{tpu_custom_call.1} parent=1 // pred_check_branch
      %201 = sbr.rel target = $region97
    $region96: #{tpu_custom_call.1} parent=1 // pred_region
      %202 = sst [smem:[#allocation26]] [#allocation29]
      %203 = sst [smem:[#allocation27]] [#allocation28]
    $region97: #{tpu_custom_call.1} parent=1 // pred_fallthru
      _
    %205 = shalt.err (0)
    %s207 = sshll.u32 %s13, 4
    %s208 = int_to_ptr.hbm [resolvable:$true] %s207
    %s209 = sshll.u32 [#allocation3], 4
    %s210 = int_to_ptr.vmem [resolvable:$true] %s209
    %212 = dma.hbm_to_vmem [thread:$0]  %s208, 32768, %s210, %s199
    %s213 = scalar_lea.sflag [#allocation5], 2
    // Predicated region
    $region98: #{tpu_custom_call.1} parent=1 // pred_check
      _
    $region99: #{tpu_custom_call.1} parent=1 // pred_check_branch
      %215 = sbr.rel target = $region101
    $region100: #{tpu_custom_call.1} parent=1 // pred_region
      %216 = sst [smem:[#allocation26]] [#allocation31]
      %217 = sst [smem:[#allocation27]] [#allocation30]
    $region101: #{tpu_custom_call.1} parent=1 // pred_fallthru
      _
    %219 = shalt.err (0)
    %s221 = sshll.u32 %s14, 4
    %s222 = int_to_ptr.hbm [resolvable:$true] %s221
    %s223 = sshll.u32 [#allocation4], 4
    %s224 = int_to_ptr.vmem [resolvable:$true] %s223
    %226 = dma.hbm_to_vmem [thread:$0]  %s222, 16384, %s224, %s213
    %v227 = vld [vmem:[#allocation6] sm:$0xff]
    %v228 = vld [vmem:[#allocation9] sm:$0xf]
    %v229 = vld [vmem:[#allocation9 + $0x4] sm:$0x1]
    %v230 = vpack.c.bf16 %v227, %v227
    %v233 = vunpack.c.l.b16 %v228
    %v234 = vunpack.c.l.b16 %v229
    %v235 = vpack.c.b16 %v234, %v233
    %vm236 = vcmask 80896
    %v238 = vsel %vm236, %v230, 0
    %vm240 = vcmask 1044480
    %v242 = vsel %vm240, %v235, 0
    %244 = vmatpush.bf16.msra.mxu0 0
    %245 = vmatpush.bf16.msra.mxu0 0
    %246 = vmatpush.bf16.msra.mxu0 0
    %247 = vmatpush.bf16.msra.mxu0 0
    %248 = vmatpush.bf16.msra.mxu0 0
    %249 = vmatpush.bf16.msra.mxu0 0
    %250 = vmatpush.bf16.msra.mxu0 0
    %251 = vmatpush.bf16.msra.mxu0 %v242
    %252 = vmatmul.bf16.gmra.mxu0 %v238
    %v253 = vpop.f32.mrf.mxu0
    %v254 = vadd.f32 0.0, %v253
    %v255 = vpop.f32.mrf.mxu0
    %256 = vdwg.mxu0
    %v257 = vrot.slane %v254, 4
    %v258 = vadd.f32 %v254, %v257
    %v259 = vrot.slane %v258, 2
    %v260 = vadd.f32 %v258, %v259
    %v261 = vrot.slane %v260, 1
    %v262 = vadd.f32 %v260, %v261
    %v263 = vrcp.pop 8.0
    %v264 = vmul.f32 8.0, %v263
    %v265 = vsub.f32 1.0, %v264
    %v266 = vmul.f32 %v263, %v265
    %v267 = vadd.f32 %v263, %v266
    %vm268 = vweird.f32 %v263
    %v269 = vsel %vm268, %v263, %v267
    %v270 = vmul.f32 %v262, %v269
    %v271 = vmul.f32 %v254, %v254
    %v272 = vrot.slane %v271, 4
    %v273 = vadd.f32 %v271, %v272
    %v274 = vrot.slane %v273, 2
    %v275 = vadd.f32 %v273, %v274
    %v276 = vrot.slane %v275, 1
    %v277 = vadd.f32 %v275, %v276
    %v278 = vmul.f32 %v277, %v269
    %v279 = vmul.f32 %v270, %v270
    %v280 = vsub.f32 %v278, %v279
    %v281 = vld [vmem:[#allocation11] sm:$0x1]
    %v282 = vadd.f32 %v280, 1e-05
    %v283 = vrsqrt.pop %v282
    %v284 = vmul.f32 %v283, %v282
    %v285 = vmul.f32 %v284, %v283
    %v286 = vmul.f32 0.5, %v285
    %v287 = vsub.f32 1.5, %v286
    %v288 = vmul.f32 %v283, %v287
    %vm289 = vweird.f32 %v282
    %vm290 = vweird.f32 %v283
    %vm291 = vmor %vm289, %vm290
    %v292 = vsel %vm291, %v283, %v288
    %v293 = vmul.f32 %v281, %v292
    %v294 = vld [vmem:[#allocation12] sm:$0x1]
    %v295 = vmul.f32 %v270, %v293
    %v296 = vsub.f32 %v294, %v295
    %v298 = vperm.slane %v293, 0
    %v300 = vmul.f32 %v254, %v298
    %v302 = vperm.slane %v296, 0
    %v304 = vadd.f32 %v300, %v302
    %vm305 = vcmp.gt.f32.partialorder %v304, 0.0
    %v306 = vmul.f32 %v304, 0.2
    %v307 = vsel %vm305, %v304, %v306
    %v308 = vld [vmem:[#allocation14] sm:$0xff]
    %v309 = vld [vmem:[#allocation14 + $0x8] sm:$0xff]
    %v310 = vld [vmem:[#allocation14 + $0x10] sm:$0xff]
    %v311 = vld [vmem:[#allocation14 + $0x18] sm:$0xff]
    %v312 = vld [vmem:[#allocation14 + $0x20] sm:$0xff]
    %v313 = vld [vmem:[#allocation14 + $0x28] sm:$0xff]
    %v314 = vld [vmem:[#allocation14 + $0x30] sm:$0xff]
    %v315 = vld [vmem:[#allocation14 + $0x38] sm:$0xff]
    %v316 = vld [vmem:[#allocation14 + $0x40] sm:$0xff]
    %v317 = vld [vmem:[#allocation14 + $0x48] sm:$0xff]
    %v318 = vld [vmem:[#allocation14 + $0x50] sm:$0xff]
    %v319 = vld [vmem:[#allocation14 + $0x58] sm:$0xff]
    %v320 = vld [vmem:[#allocation14 + $0x60] sm:$0xff]
    %v321 = vld [vmem:[#allocation14 + $0x68] sm:$0xff]
    %v322 = vld [vmem:[#allocation14 + $0x70] sm:$0xff]
    %v323 = vld [vmem:[#allocation14 + $0x78] sm:$0xff]
    %v324 = vpack.c.bf16 %v307, %v307
    %v341 = vunpack.c.l.b16 %v308
    %v342 = vunpack.c.h.b16 %v308
    %v343 = vunpack.c.l.b16 %v309
    %v344 = vunpack.c.h.b16 %v309
    %v345 = vunpack.c.l.b16 %v310
    %v346 = vunpack.c.h.b16 %v310
    %v347 = vunpack.c.l.b16 %v311
    %v348 = vunpack.c.h.b16 %v311
    %v349 = vunpack.c.l.b16 %v312
    %v350 = vunpack.c.h.b16 %v312
    %v351 = vunpack.c.l.b16 %v313
    %v352 = vunpack.c.h.b16 %v313
    %v353 = vunpack.c.l.b16 %v314
    %v354 = vunpack.c.h.b16 %v314
    %v355 = vunpack.c.l.b16 %v315
    %v356 = vunpack.c.h.b16 %v315
    %v357 = vunpack.c.l.b16 %v316
    %v358 = vunpack.c.h.b16 %v316
    %v359 = vunpack.c.l.b16 %v317
    %v360 = vunpack.c.h.b16 %v317
    %v361 = vunpack.c.l.b16 %v318
    %v362 = vunpack.c.h.b16 %v318
    %v363 = vunpack.c.l.b16 %v319
    %v364 = vunpack.c.h.b16 %v319
    %v365 = vunpack.c.l.b16 %v320
    %v366 = vunpack.c.h.b16 %v320
    %v367 = vunpack.c.l.b16 %v321
    %v368 = vunpack.c.h.b16 %v321
    %v369 = vunpack.c.l.b16 %v322
    %v370 = vunpack.c.h.b16 %v322
    %v371 = vunpack.c.l.b16 %v323
    %v372 = vunpack.c.h.b16 %v323
    %v373 = vpack.c.b16 %v343, %v341
    %v374 = vpack.c.b16 %v344, %v342
    %v375 = vpack.c.b16 %v347, %v345
    %v376 = vpack.c.b16 %v348, %v346
    %v377 = vpack.c.b16 %v351, %v349
    %v378 = vpack.c.b16 %v352, %v350
    %v379 = vpack.c.b16 %v355, %v353
    %v380 = vpack.c.b16 %v356, %v354
    %v381 = vpack.c.b16 %v359, %v357
    %v382 = vpack.c.b16 %v360, %v358
    %v383 = vpack.c.b16 %v363, %v361
    %v384 = vpack.c.b16 %v364, %v362
    %v385 = vpack.c.b16 %v367, %v365
    %v386 = vpack.c.b16 %v368, %v366
    %v387 = vpack.c.b16 %v371, %v369
    %v388 = vpack.c.b16 %v372, %v370
    %405 = vmatpush.bf16.msra.mxu0 %v387
    %406 = vmatpush.bf16.msra.mxu0 %v385
    %407 = vmatpush.bf16.msra.mxu0 %v383
    %408 = vmatpush.bf16.msra.mxu0 %v381
    %409 = vmatpush.bf16.msra.mxu0 %v379
    %410 = vmatpush.bf16.msra.mxu0 %v377
    %411 = vmatpush.bf16.msra.mxu0 %v375
    %412 = vmatpush.bf16.msra.mxu0 %v373
    %413 = vmatmul.bf16.gmra.mxu0 %v324
    %v414 = vpop.f32.mrf.mxu0
    %v415 = vadd.f32 0.0, %v414
    %v416 = vpop.f32.mrf.mxu0
    %417 = vdwg.mxu0
    %418 = vmatpush.bf16.msra.mxu0 %v388
    %419 = vmatpush.bf16.msra.mxu0 %v386
    %420 = vmatpush.bf16.msra.mxu0 %v384
    %421 = vmatpush.bf16.msra.mxu0 %v382
    %422 = vmatpush.bf16.msra.mxu0 %v380
    %423 = vmatpush.bf16.msra.mxu0 %v378
    %424 = vmatpush.bf16.msra.mxu0 %v376
    %425 = vmatpush.bf16.msra.mxu0 %v374
    %426 = vmatmul.bf16.gmra.mxu0 %v324
    %v427 = vpop.f32.mrf.mxu0
    %v428 = vadd.f32 0.0, %v427
    %v429 = vpop.f32.mrf.mxu0
    %430 = vdwg.mxu0
    %v431 = vrot.slane %v415, 4
    %v432 = vadd.f32 %v415, %v431
    %v433 = vrot.slane %v432, 2
    %v434 = vadd.f32 %v432, %v433
    %v435 = vrot.slane %v434, 1
    %v436 = vadd.f32 %v434, %v435
    %v437 = vrot.slane %v428, 4
    %v438 = vadd.f32 %v428, %v437
    %v439 = vrot.slane %v438, 2
    %v440 = vadd.f32 %v438, %v439
    %v441 = vrot.slane %v440, 1
    %v442 = vadd.f32 %v440, %v441
    %v443 = vmul.f32 %v436, %v269
    %v444 = vmul.f32 %v442, %v269
    %v445 = vmul.f32 %v415, %v415
    %v446 = vmul.f32 %v428, %v428
    %v447 = vrot.slane %v445, 4
    %v448 = vadd.f32 %v445, %v447
    %v449 = vrot.slane %v448, 2
    %v450 = vadd.f32 %v448, %v449
    %v451 = vrot.slane %v450, 1
    %v452 = vadd.f32 %v450, %v451
    %v453 = vrot.slane %v446, 4
    %v454 = vadd.f32 %v446, %v453
    %v455 = vrot.slane %v454, 2
    %v456 = vadd.f32 %v454, %v455
    %v457 = vrot.slane %v456, 1
    %v458 = vadd.f32 %v456, %v457
    %v459 = vmul.f32 %v452, %v269
    %v460 = vmul.f32 %v458, %v269
    %v461 = vmul.f32 %v443, %v443
    %v462 = vmul.f32 %v444, %v444
    %v463 = vsub.f32 %v459, %v461
    %v464 = vsub.f32 %v460, %v462
    %v465 = vld [vmem:[#allocation15] sm:$0x3]
    %v466 = vadd.f32 %v463, 1e-05
    %v467 = vadd.f32 %v464, 1e-05
    %v468 = vrsqrt.pop %v466
    %v469 = vmul.f32 %v468, %v466
    %v470 = vmul.f32 %v469, %v468
    %v471 = vmul.f32 0.5, %v470
    %v472 = vsub.f32 1.5, %v471
    %v473 = vmul.f32 %v468, %v472
    %vm474 = vweird.f32 %v466
    %vm475 = vweird.f32 %v468
    %vm476 = vmor %vm474, %vm475
    %v477 = vsel %vm476, %v468, %v473
    %v478 = vrsqrt.pop %v467
    %v479 = vmul.f32 %v478, %v467
    %v480 = vmul.f32 %v479, %v478
    %v481 = vmul.f32 0.5, %v480
    %v482 = vsub.f32 1.5, %v481
    %v483 = vmul.f32 %v478, %v482
    %vm484 = vweird.f32 %v467
    %vm485 = vweird.f32 %v478
    %vm486 = vmor %vm484, %vm485
    %v487 = vsel %vm486, %v478, %v483
    %v490 = vrot.slane %v487, 7
    %vm491 = vcmask 1040384
    %v492 = vsel %vm491, %v477, %v490
    %v494 = vmul.f32 %v465, %v492
    %v495 = vld [vmem:[#allocation17] sm:$0x3]
    %v497 = vperm.slane %v494, 0
    %v498 = vperm.slane %v494, 1
    %v501 = vmul.f32 %v443, %v497
    %v502 = vmul.f32 %v444, %v498
    %v505 = vrot.slane %v502, 7
    %v506 = vsel %vm491, %v501, %v505
    %v508 = vsub.f32 %v495, %v506
    %v509 = vmul.f32 %v415, %v497
    %v510 = vmul.f32 %v428, %v498
    %v512 = vperm.slane %v508, 0
    %v513 = vperm.slane %v508, 1
    %v516 = vadd.f32 %v509, %v512
    %v517 = vadd.f32 %v510, %v513
    %vm518 = vcmp.gt.f32.partialorder %v516, 0.0
    %vm519 = vcmp.gt.f32.partialorder %v517, 0.0
    %v520 = vmul.f32 %v516, 0.2
    %v521 = vmul.f32 %v517, 0.2
    %v522 = vsel %vm518, %v516, %v520
    %v523 = vsel %vm519, %v517, %v521
    %s524 = smul.u32 4, 32
    %s525 = smul.u32 %s524, 4
    %s526 = sshll.u32 %s525, 4
    %527 = dma.done [#allocation5], %s526
    %v528 = vld [vmem:[#allocation2] sm:$0xff]
    %v529 = vld [vmem:[#allocation2 + $0x8] sm:$0xff]
    %v530 = vld [vmem:[#allocation2 + $0x10] sm:$0xff]
    %v531 = vld [vmem:[#allocation2 + $0x18] sm:$0xff]
    %v532 = vld [vmem:[#allocation2 + $0x20] sm:$0xff]
    %v533 = vld [vmem:[#allocation2 + $0x28] sm:$0xff]
    %v534 = vld [vmem:[#allocation2 + $0x30] sm:$0xff]
    %v535 = vld [vmem:[#allocation2 + $0x38] sm:$0xff]
    %v536 = vld [vmem:[#allocation2 + $0x40] sm:$0xff]
    %v537 = vld [vmem:[#allocation2 + $0x48] sm:$0xff]
    %v538 = vld [vmem:[#allocation2 + $0x50] sm:$0xff]
    %v539 = vld [vmem:[#allocation2 + $0x58] sm:$0xff]
    %v540 = vld [vmem:[#allocation2 + $0x60] sm:$0xff]
    %v541 = vld [vmem:[#allocation2 + $0x68] sm:$0xff]
    %v542 = vld [vmem:[#allocation2 + $0x70] sm:$0xff]
    %v543 = vld [vmem:[#allocation2 + $0x78] sm:$0xff]
    %v544 = vld [vmem:[#allocation2 + $0x80] sm:$0xff]
    %v545 = vld [vmem:[#allocation2 + $0x88] sm:$0xff]
    %v546 = vld [vmem:[#allocation2 + $0x90] sm:$0xff]
    %v547 = vld [vmem:[#allocation2 + $0x98] sm:$0xff]
    %v548 = vld [vmem:[#allocation2 + $0xa0] sm:$0xff]
    %v549 = vld [vmem:[#allocation2 + $0xa8] sm:$0xff]
    %v550 = vld [vmem:[#allocation2 + $0xb0] sm:$0xff]
    %v551 = vld [vmem:[#allocation2 + $0xb8] sm:$0xff]
    %v552 = vld [vmem:[#allocation2 + $0xc0] sm:$0xff]
    %v553 = vld [vmem:[#allocation2 + $0xc8] sm:$0xff]
    %v554 = vld [vmem:[#allocation2 + $0xd0] sm:$0xff]
    %v555 = vld [vmem:[#allocation2 + $0xd8] sm:$0xff]
    %v556 = vld [vmem:[#allocation2 + $0xe0] sm:$0xff]
    %v557 = vld [vmem:[#allocation2 + $0xe8] sm:$0xff]
    %v558 = vld [vmem:[#allocation2 + $0xf0] sm:$0xff]
    %v559 = vld [vmem:[#allocation2 + $0xf8] sm:$0xff]
    %v560 = vld [vmem:[#allocation2 + $0x100] sm:$0xff]
    %v561 = vld [vmem:[#allocation2 + $0x108] sm:$0xff]
    %v562 = vld [vmem:[#allocation2 + $0x110] sm:$0xff]
    %v563 = vld [vmem:[#allocation2 + $0x118] sm:$0xff]
    %v564 = vld [vmem:[#allocation2 + $0x120] sm:$0xff]
    %v565 = vld [vmem:[#allocation2 + $0x128] sm:$0xff]
    %v566 = vld [vmem:[#allocation2 + $0x130] sm:$0xff]
    %v567 = vld [vmem:[#allocation2 + $0x138] sm:$0xff]
    %v568 = vld [vmem:[#allocation2 + $0x140] sm:$0xff]
    %v569 = vld [vmem:[#allocation2 + $0x148] sm:$0xff]
    %v570 = vld [vmem:[#allocation2 + $0x150] sm:$0xff]
    %v571 = vld [vmem:[#allocation2 + $0x158] sm:$0xff]
    %v572 = vld [vmem:[#allocation2 + $0x160] sm:$0xff]
    %v573 = vld [vmem:[#allocation2 + $0x168] sm:$0xff]
    %v574 = vld [vmem:[#allocation2 + $0x170] sm:$0xff]
    %v575 = vld [vmem:[#allocation2 + $0x178] sm:$0xff]
    %v576 = vld [vmem:[#allocation2 + $0x180] sm:$0xff]
    %v577 = vld [vmem:[#allocation2 + $0x188] sm:$0xff]
    %v578 = vld [vmem:[#allocation2 + $0x190] sm:$0xff]
    %v579 = vld [vmem:[#allocation2 + $0x198] sm:$0xff]
    %v580 = vld [vmem:[#allocation2 + $0x1a0] sm:$0xff]
    %v581 = vld [vmem:[#allocation2 + $0x1a8] sm:$0xff]
    %v582 = vld [vmem:[#allocation2 + $0x1b0] sm:$0xff]
    %v583 = vld [vmem:[#allocation2 + $0x1b8] sm:$0xff]
    %v584 = vld [vmem:[#allocation2 + $0x1c0] sm:$0xff]
    %v585 = vld [vmem:[#allocation2 + $0x1c8] sm:$0xff]
    %v586 = vld [vmem:[#allocation2 + $0x1d0] sm:$0xff]
    %v587 = vld [vmem:[#allocation2 + $0x1d8] sm:$0xff]
    %v588 = vld [vmem:[#allocation2 + $0x1e0] sm:$0xff]
    %v589 = vld [vmem:[#allocation2 + $0x1e8] sm:$0xff]
    %v590 = vld [vmem:[#allocation2 + $0x1f0] sm:$0xff]
    %v591 = vld [vmem:[#allocation2 + $0x1f8] sm:$0xff]
    %v592 = vpack.c.bf16 %v522, %v522
    %v593 = vpack.c.bf16 %v523, %v523
    %v658 = vunpack.c.l.b16 %v528
    %v659 = vunpack.c.h.b16 %v528
    %v660 = vunpack.c.l.b16 %v529
    %v661 = vunpack.c.h.b16 %v529
    %v662 = vunpack.c.l.b16 %v530
    %v663 = vunpack.c.h.b16 %v530
    %v664 = vunpack.c.l.b16 %v531
    %v665 = vunpack.c.h.b16 %v531
    %v666 = vunpack.c.l.b16 %v532
    %v667 = vunpack.c.h.b16 %v532
    %v668 = vunpack.c.l.b16 %v533
    %v669 = vunpack.c.h.b16 %v533
    %v670 = vunpack.c.l.b16 %v534
    %v671 = vunpack.c.h.b16 %v534
    %v672 = vunpack.c.l.b16 %v535
    %v673 = vunpack.c.h.b16 %v535
    %v674 = vunpack.c.l.b16 %v536
    %v675 = vunpack.c.h.b16 %v536
    %v676 = vunpack.c.l.b16 %v537
    %v677 = vunpack.c.h.b16 %v537
    %v678 = vunpack.c.l.b16 %v538
    %v679 = vunpack.c.h.b16 %v538
    %v680 = vunpack.c.l.b16 %v539
    %v681 = vunpack.c.h.b16 %v539
    %v682 = vunpack.c.l.b16 %v540
    %v683 = vunpack.c.h.b16 %v540
    %v684 = vunpack.c.l.b16 %v541
    %v685 = vunpack.c.h.b16 %v541
    %v686 = vunpack.c.l.b16 %v542
    %v687 = vunpack.c.h.b16 %v542
    %v688 = vunpack.c.l.b16 %v543
    %v689 = vunpack.c.h.b16 %v543
    %v690 = vunpack.c.l.b16 %v544
    %v691 = vunpack.c.h.b16 %v544
    %v692 = vunpack.c.l.b16 %v545
    %v693 = vunpack.c.h.b16 %v545
    %v694 = vunpack.c.l.b16 %v546
    %v695 = vunpack.c.h.b16 %v546
    %v696 = vunpack.c.l.b16 %v547
    %v697 = vunpack.c.h.b16 %v547
    %v698 = vunpack.c.l.b16 %v548
    %v699 = vunpack.c.h.b16 %v548
    %v700 = vunpack.c.l.b16 %v549
    %v701 = vunpack.c.h.b16 %v549
    %v702 = vunpack.c.l.b16 %v550
    %v703 = vunpack.c.h.b16 %v550
    %v704 = vunpack.c.l.b16 %v551
    %v705 = vunpack.c.h.b16 %v551
    %v706 = vunpack.c.l.b16 %v552
    %v707 = vunpack.c.h.b16 %v552
    %v708 = vunpack.c.l.b16 %v553
    %v709 = vunpack.c.h.b16 %v553
    %v710 = vunpack.c.l.b16 %v554
    %v711 = vunpack.c.h.b16 %v554
    %v712 = vunpack.c.l.b16 %v555
    %v713 = vunpack.c.h.b16 %v555
    %v714 = vunpack.c.l.b16 %v556
    %v715 = vunpack.c.h.b16 %v556
    %v716 = vunpack.c.l.b16 %v557
    %v717 = vunpack.c.h.b16 %v557
    %v718 = vunpack.c.l.b16 %v558
    %v719 = vunpack.c.h.b16 %v558
    %v720 = vunpack.c.l.b16 %v559
    %v721 = vunpack.c.h.b16 %v559
    %v722 = vunpack.c.l.b16 %v560
    %v723 = vunpack.c.h.b16 %v560
    %v724 = vunpack.c.l.b16 %v561
    %v725 = vunpack.c.h.b16 %v561
    %v726 = vunpack.c.l.b16 %v562
    %v727 = vunpack.c.h.b16 %v562
    %v728 = vunpack.c.l.b16 %v563
    %v729 = vunpack.c.h.b16 %v563
    %v730 = vunpack.c.l.b16 %v564
    %v731 = vunpack.c.h.b16 %v564
    %v732 = vunpack.c.l.b16 %v565
    %v733 = vunpack.c.h.b16 %v565
    %v734 = vunpack.c.l.b16 %v566
    %v735 = vunpack.c.h.b16 %v566
    %v736 = vunpack.c.l.b16 %v567
    %v737 = vunpack.c.h.b16 %v567
    %v738 = vunpack.c.l.b16 %v568
    %v739 = vunpack.c.h.b16 %v568
    %v740 = vunpack.c.l.b16 %v569
    %v741 = vunpack.c.h.b16 %v569
    %v742 = vunpack.c.l.b16 %v570
    %v743 = vunpack.c.h.b16 %v570
    %v744 = vunpack.c.l.b16 %v571
    %v745 = vunpack.c.h.b16 %v571
    %v746 = vunpack.c.l.b16 %v572
    %v747 = vunpack.c.h.b16 %v572
    %v748 = vunpack.c.l.b16 %v573
    %v749 = vunpack.c.h.b16 %v573
    %v750 = vunpack.c.l.b16 %v574
    %v751 = vunpack.c.h.b16 %v574
    %v752 = vunpack.c.l.b16 %v575
    %v753 = vunpack.c.h.b16 %v575
    %v754 = vunpack.c.l.b16 %v576
    %v755 = vunpack.c.h.b16 %v576
    %v756 = vunpack.c.l.b16 %v577
    %v757 = vunpack.c.h.b16 %v577
    %v758 = vunpack.c.l.b16 %v578
    %v759 = vunpack.c.h.b16 %v578
    %v760 = vunpack.c.l.b16 %v579
    %v761 = vunpack.c.h.b16 %v579
    %v762 = vunpack.c.l.b16 %v580
    %v763 = vunpack.c.h.b16 %v580
    %v764 = vunpack.c.l.b16 %v581
    %v765 = vunpack.c.h.b16 %v581
    %v766 = vunpack.c.l.b16 %v582
    %v767 = vunpack.c.h.b16 %v582
    %v768 = vunpack.c.l.b16 %v583
    %v769 = vunpack.c.h.b16 %v583
    %v770 = vunpack.c.l.b16 %v584
    %v771 = vunpack.c.h.b16 %v584
    %v772 = vunpack.c.l.b16 %v585
    %v773 = vunpack.c.h.b16 %v585
    %v774 = vunpack.c.l.b16 %v586
    %v775 = vunpack.c.h.b16 %v586
    %v776 = vunpack.c.l.b16 %v587
    %v777 = vunpack.c.h.b16 %v587
    %v778 = vunpack.c.l.b16 %v588
    %v779 = vunpack.c.h.b16 %v588
    %v780 = vunpack.c.l.b16 %v589
    %v781 = vunpack.c.h.b16 %v589
    %v782 = vunpack.c.l.b16 %v590
    %v783 = vunpack.c.h.b16 %v590
    %v784 = vunpack.c.l.b16 %v591
    %v785 = vunpack.c.h.b16 %v591
    %v786 = vpack.c.b16 %v662, %v658
    %v787 = vpack.c.b16 %v663, %v659
    %v788 = vpack.c.b16 %v664, %v660
    %v789 = vpack.c.b16 %v665, %v661
    %v790 = vpack.c.b16 %v670, %v666
    %v791 = vpack.c.b16 %v671, %v667
    %v792 = vpack.c.b16 %v672, %v668
    %v793 = vpack.c.b16 %v673, %v669
    %v794 = vpack.c.b16 %v678, %v674
    %v795 = vpack.c.b16 %v679, %v675
    %v796 = vpack.c.b16 %v680, %v676
    %v797 = vpack.c.b16 %v681, %v677
    %v798 = vpack.c.b16 %v686, %v682
    %v799 = vpack.c.b16 %v687, %v683
    %v800 = vpack.c.b16 %v688, %v684
    %v801 = vpack.c.b16 %v689, %v685
    %v802 = vpack.c.b16 %v694, %v690
    %v803 = vpack.c.b16 %v695, %v691
    %v804 = vpack.c.b16 %v696, %v692
    %v805 = vpack.c.b16 %v697, %v693
    %v806 = vpack.c.b16 %v702, %v698
    %v807 = vpack.c.b16 %v703, %v699
    %v808 = vpack.c.b16 %v704, %v700
    %v809 = vpack.c.b16 %v705, %v701
    %v810 = vpack.c.b16 %v710, %v706
    %v811 = vpack.c.b16 %v711, %v707
    %v812 = vpack.c.b16 %v712, %v708
    %v813 = vpack.c.b16 %v713, %v709
    %v814 = vpack.c.b16 %v718, %v714
    %v815 = vpack.c.b16 %v719, %v715
    %v816 = vpack.c.b16 %v720, %v716
    %v817 = vpack.c.b16 %v721, %v717
    %v818 = vpack.c.b16 %v726, %v722
    %v819 = vpack.c.b16 %v727, %v723
    %v820 = vpack.c.b16 %v728, %v724
    %v821 = vpack.c.b16 %v729, %v725
    %v822 = vpack.c.b16 %v734, %v730
    %v823 = vpack.c.b16 %v735, %v731
    %v824 = vpack.c.b16 %v736, %v732
    %v825 = vpack.c.b16 %v737, %v733
    %v826 = vpack.c.b16 %v742, %v738
    %v827 = vpack.c.b16 %v743, %v739
    %v828 = vpack.c.b16 %v744, %v740
    %v829 = vpack.c.b16 %v745, %v741
    %v830 = vpack.c.b16 %v750, %v746
    %v831 = vpack.c.b16 %v751, %v747
    %v832 = vpack.c.b16 %v752, %v748
    %v833 = vpack.c.b16 %v753, %v749
    %v834 = vpack.c.b16 %v758, %v754
    %v835 = vpack.c.b16 %v759, %v755
    %v836 = vpack.c.b16 %v760, %v756
    %v837 = vpack.c.b16 %v761, %v757
    %v838 = vpack.c.b16 %v766, %v762
    %v839 = vpack.c.b16 %v767, %v763
    %v840 = vpack.c.b16 %v768, %v764
    %v841 = vpack.c.b16 %v769, %v765
    %v842 = vpack.c.b16 %v774, %v770
    %v843 = vpack.c.b16 %v775, %v771
    %v844 = vpack.c.b16 %v776, %v772
    %v845 = vpack.c.b16 %v777, %v773
    %v846 = vpack.c.b16 %v782, %v778
    %v847 = vpack.c.b16 %v783, %v779
    %v848 = vpack.c.b16 %v784, %v780
    %v849 = vpack.c.b16 %v785, %v781
    %914 = vmatpush.bf16.msra.mxu0 %v814
    %915 = vmatpush.bf16.msra.mxu0 %v810
    %916 = vmatpush.bf16.msra.mxu0 %v806
    %917 = vmatpush.bf16.msra.mxu0 %v802
    %918 = vmatpush.bf16.msra.mxu0 %v798
    %919 = vmatpush.bf16.msra.mxu0 %v794
    %920 = vmatpush.bf16.msra.mxu0 %v790
    %921 = vmatpush.bf16.msra.mxu0 %v786
    %922 = vmatmul.bf16.gmra.mxu0 %v592
    %v923 = vpop.f32.mrf.mxu0
    %v924 = vadd.f32 0.0, %v923
    %v925 = vpop.f32.mrf.mxu0
    %926 = vdwg.mxu0
    %927 = vmatpush.bf16.msra.mxu0 %v846
    %928 = vmatpush.bf16.msra.mxu0 %v842
    %929 = vmatpush.bf16.msra.mxu0 %v838
    %930 = vmatpush.bf16.msra.mxu0 %v834
    %931 = vmatpush.bf16.msra.mxu0 %v830
    %932 = vmatpush.bf16.msra.mxu0 %v826
    %933 = vmatpush.bf16.msra.mxu0 %v822
    %934 = vmatpush.bf16.msra.mxu0 %v818
    %935 = vmatmul.bf16.gmra.mxu0 %v593
    %v936 = vpop.f32.mrf.mxu0
    %v937 = vadd.f32 %v924, %v936
    %v938 = vpop.f32.mrf.mxu0
    %939 = vdwg.mxu0
    %940 = vmatpush.bf16.msra.mxu0 %v815
    %941 = vmatpush.bf16.msra.mxu0 %v811
    %942 = vmatpush.bf16.msra.mxu0 %v807
    %943 = vmatpush.bf16.msra.mxu0 %v803
    %944 = vmatpush.bf16.msra.mxu0 %v799
    %945 = vmatpush.bf16.msra.mxu0 %v795
    %946 = vmatpush.bf16.msra.mxu0 %v791
    %947 = vmatpush.bf16.msra.mxu0 %v787
    %948 = vmatmul.bf16.gmra.mxu0 %v592
    %v949 = vpop.f32.mrf.mxu0
    %v950 = vadd.f32 0.0, %v949
    %v951 = vpop.f32.mrf.mxu0
    %952 = vdwg.mxu0
    %953 = vmatpush.bf16.msra.mxu0 %v847
    %954 = vmatpush.bf16.msra.mxu0 %v843
    %955 = vmatpush.bf16.msra.mxu0 %v839
    %956 = vmatpush.bf16.msra.mxu0 %v835
    %957 = vmatpush.bf16.msra.mxu0 %v831
    %958 = vmatpush.bf16.msra.mxu0 %v827
    %959 = vmatpush.bf16.msra.mxu0 %v823
    %960 = vmatpush.bf16.msra.mxu0 %v819
    %961 = vmatmul.bf16.gmra.mxu0 %v593
    %v962 = vpop.f32.mrf.mxu0
    %v963 = vadd.f32 %v950, %v962
    %v964 = vpop.f32.mrf.mxu0
    %965 = vdwg.mxu0
    %966 = vmatpush.bf16.msra.mxu0 %v816
    %967 = vmatpush.bf16.msra.mxu0 %v812
    %968 = vmatpush.bf16.msra.mxu0 %v808
    %969 = vmatpush.bf16.msra.mxu0 %v804
    %970 = vmatpush.bf16.msra.mxu0 %v800
    %971 = vmatpush.bf16.msra.mxu0 %v796
    %972 = vmatpush.bf16.msra.mxu0 %v792
    %973 = vmatpush.bf16.msra.mxu0 %v788
    %974 = vmatmul.bf16.gmra.mxu0 %v592
    %v975 = vpop.f32.mrf.mxu0
    %v976 = vadd.f32 0.0, %v975
    %v977 = vpop.f32.mrf.mxu0
    %978 = vdwg.mxu0
    %979 = vmatpush.bf16.msra.mxu0 %v848
    %980 = vmatpush.bf16.msra.mxu0 %v844
    %981 = vmatpush.bf16.msra.mxu0 %v840
    %982 = vmatpush.bf16.msra.mxu0 %v836
    %983 = vmatpush.bf16.msra.mxu0 %v832
    %984 = vmatpush.bf16.msra.mxu0 %v828
    %985 = vmatpush.bf16.msra.mxu0 %v824
    %986 = vmatpush.bf16.msra.mxu0 %v820
    %987 = vmatmul.bf16.gmra.mxu0 %v593
    %v988 = vpop.f32.mrf.mxu0
    %v989 = vadd.f32 %v976, %v988
    %v990 = vpop.f32.mrf.mxu0
    %991 = vdwg.mxu0
    %992 = vmatpush.bf16.msra.mxu0 %v817
    %993 = vmatpush.bf16.msra.mxu0 %v813
    %994 = vmatpush.bf16.msra.mxu0 %v809
    %995 = vmatpush.bf16.msra.mxu0 %v805
    %996 = vmatpush.bf16.msra.mxu0 %v801
    %997 = vmatpush.bf16.msra.mxu0 %v797
    %998 = vmatpush.bf16.msra.mxu0 %v793
    %999 = vmatpush.bf16.msra.mxu0 %v789
    %1000 = vmatmul.bf16.gmra.mxu0 %v592
    %v1001 = vpop.f32.mrf.mxu0
    %v1002 = vadd.f32 0.0, %v1001
    %v1003 = vpop.f32.mrf.mxu0
    %1004 = vdwg.mxu0
    %1005 = vmatpush.bf16.msra.mxu0 %v849
    %1006 = vmatpush.bf16.msra.mxu0 %v845
    %1007 = vmatpush.bf16.msra.mxu0 %v841
    %1008 = vmatpush.bf16.msra.mxu0 %v837
    %1009 = vmatpush.bf16.msra.mxu0 %v833
    %1010 = vmatpush.bf16.msra.mxu0 %v829
    %1011 = vmatpush.bf16.msra.mxu0 %v825
    %1012 = vmatpush.bf16.msra.mxu0 %v821
    %1013 = vmatmul.bf16.gmra.mxu0 %v593
    %v1014 = vpop.f32.mrf.mxu0
    %v1015 = vadd.f32 %v1002, %v1014
    %v1016 = vpop.f32.mrf.mxu0
    %1017 = vdwg.mxu0
    %v1018 = vrot.slane %v937, 4
    %v1019 = vadd.f32 %v937, %v1018
    %v1020 = vrot.slane %v1019, 2
    %v1021 = vadd.f32 %v1019, %v1020
    %v1022 = vrot.slane %v1021, 1
    %v1023 = vadd.f32 %v1021, %v1022
    %v1024 = vrot.slane %v963, 4
    %v1025 = vadd.f32 %v963, %v1024
    %v1026 = vrot.slane %v1025, 2
    %v1027 = vadd.f32 %v1025, %v1026
    %v1028 = vrot.slane %v1027, 1
    %v1029 = vadd.f32 %v1027, %v1028
    %v1030 = vrot.slane %v989, 4
    %v1031 = vadd.f32 %v989, %v1030
    %v1032 = vrot.slane %v1031, 2
    %v1033 = vadd.f32 %v1031, %v1032
    %v1034 = vrot.slane %v1033, 1
    %v1035 = vadd.f32 %v1033, %v1034
    %v1036 = vrot.slane %v1015, 4
    %v1037 = vadd.f32 %v1015, %v1036
    %v1038 = vrot.slane %v1037, 2
    %v1039 = vadd.f32 %v1037, %v1038
    %v1040 = vrot.slane %v1039, 1
    %v1041 = vadd.f32 %v1039, %v1040
    %v1042 = vmul.f32 %v1023, %v269
    %v1043 = vmul.f32 %v1029, %v269
    %v1044 = vmul.f32 %v1035, %v269
    %v1045 = vmul.f32 %v1041, %v269
    %v1046 = vmul.f32 %v937, %v937
    %v1047 = vmul.f32 %v963, %v963
    %v1048 = vmul.f32 %v989, %v989
    %v1049 = vmul.f32 %v1015, %v1015
    %v1050 = vrot.slane %v1046, 4
    %v1051 = vadd.f32 %v1046, %v1050
    %v1052 = vrot.slane %v1051, 2
    %v1053 = vadd.f32 %v1051, %v1052
    %v1054 = vrot.slane %v1053, 1
    %v1055 = vadd.f32 %v1053, %v1054
    %v1056 = vrot.slane %v1047, 4
    %v1057 = vadd.f32 %v1047, %v1056
    %v1058 = vrot.slane %v1057, 2
    %v1059 = vadd.f32 %v1057, %v1058
    %v1060 = vrot.slane %v1059, 1
    %v1061 = vadd.f32 %v1059, %v1060
    %v1062 = vrot.slane %v1048, 4
    %v1063 = vadd.f32 %v1048, %v1062
    %v1064 = vrot.slane %v1063, 2
    %v1065 = vadd.f32 %v1063, %v1064
    %v1066 = vrot.slane %v1065, 1
    %v1067 = vadd.f32 %v1065, %v1066
    %v1068 = vrot.slane %v1049, 4
    %v1069 = vadd.f32 %v1049, %v1068
    %v1070 = vrot.slane %v1069, 2
    %v1071 = vadd.f32 %v1069, %v1070
    %v1072 = vrot.slane %v1071, 1
    %v1073 = vadd.f32 %v1071, %v1072
    %v1074 = vmul.f32 %v1055, %v269
    %v1075 = vmul.f32 %v1061, %v269
    %v1076 = vmul.f32 %v1067, %v269
    %v1077 = vmul.f32 %v1073, %v269
    %v1078 = vmul.f32 %v1042, %v1042
    %v1079 = vmul.f32 %v1043, %v1043
    %v1080 = vmul.f32 %v1044, %v1044
    %v1081 = vmul.f32 %v1045, %v1045
    %v1082 = vsub.f32 %v1074, %v1078
    %v1083 = vsub.f32 %v1075, %v1079
    %v1084 = vsub.f32 %v1076, %v1080
    %v1085 = vsub.f32 %v1077, %v1081
    %v1086 = vld [vmem:[#allocation18] sm:$0xf]
    %v1087 = vadd.f32 %v1082, 1e-05
    %v1088 = vadd.f32 %v1083, 1e-05
    %v1089 = vadd.f32 %v1084, 1e-05
    %v1090 = vadd.f32 %v1085, 1e-05
    %v1091 = vrsqrt.pop %v1087
    %v1092 = vmul.f32 %v1091, %v1087
    %v1093 = vmul.f32 %v1092, %v1091
    %v1094 = vmul.f32 0.5, %v1093
    %v1095 = vsub.f32 1.5, %v1094
    %v1096 = vmul.f32 %v1091, %v1095
    %vm1097 = vweird.f32 %v1087
    %vm1098 = vweird.f32 %v1091
    %vm1099 = vmor %vm1097, %vm1098
    %v1100 = vsel %vm1099, %v1091, %v1096
    %v1101 = vrsqrt.pop %v1088
    %v1102 = vmul.f32 %v1101, %v1088
    %v1103 = vmul.f32 %v1102, %v1101
    %v1104 = vmul.f32 0.5, %v1103
    %v1105 = vsub.f32 1.5, %v1104
    %v1106 = vmul.f32 %v1101, %v1105
    %vm1107 = vweird.f32 %v1088
    %vm1108 = vweird.f32 %v1101
    %vm1109 = vmor %vm1107, %vm1108
    %v1110 = vsel %vm1109, %v1101, %v1106
    %v1111 = vrsqrt.pop %v1089
    %v1112 = vmul.f32 %v1111, %v1089
    %v1113 = vmul.f32 %v1112, %v1111
    %v1114 = vmul.f32 0.5, %v1113
    %v1115 = vsub.f32 1.5, %v1114
    %v1116 = vmul.f32 %v1111, %v1115
    %vm1117 = vweird.f32 %v1089
    %vm1118 = vweird.f32 %v1111
    %vm1119 = vmor %vm1117, %vm1118
    %v1120 = vsel %vm1119, %v1111, %v1116
    %v1121 = vrsqrt.pop %v1090
    %v1122 = vmul.f32 %v1121, %v1090
    %v1123 = vmul.f32 %v1122, %v1121
    %v1124 = vmul.f32 0.5, %v1123
    %v1125 = vsub.f32 1.5, %v1124
    %v1126 = vmul.f32 %v1121, %v1125
    %vm1127 = vweird.f32 %v1090
    %vm1128 = vweird.f32 %v1121
    %vm1129 = vmor %vm1127, %vm1128
    %v1130 = vsel %vm1129, %v1121, %v1126
    %v1135 = vrot.slane %v1110, 7
    %v1136 = vrot.slane %v1120, 6
    %v1137 = vrot.slane %v1130, 5
    %v1138 = vsel %vm491, %v1100, %v1135
    %vm1139 = vcmask 1042434
    %v1140 = vsel %vm1139, %v1136, %v1137
    %vm1141 = vcmask 1041408
    %v1142 = vsel %vm1141, %v1138, %v1140
    %v1144 = vmul.f32 %v1086, %v1142
    %v1145 = vld [vmem:[#allocation20] sm:$0xf]
    %v1147 = vperm.slane %v1144, 0
    %v1148 = vperm.slane %v1144, 1
    %v1149 = vperm.slane %v1144, 2
    %v1150 = vperm.slane %v1144, 3
    %v1155 = vmul.f32 %v1042, %v1147
    %v1156 = vmul.f32 %v1043, %v1148
    %v1157 = vmul.f32 %v1044, %v1149
    %v1158 = vmul.f32 %v1045, %v1150
    %v1163 = vrot.slane %v1156, 7
    %v1164 = vrot.slane %v1157, 6
    %v1165 = vrot.slane %v1158, 5
    %v1166 = vsel %vm491, %v1155, %v1163
    %v1167 = vsel %vm1139, %v1164, %v1165
    %v1168 = vsel %vm1141, %v1166, %v1167
    %v1170 = vsub.f32 %v1145, %v1168
    %v1171 = vmul.f32 %v937, %v1147
    %v1172 = vmul.f32 %v963, %v1148
    %v1173 = vmul.f32 %v989, %v1149
    %v1174 = vmul.f32 %v1015, %v1150
    %v1176 = vperm.slane %v1170, 0
    %v1177 = vperm.slane %v1170, 1
    %v1178 = vperm.slane %v1170, 2
    %v1179 = vperm.slane %v1170, 3
    %v1184 = vadd.f32 %v1171, %v1176
    %v1185 = vadd.f32 %v1172, %v1177
    %v1186 = vadd.f32 %v1173, %v1178
    %v1187 = vadd.f32 %v1174, %v1179
    %vm1188 = vcmp.gt.f32.partialorder %v1184, 0.0
    %vm1189 = vcmp.gt.f32.partialorder %v1185, 0.0
    %vm1190 = vcmp.gt.f32.partialorder %v1186, 0.0
    %vm1191 = vcmp.gt.f32.partialorder %v1187, 0.0
    %v1192 = vmul.f32 %v1184, 0.2
    %v1193 = vmul.f32 %v1185, 0.2
    %v1194 = vmul.f32 %v1186, 0.2
    %v1195 = vmul.f32 %v1187, 0.2
    %v1196 = vsel %vm1188, %v1184, %v1192
    %v1197 = vsel %vm1189, %v1185, %v1193
    %v1198 = vsel %vm1190, %v1186, %v1194
    %v1199 = vsel %vm1191, %v1187, %v1195
    %s1200 = smul.u32 4, 64
    %s1201 = smul.u32 %s1200, 8
    %s1202 = sshll.u32 %s1201, 4
    %1203 = dma.done %s199, %s1202
    %v1204 = vld [vmem:[#allocation3] sm:$0xff]
    %v1205 = vld [vmem:[#allocation3 + $0x8] sm:$0xff]
    %v1206 = vld [vmem:[#allocation3 + $0x10] sm:$0xff]
    %v1207 = vld [vmem:[#allocation3 + $0x18] sm:$0xff]
    %v1208 = vld [vmem:[#allocation3 + $0x20] sm:$0xff]
    %v1209 = vld [vmem:[#allocation3 + $0x28] sm:$0xff]
    %v1210 = vld [vmem:[#allocation3 + $0x30] sm:$0xff]
    %v1211 = vld [vmem:[#allocation3 + $0x38] sm:$0xff]
    %v1212 = vld [vmem:[#allocation3 + $0x40] sm:$0xff]
    %v1213 = vld [vmem:[#allocation3 + $0x48] sm:$0xff]
    %v1214 = vld [vmem:[#allocation3 + $0x50] sm:$0xff]
    %v1215 = vld [vmem:[#allocation3 + $0x58] sm:$0xff]
    %v1216 = vld [vmem:[#allocation3 + $0x60] sm:$0xff]
    %v1217 = vld [vmem:[#allocation3 + $0x68] sm:$0xff]
    %v1218 = vld [vmem:[#allocation3 + $0x70] sm:$0xff]
    %v1219 = vld [vmem:[#allocation3 + $0x78] sm:$0xff]
    %v1220 = vld [vmem:[#allocation3 + $0x80] sm:$0xff]
    %v1221 = vld [vmem:[#allocation3 + $0x88] sm:$0xff]
    %v1222 = vld [vmem:[#allocation3 + $0x90] sm:$0xff]
    %v1223 = vld [vmem:[#allocation3 + $0x98] sm:$0xff]
    %v1224 = vld [vmem:[#allocation3 + $0xa0] sm:$0xff]
    %v1225 = vld [vmem:[#allocation3 + $0xa8] sm:$0xff]
    %v1226 = vld [vmem:[#allocation3 + $0xb0] sm:$0xff]
    %v1227 = vld [vmem:[#allocation3 + $0xb8] sm:$0xff]
    %v1228 = vld [vmem:[#allocation3 + $0xc0] sm:$0xff]
    %v1229 = vld [vmem:[#allocation3 + $0xc8] sm:$0xff]
    %v1230 = vld [vmem:[#allocation3 + $0xd0] sm:$0xff]
    %v1231 = vld [vmem:[#allocation3 + $0xd8] sm:$0xff]
    %v1232 = vld [vmem:[#allocation3 + $0xe0] sm:$0xff]
    %v1233 = vld [vmem:[#allocation3 + $0xe8] sm:$0xff]
    %v1234 = vld [vmem:[#allocation3 + $0xf0] sm:$0xff]
    %v1235 = vld [vmem:[#allocation3 + $0xf8] sm:$0xff]
    %v1236 = vld [vmem:[#allocation3 + $0x100] sm:$0xff]
    %v1237 = vld [vmem:[#allocation3 + $0x108] sm:$0xff]
    %v1238 = vld [vmem:[#allocation3 + $0x110] sm:$0xff]
    %v1239 = vld [vmem:[#allocation3 + $0x118] sm:$0xff]
    %v1240 = vld [vmem:[#allocation3 + $0x120] sm:$0xff]
    %v1241 = vld [vmem:[#allocation3 + $0x128] sm:$0xff]
    %v1242 = vld [vmem:[#allocation3 + $0x130] sm:$0xff]
    %v1243 = vld [vmem:[#allocation3 + $0x138] sm:$0xff]
    %v1244 = vld [vmem:[#allocation3 + $0x140] sm:$0xff]
    %v1245 = vld [vmem:[#allocation3 + $0x148] sm:$0xff]
    %v1246 = vld [vmem:[#allocation3 + $0x150] sm:$0xff]
    %v1247 = vld [vmem:[#allocation3 + $0x158] sm:$0xff]
    %v1248 = vld [vmem:[#allocation3 + $0x160] sm:$0xff]
    %v1249 = vld [vmem:[#allocation3 + $0x168] sm:$0xff]
    %v1250 = vld [vmem:[#allocation3 + $0x170] sm:$0xff]
    %v1251 = vld [vmem:[#allocation3 + $0x178] sm:$0xff]
    %v1252 = vld [vmem:[#allocation3 + $0x180] sm:$0xff]
    %v1253 = vld [vmem:[#allocation3 + $0x188] sm:$0xff]
    %v1254 = vld [vmem:[#allocation3 + $0x190] sm:$0xff]
    %v1255 = vld [vmem:[#allocation3 + $0x198] sm:$0xff]
    %v1256 = vld [vmem:[#allocation3 + $0x1a0] sm:$0xff]
    %v1257 = vld [vmem:[#allocation3 + $0x1a8] sm:$0xff]
    %v1258 = vld [vmem:[#allocation3 + $0x1b0] sm:$0xff]
    %v1259 = vld [vmem:[#allocation3 + $0x1b8] sm:$0xff]
    %v1260 = vld [vmem:[#allocation3 + $0x1c0] sm:$0xff]
    %v1261 = vld [vmem:[#allocation3 + $0x1c8] sm:$0xff]
    %v1262 = vld [vmem:[#allocation3 + $0x1d0] sm:$0xff]
    %v1263 = vld [vmem:[#allocation3 + $0x1d8] sm:$0xff]
    %v1264 = vld [vmem:[#allocation3 + $0x1e0] sm:$0xff]
    %v1265 = vld [vmem:[#allocation3 + $0x1e8] sm:$0xff]
    %v1266 = vld [vmem:[#allocation3 + $0x1f0] sm:$0xff]
    %v1267 = vld [vmem:[#allocation3 + $0x1f8] sm:$0xff]
    %v1268 = vld [vmem:[#allocation3 + $0x200] sm:$0xff]
    %v1269 = vld [vmem:[#allocation3 + $0x208] sm:$0xff]
    %v1270 = vld [vmem:[#allocation3 + $0x210] sm:$0xff]
    %v1271 = vld [vmem:[#allocation3 + $0x218] sm:$0xff]
    %v1272 = vld [vmem:[#allocation3 + $0x220] sm:$0xff]
    %v1273 = vld [vmem:[#allocation3 + $0x228] sm:$0xff]
    %v1274 = vld [vmem:[#allocation3 + $0x230] sm:$0xff]
    %v1275 = vld [vmem:[#allocation3 + $0x238] sm:$0xff]
    %v1276 = vld [vmem:[#allocation3 + $0x240] sm:$0xff]
    %v1277 = vld [vmem:[#allocation3 + $0x248] sm:$0xff]
    %v1278 = vld [vmem:[#allocation3 + $0x250] sm:$0xff]
    %v1279 = vld [vmem:[#allocation3 + $0x258] sm:$0xff]
    %v1280 = vld [vmem:[#allocation3 + $0x260] sm:$0xff]
    %v1281 = vld [vmem:[#allocation3 + $0x268] sm:$0xff]
    %v1282 = vld [vmem:[#allocation3 + $0x270] sm:$0xff]
    %v1283 = vld [vmem:[#allocation3 + $0x278] sm:$0xff]
    %v1284 = vld [vmem:[#allocation3 + $0x280] sm:$0xff]
    %v1285 = vld [vmem:[#allocation3 + $0x288] sm:$0xff]
    %v1286 = vld [vmem:[#allocation3 + $0x290] sm:$0xff]
    %v1287 = vld [vmem:[#allocation3 + $0x298] sm:$0xff]
    %v1288 = vld [vmem:[#allocation3 + $0x2a0] sm:$0xff]
    %v1289 = vld [vmem:[#allocation3 + $0x2a8] sm:$0xff]
    %v1290 = vld [vmem:[#allocation3 + $0x2b0] sm:$0xff]
    %v1291 = vld [vmem:[#allocation3 + $0x2b8] sm:$0xff]
    %v1292 = vld [vmem:[#allocation3 + $0x2c0] sm:$0xff]
    %v1293 = vld [vmem:[#allocation3 + $0x2c8] sm:$0xff]
    %v1294 = vld [vmem:[#allocation3 + $0x2d0] sm:$0xff]
    %v1295 = vld [vmem:[#allocation3 + $0x2d8] sm:$0xff]
    %v1296 = vld [vmem:[#allocation3 + $0x2e0] sm:$0xff]
    %v1297 = vld [vmem:[#allocation3 + $0x2e8] sm:$0xff]
    %v1298 = vld [vmem:[#allocation3 + $0x2f0] sm:$0xff]
    %v1299 = vld [vmem:[#allocation3 + $0x2f8] sm:$0xff]
    %v1300 = vld [vmem:[#allocation3 + $0x300] sm:$0xff]
    %v1301 = vld [vmem:[#allocation3 + $0x308] sm:$0xff]
    %v1302 = vld [vmem:[#allocation3 + $0x310] sm:$0xff]
    %v1303 = vld [vmem:[#allocation3 + $0x318] sm:$0xff]
    %v1304 = vld [vmem:[#allocation3 + $0x320] sm:$0xff]
    %v1305 = vld [vmem:[#allocation3 + $0x328] sm:$0xff]
    %v1306 = vld [vmem:[#allocation3 + $0x330] sm:$0xff]
    %v1307 = vld [vmem:[#allocation3 + $0x338] sm:$0xff]
    %v1308 = vld [vmem:[#allocation3 + $0x340] sm:$0xff]
    %v1309 = vld [vmem:[#allocation3 + $0x348] sm:$0xff]
    %v1310 = vld [vmem:[#allocation3 + $0x350] sm:$0xff]
    %v1311 = vld [vmem:[#allocation3 + $0x358] sm:$0xff]
    %v1312 = vld [vmem:[#allocation3 + $0x360] sm:$0xff]
    %v1313 = vld [vmem:[#allocation3 + $0x368] sm:$0xff]
    %v1314 = vld [vmem:[#allocation3 + $0x370] sm:$0xff]
    %v1315 = vld [vmem:[#allocation3 + $0x378] sm:$0xff]
    %v1316 = vld [vmem:[#allocation3 + $0x380] sm:$0xff]
    %v1317 = vld [vmem:[#allocation3 + $0x388] sm:$0xff]
    %v1318 = vld [vmem:[#allocation3 + $0x390] sm:$0xff]
    %v1319 = vld [vmem:[#allocation3 + $0x398] sm:$0xff]
    %v1320 = vld [vmem:[#allocation3 + $0x3a0] sm:$0xff]
    %v1321 = vld [vmem:[#allocation3 + $0x3a8] sm:$0xff]
    %v1322 = vld [vmem:[#allocation3 + $0x3b0] sm:$0xff]
    %v1323 = vld [vmem:[#allocation3 + $0x3b8] sm:$0xff]
    %v1324 = vld [vmem:[#allocation3 + $0x3c0] sm:$0xff]
    %v1325 = vld [vmem:[#allocation3 + $0x3c8] sm:$0xff]
    %v1326 = vld [vmem:[#allocation3 + $0x3d0] sm:$0xff]
    %v1327 = vld [vmem:[#allocation3 + $0x3d8] sm:$0xff]
    %v1328 = vld [vmem:[#allocation3 + $0x3e0] sm:$0xff]
    %v1329 = vld [vmem:[#allocation3 + $0x3e8] sm:$0xff]
    %v1330 = vld [vmem:[#allocation3 + $0x3f0] sm:$0xff]
    %v1331 = vld [vmem:[#allocation3 + $0x3f8] sm:$0xff]
    %v1332 = vld [vmem:[#allocation3 + $0x400] sm:$0xff]
    %v1333 = vld [vmem:[#allocation3 + $0x408] sm:$0xff]
    %v1334 = vld [vmem:[#allocation3 + $0x410] sm:$0xff]
    %v1335 = vld [vmem:[#allocation3 + $0x418] sm:$0xff]
    %v1336 = vld [vmem:[#allocation3 + $0x420] sm:$0xff]
    %v1337 = vld [vmem:[#allocation3 + $0x428] sm:$0xff]
    %v1338 = vld [vmem:[#allocation3 + $0x430] sm:$0xff]
    %v1339 = vld [vmem:[#allocation3 + $0x438] sm:$0xff]
    %v1340 = vld [vmem:[#allocation3 + $0x440] sm:$0xff]
    %v1341 = vld [vmem:[#allocation3 + $0x448] sm:$0xff]
    %v1342 = vld [vmem:[#allocation3 + $0x450] sm:$0xff]
    %v1343 = vld [vmem:[#allocation3 + $0x458] sm:$0xff]
    %v1344 = vld [vmem:[#allocation3 + $0x460] sm:$0xff]
    %v1345 = vld [vmem:[#allocation3 + $0x468] sm:$0xff]
    %v1346 = vld [vmem:[#allocation3 + $0x470] sm:$0xff]
    %v1347 = vld [vmem:[#allocation3 + $0x478] sm:$0xff]
    %v1348 = vld [vmem:[#allocation3 + $0x480] sm:$0xff]
    %v1349 = vld [vmem:[#allocation3 + $0x488] sm:$0xff]
    %v1350 = vld [vmem:[#allocation3 + $0x490] sm:$0xff]
    %v1351 = vld [vmem:[#allocation3 + $0x498] sm:$0xff]
    %v1352 = vld [vmem:[#allocation3 + $0x4a0] sm:$0xff]
    %v1353 = vld [vmem:[#allocation3 + $0x4a8] sm:$0xff]
    %v1354 = vld [vmem:[#allocation3 + $0x4b0] sm:$0xff]
    %v1355 = vld [vmem:[#allocation3 + $0x4b8] sm:$0xff]
    %v1356 = vld [vmem:[#allocation3 + $0x4c0] sm:$0xff]
    %v1357 = vld [vmem:[#allocation3 + $0x4c8] sm:$0xff]
    %v1358 = vld [vmem:[#allocation3 + $0x4d0] sm:$0xff]
    %v1359 = vld [vmem:[#allocation3 + $0x4d8] sm:$0xff]
    %v1360 = vld [vmem:[#allocation3 + $0x4e0] sm:$0xff]
    %v1361 = vld [vmem:[#allocation3 + $0x4e8] sm:$0xff]
    %v1362 = vld [vmem:[#allocation3 + $0x4f0] sm:$0xff]
    %v1363 = vld [vmem:[#allocation3 + $0x4f8] sm:$0xff]
    %v1364 = vld [vmem:[#allocation3 + $0x500] sm:$0xff]
    %v1365 = vld [vmem:[#allocation3 + $0x508] sm:$0xff]
    %v1366 = vld [vmem:[#allocation3 + $0x510] sm:$0xff]
    %v1367 = vld [vmem:[#allocation3 + $0x518] sm:$0xff]
    %v1368 = vld [vmem:[#allocation3 + $0x520] sm:$0xff]
    %v1369 = vld [vmem:[#allocation3 + $0x528] sm:$0xff]
    %v1370 = vld [vmem:[#allocation3 + $0x530] sm:$0xff]
    %v1371 = vld [vmem:[#allocation3 + $0x538] sm:$0xff]
    %v1372 = vld [vmem:[#allocation3 + $0x540] sm:$0xff]
    %v1373 = vld [vmem:[#allocation3 + $0x548] sm:$0xff]
    %v1374 = vld [vmem:[#allocation3 + $0x550] sm:$0xff]
    %v1375 = vld [vmem:[#allocation3 + $0x558] sm:$0xff]
    %v1376 = vld [vmem:[#allocation3 + $0x560] sm:$0xff]
    %v1377 = vld [vmem:[#allocation3 + $0x568] sm:$0xff]
    %v1378 = vld [vmem:[#allocation3 + $0x570] sm:$0xff]
    %v1379 = vld [vmem:[#allocation3 + $0x578] sm:$0xff]
    %v1380 = vld [vmem:[#allocation3 + $0x580] sm:$0xff]
    %v1381 = vld [vmem:[#allocation3 + $0x588] sm:$0xff]
    %v1382 = vld [vmem:[#allocation3 + $0x590] sm:$0xff]
    %v1383 = vld [vmem:[#allocation3 + $0x598] sm:$0xff]
    %v1384 = vld [vmem:[#allocation3 + $0x5a0] sm:$0xff]
    %v1385 = vld [vmem:[#allocation3 + $0x5a8] sm:$0xff]
    %v1386 = vld [vmem:[#allocation3 + $0x5b0] sm:$0xff]
    %v1387 = vld [vmem:[#allocation3 + $0x5b8] sm:$0xff]
    %v1388 = vld [vmem:[#allocation3 + $0x5c0] sm:$0xff]
    %v1389 = vld [vmem:[#allocation3 + $0x5c8] sm:$0xff]
    %v1390 = vld [vmem:[#allocation3 + $0x5d0] sm:$0xff]
    %v1391 = vld [vmem:[#allocation3 + $0x5d8] sm:$0xff]
    %v1392 = vld [vmem:[#allocation3 + $0x5e0] sm:$0xff]
    %v1393 = vld [vmem:[#allocation3 + $0x5e8] sm:$0xff]
    %v1394 = vld [vmem:[#allocation3 + $0x5f0] sm:$0xff]
    %v1395 = vld [vmem:[#allocation3 + $0x5f8] sm:$0xff]
    %v1396 = vld [vmem:[#allocation3 + $0x600] sm:$0xff]
    %v1397 = vld [vmem:[#allocation3 + $0x608] sm:$0xff]
    %v1398 = vld [vmem:[#allocation3 + $0x610] sm:$0xff]
    %v1399 = vld [vmem:[#allocation3 + $0x618] sm:$0xff]
    %v1400 = vld [vmem:[#allocation3 + $0x620] sm:$0xff]
    %v1401 = vld [vmem:[#allocation3 + $0x628] sm:$0xff]
    %v1402 = vld [vmem:[#allocation3 + $0x630] sm:$0xff]
    %v1403 = vld [vmem:[#allocation3 + $0x638] sm:$0xff]
    %v1404 = vld [vmem:[#allocation3 + $0x640] sm:$0xff]
    %v1405 = vld [vmem:[#allocation3 + $0x648] sm:$0xff]
    %v1406 = vld [vmem:[#allocation3 + $0x650] sm:$0xff]
    %v1407 = vld [vmem:[#allocation3 + $0x658] sm:$0xff]
    %v1408 = vld [vmem:[#allocation3 + $0x660] sm:$0xff]
    %v1409 = vld [vmem:[#allocation3 + $0x668] sm:$0xff]
    %v1410 = vld [vmem:[#allocation3 + $0x670] sm:$0xff]
    %v1411 = vld [vmem:[#allocation3 + $0x678] sm:$0xff]
    %v1412 = vld [vmem:[#allocation3 + $0x680] sm:$0xff]
    %v1413 = vld [vmem:[#allocation3 + $0x688] sm:$0xff]
    %v1414 = vld [vmem:[#allocation3 + $0x690] sm:$0xff]
    %v1415 = vld [vmem:[#allocation3 + $0x698] sm:$0xff]
    %v1416 = vld [vmem:[#allocation3 + $0x6a0] sm:$0xff]
    %v1417 = vld [vmem:[#allocation3 + $0x6a8] sm:$0xff]
    %v1418 = vld [vmem:[#allocation3 + $0x6b0] sm:$0xff]
    %v1419 = vld [vmem:[#allocation3 + $0x6b8] sm:$0xff]
    %v1420 = vld [vmem:[#allocation3 + $0x6c0] sm:$0xff]
    %v1421 = vld [vmem:[#allocation3 + $0x6c8] sm:$0xff]
    %v1422 = vld [vmem:[#allocation3 + $0x6d0] sm:$0xff]
    %v1423 = vld [vmem:[#allocation3 + $0x6d8] sm:$0xff]
    %v1424 = vld [vmem:[#allocation3 + $0x6e0] sm:$0xff]
    %v1425 = vld [vmem:[#allocation3 + $0x6e8] sm:$0xff]
    %v1426 = vld [vmem:[#allocation3 + $0x6f0] sm:$0xff]
    %v1427 = vld [vmem:[#allocation3 + $0x6f8] sm:$0xff]
    %v1428 = vld [vmem:[#allocation3 + $0x700] sm:$0xff]
    %v1429 = vld [vmem:[#allocation3 + $0x708] sm:$0xff]
    %v1430 = vld [vmem:[#allocation3 + $0x710] sm:$0xff]
    %v1431 = vld [vmem:[#allocation3 + $0x718] sm:$0xff]
    %v1432 = vld [vmem:[#allocation3 + $0x720] sm:$0xff]
    %v1433 = vld [vmem:[#allocation3 + $0x728] sm:$0xff]
    %v1434 = vld [vmem:[#allocation3 + $0x730] sm:$0xff]
    %v1435 = vld [vmem:[#allocation3 + $0x738] sm:$0xff]
    %v1436 = vld [vmem:[#allocation3 + $0x740] sm:$0xff]
    %v1437 = vld [vmem:[#allocation3 + $0x748] sm:$0xff]
    %v1438 = vld [vmem:[#allocation3 + $0x750] sm:$0xff]
    %v1439 = vld [vmem:[#allocation3 + $0x758] sm:$0xff]
    %v1440 = vld [vmem:[#allocation3 + $0x760] sm:$0xff]
    %v1441 = vld [vmem:[#allocation3 + $0x768] sm:$0xff]
    %v1442 = vld [vmem:[#allocation3 + $0x770] sm:$0xff]
    %v1443 = vld [vmem:[#allocation3 + $0x778] sm:$0xff]
    %v1444 = vld [vmem:[#allocation3 + $0x780] sm:$0xff]
    %v1445 = vld [vmem:[#allocation3 + $0x788] sm:$0xff]
    %v1446 = vld [vmem:[#allocation3 + $0x790] sm:$0xff]
    %v1447 = vld [vmem:[#allocation3 + $0x798] sm:$0xff]
    %v1448 = vld [vmem:[#allocation3 + $0x7a0] sm:$0xff]
    %v1449 = vld [vmem:[#allocation3 + $0x7a8] sm:$0xff]
    %v1450 = vld [vmem:[#allocation3 + $0x7b0] sm:$0xff]
    %v1451 = vld [vmem:[#allocation3 + $0x7b8] sm:$0xff]
    %v1452 = vld [vmem:[#allocation3 + $0x7c0] sm:$0xff]
    %v1453 = vld [vmem:[#allocation3 + $0x7c8] sm:$0xff]
    %v1454 = vld [vmem:[#allocation3 + $0x7d0] sm:$0xff]
    %v1455 = vld [vmem:[#allocation3 + $0x7d8] sm:$0xff]
    %v1456 = vld [vmem:[#allocation3 + $0x7e0] sm:$0xff]
    %v1457 = vld [vmem:[#allocation3 + $0x7e8] sm:$0xff]
    %v1458 = vld [vmem:[#allocation3 + $0x7f0] sm:$0xff]
    %v1459 = vld [vmem:[#allocation3 + $0x7f8] sm:$0xff]
    %v1460 = vpack.c.bf16 %v1196, %v1196
    %v1461 = vpack.c.bf16 %v1197, %v1197
    %v1462 = vpack.c.bf16 %v1198, %v1198
    %v1463 = vpack.c.bf16 %v1199, %v1199
    %v1720 = vunpack.c.l.b16 %v1204
    %v1721 = vunpack.c.h.b16 %v1204
    %v1722 = vunpack.c.l.b16 %v1205
    %v1723 = vunpack.c.h.b16 %v1205
    %v1724 = vunpack.c.l.b16 %v1206
    %v1725 = vunpack.c.h.b16 %v1206
    %v1726 = vunpack.c.l.b16 %v1207
    %v1727 = vunpack.c.h.b16 %v1207
    %v1728 = vunpack.c.l.b16 %v1208
    %v1729 = vunpack.c.h.b16 %v1208
    %v1730 = vunpack.c.l.b16 %v1209
    %v1731 = vunpack.c.h.b16 %v1209
    %v1732 = vunpack.c.l.b16 %v1210
    %v1733 = vunpack.c.h.b16 %v1210
    %v1734 = vunpack.c.l.b16 %v1211
    %v1735 = vunpack.c.h.b16 %v1211
    %v1736 = vunpack.c.l.b16 %v1212
    %v1737 = vunpack.c.h.b16 %v1212
    %v1738 = vunpack.c.l.b16 %v1213
    %v1739 = vunpack.c.h.b16 %v1213
    %v1740 = vunpack.c.l.b16 %v1214
    %v1741 = vunpack.c.h.b16 %v1214
    %v1742 = vunpack.c.l.b16 %v1215
    %v1743 = vunpack.c.h.b16 %v1215
    %v1744 = vunpack.c.l.b16 %v1216
    %v1745 = vunpack.c.h.b16 %v1216
    %v1746 = vunpack.c.l.b16 %v1217
    %v1747 = vunpack.c.h.b16 %v1217
    %v1748 = vunpack.c.l.b16 %v1218
    %v1749 = vunpack.c.h.b16 %v1218
    %v1750 = vunpack.c.l.b16 %v1219
    %v1751 = vunpack.c.h.b16 %v1219
    %v1752 = vunpack.c.l.b16 %v1220
    %v1753 = vunpack.c.h.b16 %v1220
    %v1754 = vunpack.c.l.b16 %v1221
    %v1755 = vunpack.c.h.b16 %v1221
    %v1756 = vunpack.c.l.b16 %v1222
    %v1757 = vunpack.c.h.b16 %v1222
    %v1758 = vunpack.c.l.b16 %v1223
    %v1759 = vunpack.c.h.b16 %v1223
    %v1760 = vunpack.c.l.b16 %v1224
    %v1761 = vunpack.c.h.b16 %v1224
    %v1762 = vunpack.c.l.b16 %v1225
    %v1763 = vunpack.c.h.b16 %v1225
    %v1764 = vunpack.c.l.b16 %v1226
    %v1765 = vunpack.c.h.b16 %v1226
    %v1766 = vunpack.c.l.b16 %v1227
    %v1767 = vunpack.c.h.b16 %v1227
    %v1768 = vunpack.c.l.b16 %v1228
    %v1769 = vunpack.c.h.b16 %v1228
    %v1770 = vunpack.c.l.b16 %v1229
    %v1771 = vunpack.c.h.b16 %v1229
    %v1772 = vunpack.c.l.b16 %v1230
    %v1773 = vunpack.c.h.b16 %v1230
    %v1774 = vunpack.c.l.b16 %v1231
    %v1775 = vunpack.c.h.b16 %v1231
    %v1776 = vunpack.c.l.b16 %v1232
    %v1777 = vunpack.c.h.b16 %v1232
    %v1778 = vunpack.c.l.b16 %v1233
    %v1779 = vunpack.c.h.b16 %v1233
    %v1780 = vunpack.c.l.b16 %v1234
    %v1781 = vunpack.c.h.b16 %v1234
    %v1782 = vunpack.c.l.b16 %v1235
    %v1783 = vunpack.c.h.b16 %v1235
    %v1784 = vunpack.c.l.b16 %v1236
    %v1785 = vunpack.c.h.b16 %v1236
    %v1786 = vunpack.c.l.b16 %v1237
    %v1787 = vunpack.c.h.b16 %v1237
    %v1788 = vunpack.c.l.b16 %v1238
    %v1789 = vunpack.c.h.b16 %v1238
    %v1790 = vunpack.c.l.b16 %v1239
    %v1791 = vunpack.c.h.b16 %v1239
    %v1792 = vunpack.c.l.b16 %v1240
    %v1793 = vunpack.c.h.b16 %v1240
    %v1794 = vunpack.c.l.b16 %v1241
    %v1795 = vunpack.c.h.b16 %v1241
    %v1796 = vunpack.c.l.b16 %v1242
    %v1797 = vunpack.c.h.b16 %v1242
    %v1798 = vunpack.c.l.b16 %v1243
    %v1799 = vunpack.c.h.b16 %v1243
    %v1800 = vunpack.c.l.b16 %v1244
    %v1801 = vunpack.c.h.b16 %v1244
    %v1802 = vunpack.c.l.b16 %v1245
    %v1803 = vunpack.c.h.b16 %v1245
    %v1804 = vunpack.c.l.b16 %v1246
    %v1805 = vunpack.c.h.b16 %v1246
    %v1806 = vunpack.c.l.b16 %v1247
    %v1807 = vunpack.c.h.b16 %v1247
    %v1808 = vunpack.c.l.b16 %v1248
    %v1809 = vunpack.c.h.b16 %v1248
    %v1810 = vunpack.c.l.b16 %v1249
    %v1811 = vunpack.c.h.b16 %v1249
    %v1812 = vunpack.c.l.b16 %v1250
    %v1813 = vunpack.c.h.b16 %v1250
    %v1814 = vunpack.c.l.b16 %v1251
    %v1815 = vunpack.c.h.b16 %v1251
    %v1816 = vunpack.c.l.b16 %v1252
    %v1817 = vunpack.c.h.b16 %v1252
    %v1818 = vunpack.c.l.b16 %v1253
    %v1819 = vunpack.c.h.b16 %v1253
    %v1820 = vunpack.c.l.b16 %v1254
    %v1821 = vunpack.c.h.b16 %v1254
    %v1822 = vunpack.c.l.b16 %v1255
    %v1823 = vunpack.c.h.b16 %v1255
    %v1824 = vunpack.c.l.b16 %v1256
    %v1825 = vunpack.c.h.b16 %v1256
    %v1826 = vunpack.c.l.b16 %v1257
    %v1827 = vunpack.c.h.b16 %v1257
    %v1828 = vunpack.c.l.b16 %v1258
    %v1829 = vunpack.c.h.b16 %v1258
    %v1830 = vunpack.c.l.b16 %v1259
    %v1831 = vunpack.c.h.b16 %v1259
    %v1832 = vunpack.c.l.b16 %v1260
    %v1833 = vunpack.c.h.b16 %v1260
    %v1834 = vunpack.c.l.b16 %v1261
    %v1835 = vunpack.c.h.b16 %v1261
    %v1836 = vunpack.c.l.b16 %v1262
    %v1837 = vunpack.c.h.b16 %v1262
    %v1838 = vunpack.c.l.b16 %v1263
    %v1839 = vunpack.c.h.b16 %v1263
    %v1840 = vunpack.c.l.b16 %v1264
    %v1841 = vunpack.c.h.b16 %v1264
    %v1842 = vunpack.c.l.b16 %v1265
    %v1843 = vunpack.c.h.b16 %v1265
    %v1844 = vunpack.c.l.b16 %v1266
    %v1845 = vunpack.c.h.b16 %v1266
    %v1846 = vunpack.c.l.b16 %v1267
    %v1847 = vunpack.c.h.b16 %v1267
    %v1848 = vunpack.c.l.b16 %v1268
    %v1849 = vunpack.c.h.b16 %v1268
    %v1850 = vunpack.c.l.b16 %v1269
    %v1851 = vunpack.c.h.b16 %v1269
    %v1852 = vunpack.c.l.b16 %v1270
    %v1853 = vunpack.c.h.b16 %v1270
    %v1854 = vunpack.c.l.b16 %v1271
    %v1855 = vunpack.c.h.b16 %v1271
    %v1856 = vunpack.c.l.b16 %v1272
    %v1857 = vunpack.c.h.b16 %v1272
    %v1858 = vunpack.c.l.b16 %v1273
    %v1859 = vunpack.c.h.b16 %v1273
    %v1860 = vunpack.c.l.b16 %v1274
    %v1861 = vunpack.c.h.b16 %v1274
    %v1862 = vunpack.c.l.b16 %v1275
    %v1863 = vunpack.c.h.b16 %v1275
    %v1864 = vunpack.c.l.b16 %v1276
    %v1865 = vunpack.c.h.b16 %v1276
    %v1866 = vunpack.c.l.b16 %v1277
    %v1867 = vunpack.c.h.b16 %v1277
    %v1868 = vunpack.c.l.b16 %v1278
    %v1869 = vunpack.c.h.b16 %v1278
    %v1870 = vunpack.c.l.b16 %v1279
    %v1871 = vunpack.c.h.b16 %v1279
    %v1872 = vunpack.c.l.b16 %v1280
    %v1873 = vunpack.c.h.b16 %v1280
    %v1874 = vunpack.c.l.b16 %v1281
    %v1875 = vunpack.c.h.b16 %v1281
    %v1876 = vunpack.c.l.b16 %v1282
    %v1877 = vunpack.c.h.b16 %v1282
    %v1878 = vunpack.c.l.b16 %v1283
    %v1879 = vunpack.c.h.b16 %v1283
    %v1880 = vunpack.c.l.b16 %v1284
    %v1881 = vunpack.c.h.b16 %v1284
    %v1882 = vunpack.c.l.b16 %v1285
    %v1883 = vunpack.c.h.b16 %v1285
    %v1884 = vunpack.c.l.b16 %v1286
    %v1885 = vunpack.c.h.b16 %v1286
    %v1886 = vunpack.c.l.b16 %v1287
    %v1887 = vunpack.c.h.b16 %v1287
    %v1888 = vunpack.c.l.b16 %v1288
    %v1889 = vunpack.c.h.b16 %v1288
    %v1890 = vunpack.c.l.b16 %v1289
    %v1891 = vunpack.c.h.b16 %v1289
    %v1892 = vunpack.c.l.b16 %v1290
    %v1893 = vunpack.c.h.b16 %v1290
    %v1894 = vunpack.c.l.b16 %v1291
    %v1895 = vunpack.c.h.b16 %v1291
    %v1896 = vunpack.c.l.b16 %v1292
    %v1897 = vunpack.c.h.b16 %v1292
    %v1898 = vunpack.c.l.b16 %v1293
    %v1899 = vunpack.c.h.b16 %v1293
    %v1900 = vunpack.c.l.b16 %v1294
    %v1901 = vunpack.c.h.b16 %v1294
    %v1902 = vunpack.c.l.b16 %v1295
    %v1903 = vunpack.c.h.b16 %v1295
    %v1904 = vunpack.c.l.b16 %v1296
    %v1905 = vunpack.c.h.b16 %v1296
    %v1906 = vunpack.c.l.b16 %v1297
    %v1907 = vunpack.c.h.b16 %v1297
    %v1908 = vunpack.c.l.b16 %v1298
    %v1909 = vunpack.c.h.b16 %v1298
    %v1910 = vunpack.c.l.b16 %v1299
    %v1911 = vunpack.c.h.b16 %v1299
    %v1912 = vunpack.c.l.b16 %v1300
    %v1913 = vunpack.c.h.b16 %v1300
    %v1914 = vunpack.c.l.b16 %v1301
    %v1915 = vunpack.c.h.b16 %v1301
    %v1916 = vunpack.c.l.b16 %v1302
    %v1917 = vunpack.c.h.b16 %v1302
    %v1918 = vunpack.c.l.b16 %v1303
    %v1919 = vunpack.c.h.b16 %v1303
    %v1920 = vunpack.c.l.b16 %v1304
    %v1921 = vunpack.c.h.b16 %v1304
    %v1922 = vunpack.c.l.b16 %v1305
    %v1923 = vunpack.c.h.b16 %v1305
    %v1924 = vunpack.c.l.b16 %v1306
    %v1925 = vunpack.c.h.b16 %v1306
    %v1926 = vunpack.c.l.b16 %v1307
    %v1927 = vunpack.c.h.b16 %v1307
    %v1928 = vunpack.c.l.b16 %v1308
    %v1929 = vunpack.c.h.b16 %v1308
    %v1930 = vunpack.c.l.b16 %v1309
    %v1931 = vunpack.c.h.b16 %v1309
    %v1932 = vunpack.c.l.b16 %v1310
    %v1933 = vunpack.c.h.b16 %v1310
    %v1934 = vunpack.c.l.b16 %v1311
    %v1935 = vunpack.c.h.b16 %v1311
    %v1936 = vunpack.c.l.b16 %v1312
    %v1937 = vunpack.c.h.b16 %v1312
    %v1938 = vunpack.c.l.b16 %v1313
    %v1939 = vunpack.c.h.b16 %v1313
    %v1940 = vunpack.c.l.b16 %v1314
    %v1941 = vunpack.c.h.b16 %v1314
    %v1942 = vunpack.c.l.b16 %v1315
    %v1943 = vunpack.c.h.b16 %v1315
    %v1944 = vunpack.c.l.b16 %v1316
    %v1945 = vunpack.c.h.b16 %v1316
    %v1946 = vunpack.c.l.b16 %v1317
    %v1947 = vunpack.c.h.b16 %v1317
    %v1948 = vunpack.c.l.b16 %v1318
    %v1949 = vunpack.c.h.b16 %v1318
    %v1950 = vunpack.c.l.b16 %v1319
    %v1951 = vunpack.c.h.b16 %v1319
    %v1952 = vunpack.c.l.b16 %v1320
    %v1953 = vunpack.c.h.b16 %v1320
    %v1954 = vunpack.c.l.b16 %v1321
    %v1955 = vunpack.c.h.b16 %v1321
    %v1956 = vunpack.c.l.b16 %v1322
    %v1957 = vunpack.c.h.b16 %v1322
    %v1958 = vunpack.c.l.b16 %v1323
    %v1959 = vunpack.c.h.b16 %v1323
    %v1960 = vunpack.c.l.b16 %v1324
    %v1961 = vunpack.c.h.b16 %v1324
    %v1962 = vunpack.c.l.b16 %v1325
    %v1963 = vunpack.c.h.b16 %v1325
    %v1964 = vunpack.c.l.b16 %v1326
    %v1965 = vunpack.c.h.b16 %v1326
    %v1966 = vunpack.c.l.b16 %v1327
    %v1967 = vunpack.c.h.b16 %v1327
    %v1968 = vunpack.c.l.b16 %v1328
    %v1969 = vunpack.c.h.b16 %v1328
    %v1970 = vunpack.c.l.b16 %v1329
    %v1971 = vunpack.c.h.b16 %v1329
    %v1972 = vunpack.c.l.b16 %v1330
    %v1973 = vunpack.c.h.b16 %v1330
    %v1974 = vunpack.c.l.b16 %v1331
    %v1975 = vunpack.c.h.b16 %v1331
    %v1976 = vunpack.c.l.b16 %v1332
    %v1977 = vunpack.c.h.b16 %v1332
    %v1978 = vunpack.c.l.b16 %v1333
    %v1979 = vunpack.c.h.b16 %v1333
    %v1980 = vunpack.c.l.b16 %v1334
    %v1981 = vunpack.c.h.b16 %v1334
    %v1982 = vunpack.c.l.b16 %v1335
    %v1983 = vunpack.c.h.b16 %v1335
    %v1984 = vunpack.c.l.b16 %v1336
    %v1985 = vunpack.c.h.b16 %v1336
    %v1986 = vunpack.c.l.b16 %v1337
    %v1987 = vunpack.c.h.b16 %v1337
    %v1988 = vunpack.c.l.b16 %v1338
    %v1989 = vunpack.c.h.b16 %v1338
    %v1990 = vunpack.c.l.b16 %v1339
    %v1991 = vunpack.c.h.b16 %v1339
    %v1992 = vunpack.c.l.b16 %v1340
    %v1993 = vunpack.c.h.b16 %v1340
    %v1994 = vunpack.c.l.b16 %v1341
    %v1995 = vunpack.c.h.b16 %v1341
    %v1996 = vunpack.c.l.b16 %v1342
    %v1997 = vunpack.c.h.b16 %v1342
    %v1998 = vunpack.c.l.b16 %v1343
    %v1999 = vunpack.c.h.b16 %v1343
    %v2000 = vunpack.c.l.b16 %v1344
    %v2001 = vunpack.c.h.b16 %v1344
    %v2002 = vunpack.c.l.b16 %v1345
    %v2003 = vunpack.c.h.b16 %v1345
    %v2004 = vunpack.c.l.b16 %v1346
    %v2005 = vunpack.c.h.b16 %v1346
    %v2006 = vunpack.c.l.b16 %v1347
    %v2007 = vunpack.c.h.b16 %v1347
    %v2008 = vunpack.c.l.b16 %v1348
    %v2009 = vunpack.c.h.b16 %v1348
    %v2010 = vunpack.c.l.b16 %v1349
    %v2011 = vunpack.c.h.b16 %v1349
    %v2012 = vunpack.c.l.b16 %v1350
    %v2013 = vunpack.c.h.b16 %v1350
    %v2014 = vunpack.c.l.b16 %v1351
    %v2015 = vunpack.c.h.b16 %v1351
    %v2016 = vunpack.c.l.b16 %v1352
    %v2017 = vunpack.c.h.b16 %v1352
    %v2018 = vunpack.c.l.b16 %v1353
    %v2019 = vunpack.c.h.b16 %v1353
    %v2020 = vunpack.c.l.b16 %v1354
    %v2021 = vunpack.c.h.b16 %v1354
    %v2022 = vunpack.c.l.b16 %v1355
    %v2023 = vunpack.c.h.b16 %v1355
    %v2024 = vunpack.c.l.b16 %v1356
    %v2025 = vunpack.c.h.b16 %v1356
    %v2026 = vunpack.c.l.b16 %v1357
    %v2027 = vunpack.c.h.b16 %v1357
    %v2028 = vunpack.c.l.b16 %v1358
    %v2029 = vunpack.c.h.b16 %v1358
    %v2030 = vunpack.c.l.b16 %v1359
    %v2031 = vunpack.c.h.b16 %v1359
    %v2032 = vunpack.c.l.b16 %v1360
    %v2033 = vunpack.c.h.b16 %v1360
    %v2034 = vunpack.c.l.b16 %v1361
    %v2035 = vunpack.c.h.b16 %v1361
    %v2036 = vunpack.c.l.b16 %v1362
    %v2037 = vunpack.c.h.b16 %v1362
    %v2038 = vunpack.c.l.b16 %v1363
    %v2039 = vunpack.c.h.b16 %v1363
    %v2040 = vunpack.c.l.b16 %v1364
    %v2041 = vunpack.c.h.b16 %v1364
    %v2042 = vunpack.c.l.b16 %v1365
    %v2043 = vunpack.c.h.b16 %v1365
    %v2044 = vunpack.c.l.b16 %v1366
    %v2045 = vunpack.c.h.b16 %v1366
    %v2046 = vunpack.c.l.b16 %v1367
    %v2047 = vunpack.c.h.b16 %v1367
    %v2048 = vunpack.c.l.b16 %v1368
    %v2049 = vunpack.c.h.b16 %v1368
    %v2050 = vunpack.c.l.b16 %v1369
    %v2051 = vunpack.c.h.b16 %v1369
    %v2052 = vunpack.c.l.b16 %v1370
    %v2053 = vunpack.c.h.b16 %v1370
    %v2054 = vunpack.c.l.b16 %v1371
    %v2055 = vunpack.c.h.b16 %v1371
    %v2056 = vunpack.c.l.b16 %v1372
    %v2057 = vunpack.c.h.b16 %v1372
    %v2058 = vunpack.c.l.b16 %v1373
    %v2059 = vunpack.c.h.b16 %v1373
    %v2060 = vunpack.c.l.b16 %v1374
    %v2061 = vunpack.c.h.b16 %v1374
    %v2062 = vunpack.c.l.b16 %v1375
    %v2063 = vunpack.c.h.b16 %v1375
    %v2064 = vunpack.c.l.b16 %v1376
    %v2065 = vunpack.c.h.b16 %v1376
    %v2066 = vunpack.c.l.b16 %v1377
    %v2067 = vunpack.c.h.b16 %v1377
    %v2068 = vunpack.c.l.b16 %v1378
    %v2069 = vunpack.c.h.b16 %v1378
    %v2070 = vunpack.c.l.b16 %v1379
    %v2071 = vunpack.c.h.b16 %v1379
    %v2072 = vunpack.c.l.b16 %v1380
    %v2073 = vunpack.c.h.b16 %v1380
    %v2074 = vunpack.c.l.b16 %v1381
    %v2075 = vunpack.c.h.b16 %v1381
    %v2076 = vunpack.c.l.b16 %v1382
    %v2077 = vunpack.c.h.b16 %v1382
    %v2078 = vunpack.c.l.b16 %v1383
    %v2079 = vunpack.c.h.b16 %v1383
    %v2080 = vunpack.c.l.b16 %v1384
    %v2081 = vunpack.c.h.b16 %v1384
    %v2082 = vunpack.c.l.b16 %v1385
    %v2083 = vunpack.c.h.b16 %v1385
    %v2084 = vunpack.c.l.b16 %v1386
    %v2085 = vunpack.c.h.b16 %v1386
    %v2086 = vunpack.c.l.b16 %v1387
    %v2087 = vunpack.c.h.b16 %v1387
    %v2088 = vunpack.c.l.b16 %v1388
    %v2089 = vunpack.c.h.b16 %v1388
    %v2090 = vunpack.c.l.b16 %v1389
    %v2091 = vunpack.c.h.b16 %v1389
    %v2092 = vunpack.c.l.b16 %v1390
    %v2093 = vunpack.c.h.b16 %v1390
    %v2094 = vunpack.c.l.b16 %v1391
    %v2095 = vunpack.c.h.b16 %v1391
    %v2096 = vunpack.c.l.b16 %v1392
    %v2097 = vunpack.c.h.b16 %v1392
    %v2098 = vunpack.c.l.b16 %v1393
    %v2099 = vunpack.c.h.b16 %v1393
    %v2100 = vunpack.c.l.b16 %v1394
    %v2101 = vunpack.c.h.b16 %v1394
    %v2102 = vunpack.c.l.b16 %v1395
    %v2103 = vunpack.c.h.b16 %v1395
    %v2104 = vunpack.c.l.b16 %v1396
    %v2105 = vunpack.c.h.b16 %v1396
    %v2106 = vunpack.c.l.b16 %v1397
    %v2107 = vunpack.c.h.b16 %v1397
    %v2108 = vunpack.c.l.b16 %v1398
    %v2109 = vunpack.c.h.b16 %v1398
    %v2110 = vunpack.c.l.b16 %v1399
    %v2111 = vunpack.c.h.b16 %v1399
    %v2112 = vunpack.c.l.b16 %v1400
    %v2113 = vunpack.c.h.b16 %v1400
    %v2114 = vunpack.c.l.b16 %v1401
    %v2115 = vunpack.c.h.b16 %v1401
    %v2116 = vunpack.c.l.b16 %v1402
    %v2117 = vunpack.c.h.b16 %v1402
    %v2118 = vunpack.c.l.b16 %v1403
    %v2119 = vunpack.c.h.b16 %v1403
    %v2120 = vunpack.c.l.b16 %v1404
    %v2121 = vunpack.c.h.b16 %v1404
    %v2122 = vunpack.c.l.b16 %v1405
    %v2123 = vunpack.c.h.b16 %v1405
    %v2124 = vunpack.c.l.b16 %v1406
    %v2125 = vunpack.c.h.b16 %v1406
    %v2126 = vunpack.c.l.b16 %v1407
    %v2127 = vunpack.c.h.b16 %v1407
    %v2128 = vunpack.c.l.b16 %v1408
    %v2129 = vunpack.c.h.b16 %v1408
    %v2130 = vunpack.c.l.b16 %v1409
    %v2131 = vunpack.c.h.b16 %v1409
    %v2132 = vunpack.c.l.b16 %v1410
    %v2133 = vunpack.c.h.b16 %v1410
    %v2134 = vunpack.c.l.b16 %v1411
    %v2135 = vunpack.c.h.b16 %v1411
    %v2136 = vunpack.c.l.b16 %v1412
    %v2137 = vunpack.c.h.b16 %v1412
    %v2138 = vunpack.c.l.b16 %v1413
    %v2139 = vunpack.c.h.b16 %v1413
    %v2140 = vunpack.c.l.b16 %v1414
    %v2141 = vunpack.c.h.b16 %v1414
    %v2142 = vunpack.c.l.b16 %v1415
    %v2143 = vunpack.c.h.b16 %v1415
    %v2144 = vunpack.c.l.b16 %v1416
    %v2145 = vunpack.c.h.b16 %v1416
    %v2146 = vunpack.c.l.b16 %v1417
    %v2147 = vunpack.c.h.b16 %v1417
    %v2148 = vunpack.c.l.b16 %v1418
    %v2149 = vunpack.c.h.b16 %v1418
    %v2150 = vunpack.c.l.b16 %v1419
    %v2151 = vunpack.c.h.b16 %v1419
    %v2152 = vunpack.c.l.b16 %v1420
    %v2153 = vunpack.c.h.b16 %v1420
    %v2154 = vunpack.c.l.b16 %v1421
    %v2155 = vunpack.c.h.b16 %v1421
    %v2156 = vunpack.c.l.b16 %v1422
    %v2157 = vunpack.c.h.b16 %v1422
    %v2158 = vunpack.c.l.b16 %v1423
    %v2159 = vunpack.c.h.b16 %v1423
    %v2160 = vunpack.c.l.b16 %v1424
    %v2161 = vunpack.c.h.b16 %v1424
    %v2162 = vunpack.c.l.b16 %v1425
    %v2163 = vunpack.c.h.b16 %v1425
    %v2164 = vunpack.c.l.b16 %v1426
    %v2165 = vunpack.c.h.b16 %v1426
    %v2166 = vunpack.c.l.b16 %v1427
    %v2167 = vunpack.c.h.b16 %v1427
    %v2168 = vunpack.c.l.b16 %v1428
    %v2169 = vunpack.c.h.b16 %v1428
    %v2170 = vunpack.c.l.b16 %v1429
    %v2171 = vunpack.c.h.b16 %v1429
    %v2172 = vunpack.c.l.b16 %v1430
    %v2173 = vunpack.c.h.b16 %v1430
    %v2174 = vunpack.c.l.b16 %v1431
    %v2175 = vunpack.c.h.b16 %v1431
    %v2176 = vunpack.c.l.b16 %v1432
    %v2177 = vunpack.c.h.b16 %v1432
    %v2178 = vunpack.c.l.b16 %v1433
    %v2179 = vunpack.c.h.b16 %v1433
    %v2180 = vunpack.c.l.b16 %v1434
    %v2181 = vunpack.c.h.b16 %v1434
    %v2182 = vunpack.c.l.b16 %v1435
    %v2183 = vunpack.c.h.b16 %v1435
    %v2184 = vunpack.c.l.b16 %v1436
    %v2185 = vunpack.c.h.b16 %v1436
    %v2186 = vunpack.c.l.b16 %v1437
    %v2187 = vunpack.c.h.b16 %v1437
    %v2188 = vunpack.c.l.b16 %v1438
    %v2189 = vunpack.c.h.b16 %v1438
    %v2190 = vunpack.c.l.b16 %v1439
    %v2191 = vunpack.c.h.b16 %v1439
    %v2192 = vunpack.c.l.b16 %v1440
    %v2193 = vunpack.c.h.b16 %v1440
    %v2194 = vunpack.c.l.b16 %v1441
    %v2195 = vunpack.c.h.b16 %v1441
    %v2196 = vunpack.c.l.b16 %v1442
    %v2197 = vunpack.c.h.b16 %v1442
    %v2198 = vunpack.c.l.b16 %v1443
    %v2199 = vunpack.c.h.b16 %v1443
    %v2200 = vunpack.c.l.b16 %v1444
    %v2201 = vunpack.c.h.b16 %v1444
    %v2202 = vunpack.c.l.b16 %v1445
    %v2203 = vunpack.c.h.b16 %v1445
    %v2204 = vunpack.c.l.b16 %v1446
    %v2205 = vunpack.c.h.b16 %v1446
    %v2206 = vunpack.c.l.b16 %v1447
    %v2207 = vunpack.c.h.b16 %v1447
    %v2208 = vunpack.c.l.b16 %v1448
    %v2209 = vunpack.c.h.b16 %v1448
    %v2210 = vunpack.c.l.b16 %v1449
    %v2211 = vunpack.c.h.b16 %v1449
    %v2212 = vunpack.c.l.b16 %v1450
    %v2213 = vunpack.c.h.b16 %v1450
    %v2214 = vunpack.c.l.b16 %v1451
    %v2215 = vunpack.c.h.b16 %v1451
    %v2216 = vunpack.c.l.b16 %v1452
    %v2217 = vunpack.c.h.b16 %v1452
    %v2218 = vunpack.c.l.b16 %v1453
    %v2219 = vunpack.c.h.b16 %v1453
    %v2220 = vunpack.c.l.b16 %v1454
    %v2221 = vunpack.c.h.b16 %v1454
    %v2222 = vunpack.c.l.b16 %v1455
    %v2223 = vunpack.c.h.b16 %v1455
    %v2224 = vunpack.c.l.b16 %v1456
    %v2225 = vunpack.c.h.b16 %v1456
    %v2226 = vunpack.c.l.b16 %v1457
    %v2227 = vunpack.c.h.b16 %v1457
    %v2228 = vunpack.c.l.b16 %v1458
    %v2229 = vunpack.c.h.b16 %v1458
    %v2230 = vunpack.c.l.b16 %v1459
    %v2231 = vunpack.c.h.b16 %v1459
    %v2232 = vpack.c.b16 %v1728, %v1720
    %v2233 = vpack.c.b16 %v1729, %v1721
    %v2234 = vpack.c.b16 %v1730, %v1722
    %v2235 = vpack.c.b16 %v1731, %v1723
    %v2236 = vpack.c.b16 %v1732, %v1724
    %v2237 = vpack.c.b16 %v1733, %v1725
    %v2238 = vpack.c.b16 %v1734, %v1726
    %v2239 = vpack.c.b16 %v1735, %v1727
    %v2240 = vpack.c.b16 %v1744, %v1736
    %v2241 = vpack.c.b16 %v1745, %v1737
    %v2242 = vpack.c.b16 %v1746, %v1738
    %v2243 = vpack.c.b16 %v1747, %v1739
    %v2244 = vpack.c.b16 %v1748, %v1740
    %v2245 = vpack.c.b16 %v1749, %v1741
    %v2246 = vpack.c.b16 %v1750, %v1742
    %v2247 = vpack.c.b16 %v1751, %v1743
    %v2248 = vpack.c.b16 %v1760, %v1752
    %v2249 = vpack.c.b16 %v1761, %v1753
    %v2250 = vpack.c.b16 %v1762, %v1754
    %v2251 = vpack.c.b16 %v1763, %v1755
    %v2252 = vpack.c.b16 %v1764, %v1756
    %v2253 = vpack.c.b16 %v1765, %v1757
    %v2254 = vpack.c.b16 %v1766, %v1758
    %v2255 = vpack.c.b16 %v1767, %v1759
    %v2256 = vpack.c.b16 %v1776, %v1768
    %v2257 = vpack.c.b16 %v1777, %v1769
    %v2258 = vpack.c.b16 %v1778, %v1770
    %v2259 = vpack.c.b16 %v1779, %v1771
    %v2260 = vpack.c.b16 %v1780, %v1772
    %v2261 = vpack.c.b16 %v1781, %v1773
    %v2262 = vpack.c.b16 %v1782, %v1774
    %v2263 = vpack.c.b16 %v1783, %v1775
    %v2264 = vpack.c.b16 %v1792, %v1784
    %v2265 = vpack.c.b16 %v1793, %v1785
    %v2266 = vpack.c.b16 %v1794, %v1786
    %v2267 = vpack.c.b16 %v1795, %v1787
    %v2268 = vpack.c.b16 %v1796, %v1788
    %v2269 = vpack.c.b16 %v1797, %v1789
    %v2270 = vpack.c.b16 %v1798, %v1790
    %v2271 = vpack.c.b16 %v1799, %v1791
    %v2272 = vpack.c.b16 %v1808, %v1800
    %v2273 = vpack.c.b16 %v1809, %v1801
    %v2274 = vpack.c.b16 %v1810, %v1802
    %v2275 = vpack.c.b16 %v1811, %v1803
    %v2276 = vpack.c.b16 %v1812, %v1804
    %v2277 = vpack.c.b16 %v1813, %v1805
    %v2278 = vpack.c.b16 %v1814, %v1806
    %v2279 = vpack.c.b16 %v1815, %v1807
    %v2280 = vpack.c.b16 %v1824, %v1816
    %v2281 = vpack.c.b16 %v1825, %v1817
    %v2282 = vpack.c.b16 %v1826, %v1818
    %v2283 = vpack.c.b16 %v1827, %v1819
    %v2284 = vpack.c.b16 %v1828, %v1820
    %v2285 = vpack.c.b16 %v1829, %v1821
    %v2286 = vpack.c.b16 %v1830, %v1822
    %v2287 = vpack.c.b16 %v1831, %v1823
    %v2288 = vpack.c.b16 %v1840, %v1832
    %v2289 = vpack.c.b16 %v1841, %v1833
    %v2290 = vpack.c.b16 %v1842, %v1834
    %v2291 = vpack.c.b16 %v1843, %v1835
    %v2292 = vpack.c.b16 %v1844, %v1836
    %v2293 = vpack.c.b16 %v1845, %v1837
    %v2294 = vpack.c.b16 %v1846, %v1838
    %v2295 = vpack.c.b16 %v1847, %v1839
    %v2296 = vpack.c.b16 %v1856, %v1848
    %v2297 = vpack.c.b16 %v1857, %v1849
    %v2298 = vpack.c.b16 %v1858, %v1850
    %v2299 = vpack.c.b16 %v1859, %v1851
    %v2300 = vpack.c.b16 %v1860, %v1852
    %v2301 = vpack.c.b16 %v1861, %v1853
    %v2302 = vpack.c.b16 %v1862, %v1854
    %v2303 = vpack.c.b16 %v1863, %v1855
    %v2304 = vpack.c.b16 %v1872, %v1864
    %v2305 = vpack.c.b16 %v1873, %v1865
    %v2306 = vpack.c.b16 %v1874, %v1866
    %v2307 = vpack.c.b16 %v1875, %v1867
    %v2308 = vpack.c.b16 %v1876, %v1868
    %v2309 = vpack.c.b16 %v1877, %v1869
    %v2310 = vpack.c.b16 %v1878, %v1870
    %v2311 = vpack.c.b16 %v1879, %v1871
    %v2312 = vpack.c.b16 %v1888, %v1880
    %v2313 = vpack.c.b16 %v1889, %v1881
    %v2314 = vpack.c.b16 %v1890, %v1882
    %v2315 = vpack.c.b16 %v1891, %v1883
    %v2316 = vpack.c.b16 %v1892, %v1884
    %v2317 = vpack.c.b16 %v1893, %v1885
    %v2318 = vpack.c.b16 %v1894, %v1886
    %v2319 = vpack.c.b16 %v1895, %v1887
    %v2320 = vpack.c.b16 %v1904, %v1896
    %v2321 = vpack.c.b16 %v1905, %v1897
    %v2322 = vpack.c.b16 %v1906, %v1898
    %v2323 = vpack.c.b16 %v1907, %v1899
    %v2324 = vpack.c.b16 %v1908, %v1900
    %v2325 = vpack.c.b16 %v1909, %v1901
    %v2326 = vpack.c.b16 %v1910, %v1902
    %v2327 = vpack.c.b16 %v1911, %v1903
    %v2328 = vpack.c.b16 %v1920, %v1912
    %v2329 = vpack.c.b16 %v1921, %v1913
    %v2330 = vpack.c.b16 %v1922, %v1914
    %v2331 = vpack.c.b16 %v1923, %v1915
    %v2332 = vpack.c.b16 %v1924, %v1916
    %v2333 = vpack.c.b16 %v1925, %v1917
    %v2334 = vpack.c.b16 %v1926, %v1918
    %v2335 = vpack.c.b16 %v1927, %v1919
    %v2336 = vpack.c.b16 %v1936, %v1928
    %v2337 = vpack.c.b16 %v1937, %v1929
    %v2338 = vpack.c.b16 %v1938, %v1930
    %v2339 = vpack.c.b16 %v1939, %v1931
    %v2340 = vpack.c.b16 %v1940, %v1932
    %v2341 = vpack.c.b16 %v1941, %v1933
    %v2342 = vpack.c.b16 %v1942, %v1934
    %v2343 = vpack.c.b16 %v1943, %v1935
    %v2344 = vpack.c.b16 %v1952, %v1944
    %v2345 = vpack.c.b16 %v1953, %v1945
    %v2346 = vpack.c.b16 %v1954, %v1946
    %v2347 = vpack.c.b16 %v1955, %v1947
    %v2348 = vpack.c.b16 %v1956, %v1948
    %v2349 = vpack.c.b16 %v1957, %v1949
    %v2350 = vpack.c.b16 %v1958, %v1950
    %v2351 = vpack.c.b16 %v1959, %v1951
    %v2352 = vpack.c.b16 %v1968, %v1960
    %v2353 = vpack.c.b16 %v1969, %v1961
    %v2354 = vpack.c.b16 %v1970, %v1962
    %v2355 = vpack.c.b16 %v1971, %v1963
    %v2356 = vpack.c.b16 %v1972, %v1964
    %v2357 = vpack.c.b16 %v1973, %v1965
    %v2358 = vpack.c.b16 %v1974, %v1966
    %v2359 = vpack.c.b16 %v1975, %v1967
    %v2360 = vpack.c.b16 %v1984, %v1976
    %v2361 = vpack.c.b16 %v1985, %v1977
    %v2362 = vpack.c.b16 %v1986, %v1978
    %v2363 = vpack.c.b16 %v1987, %v1979
    %v2364 = vpack.c.b16 %v1988, %v1980
    %v2365 = vpack.c.b16 %v1989, %v1981
    %v2366 = vpack.c.b16 %v1990, %v1982
    %v2367 = vpack.c.b16 %v1991, %v1983
    %v2368 = vpack.c.b16 %v2000, %v1992
    %v2369 = vpack.c.b16 %v2001, %v1993
    %v2370 = vpack.c.b16 %v2002, %v1994
    %v2371 = vpack.c.b16 %v2003, %v1995
    %v2372 = vpack.c.b16 %v2004, %v1996
    %v2373 = vpack.c.b16 %v2005, %v1997
    %v2374 = vpack.c.b16 %v2006, %v1998
    %v2375 = vpack.c.b16 %v2007, %v1999
    %v2376 = vpack.c.b16 %v2016, %v2008
    %v2377 = vpack.c.b16 %v2017, %v2009
    %v2378 = vpack.c.b16 %v2018, %v2010
    %v2379 = vpack.c.b16 %v2019, %v2011
    %v2380 = vpack.c.b16 %v2020, %v2012
    %v2381 = vpack.c.b16 %v2021, %v2013
    %v2382 = vpack.c.b16 %v2022, %v2014
    %v2383 = vpack.c.b16 %v2023, %v2015
    %v2384 = vpack.c.b16 %v2032, %v2024
    %v2385 = vpack.c.b16 %v2033, %v2025
    %v2386 = vpack.c.b16 %v2034, %v2026
    %v2387 = vpack.c.b16 %v2035, %v2027
    %v2388 = vpack.c.b16 %v2036, %v2028
    %v2389 = vpack.c.b16 %v2037, %v2029
    %v2390 = vpack.c.b16 %v2038, %v2030
    %v2391 = vpack.c.b16 %v2039, %v2031
    %v2392 = vpack.c.b16 %v2048, %v2040
    %v2393 = vpack.c.b16 %v2049, %v2041
    %v2394 = vpack.c.b16 %v2050, %v2042
    %v2395 = vpack.c.b16 %v2051, %v2043
    %v2396 = vpack.c.b16 %v2052, %v2044
    %v2397 = vpack.c.b16 %v2053, %v2045
    %v2398 = vpack.c.b16 %v2054, %v2046
    %v2399 = vpack.c.b16 %v2055, %v2047
    %v2400 = vpack.c.b16 %v2064, %v2056
    %v2401 = vpack.c.b16 %v2065, %v2057
    %v2402 = vpack.c.b16 %v2066, %v2058
    %v2403 = vpack.c.b16 %v2067, %v2059
    %v2404 = vpack.c.b16 %v2068, %v2060
    %v2405 = vpack.c.b16 %v2069, %v2061
    %v2406 = vpack.c.b16 %v2070, %v2062
    %v2407 = vpack.c.b16 %v2071, %v2063
    %v2408 = vpack.c.b16 %v2080, %v2072
    %v2409 = vpack.c.b16 %v2081, %v2073
    %v2410 = vpack.c.b16 %v2082, %v2074
    %v2411 = vpack.c.b16 %v2083, %v2075
    %v2412 = vpack.c.b16 %v2084, %v2076
    %v2413 = vpack.c.b16 %v2085, %v2077
    %v2414 = vpack.c.b16 %v2086, %v2078
    %v2415 = vpack.c.b16 %v2087, %v2079
    %v2416 = vpack.c.b16 %v2096, %v2088
    %v2417 = vpack.c.b16 %v2097, %v2089
    %v2418 = vpack.c.b16 %v2098, %v2090
    %v2419 = vpack.c.b16 %v2099, %v2091
    %v2420 = vpack.c.b16 %v2100, %v2092
    %v2421 = vpack.c.b16 %v2101, %v2093
    %v2422 = vpack.c.b16 %v2102, %v2094
    %v2423 = vpack.c.b16 %v2103, %v2095
    %v2424 = vpack.c.b16 %v2112, %v2104
    %v2425 = vpack.c.b16 %v2113, %v2105
    %v2426 = vpack.c.b16 %v2114, %v2106
    %v2427 = vpack.c.b16 %v2115, %v2107
    %v2428 = vpack.c.b16 %v2116, %v2108
    %v2429 = vpack.c.b16 %v2117, %v2109
    %v2430 = vpack.c.b16 %v2118, %v2110
    %v2431 = vpack.c.b16 %v2119, %v2111
    %v2432 = vpack.c.b16 %v2128, %v2120
    %v2433 = vpack.c.b16 %v2129, %v2121
    %v2434 = vpack.c.b16 %v2130, %v2122
    %v2435 = vpack.c.b16 %v2131, %v2123
    %v2436 = vpack.c.b16 %v2132, %v2124
    %v2437 = vpack.c.b16 %v2133, %v2125
    %v2438 = vpack.c.b16 %v2134, %v2126
    %v2439 = vpack.c.b16 %v2135, %v2127
    %v2440 = vpack.c.b16 %v2144, %v2136
    %v2441 = vpack.c.b16 %v2145, %v2137
    %v2442 = vpack.c.b16 %v2146, %v2138
    %v2443 = vpack.c.b16 %v2147, %v2139
    %v2444 = vpack.c.b16 %v2148, %v2140
    %v2445 = vpack.c.b16 %v2149, %v2141
    %v2446 = vpack.c.b16 %v2150, %v2142
    %v2447 = vpack.c.b16 %v2151, %v2143
    %v2448 = vpack.c.b16 %v2160, %v2152
    %v2449 = vpack.c.b16 %v2161, %v2153
    %v2450 = vpack.c.b16 %v2162, %v2154
    %v2451 = vpack.c.b16 %v2163, %v2155
    %v2452 = vpack.c.b16 %v2164, %v2156
    %v2453 = vpack.c.b16 %v2165, %v2157
    %v2454 = vpack.c.b16 %v2166, %v2158
    %v2455 = vpack.c.b16 %v2167, %v2159
    %v2456 = vpack.c.b16 %v2176, %v2168
    %v2457 = vpack.c.b16 %v2177, %v2169
    %v2458 = vpack.c.b16 %v2178, %v2170
    %v2459 = vpack.c.b16 %v2179, %v2171
    %v2460 = vpack.c.b16 %v2180, %v2172
    %v2461 = vpack.c.b16 %v2181, %v2173
    %v2462 = vpack.c.b16 %v2182, %v2174
    %v2463 = vpack.c.b16 %v2183, %v2175
    %v2464 = vpack.c.b16 %v2192, %v2184
    %v2465 = vpack.c.b16 %v2193, %v2185
    %v2466 = vpack.c.b16 %v2194, %v2186
    %v2467 = vpack.c.b16 %v2195, %v2187
    %v2468 = vpack.c.b16 %v2196, %v2188
    %v2469 = vpack.c.b16 %v2197, %v2189
    %v2470 = vpack.c.b16 %v2198, %v2190
    %v2471 = vpack.c.b16 %v2199, %v2191
    %v2472 = vpack.c.b16 %v2208, %v2200
    %v2473 = vpack.c.b16 %v2209, %v2201
    %v2474 = vpack.c.b16 %v2210, %v2202
    %v2475 = vpack.c.b16 %v2211, %v2203
    %v2476 = vpack.c.b16 %v2212, %v2204
    %v2477 = vpack.c.b16 %v2213, %v2205
    %v2478 = vpack.c.b16 %v2214, %v2206
    %v2479 = vpack.c.b16 %v2215, %v2207
    %v2480 = vpack.c.b16 %v2224, %v2216
    %v2481 = vpack.c.b16 %v2225, %v2217
    %v2482 = vpack.c.b16 %v2226, %v2218
    %v2483 = vpack.c.b16 %v2227, %v2219
    %v2484 = vpack.c.b16 %v2228, %v2220
    %v2485 = vpack.c.b16 %v2229, %v2221
    %v2486 = vpack.c.b16 %v2230, %v2222
    %v2487 = vpack.c.b16 %v2231, %v2223
    %2744 = vmatpush.bf16.msra.mxu0 %v2288
    %2745 = vmatpush.bf16.msra.mxu0 %v2280
    %2746 = vmatpush.bf16.msra.mxu0 %v2272
    %2747 = vmatpush.bf16.msra.mxu0 %v2264
    %2748 = vmatpush.bf16.msra.mxu0 %v2256
    %2749 = vmatpush.bf16.msra.mxu0 %v2248
    %2750 = vmatpush.bf16.msra.mxu0 %v2240
    %2751 = vmatpush.bf16.msra.mxu0 %v2232
    %2752 = vmatmul.bf16.gmra.mxu0 %v1460
    %v2753 = vpop.f32.mrf.mxu0
    %v2754 = vadd.f32 0.0, %v2753
    %v2755 = vpop.f32.mrf.mxu0
    %2756 = vdwg.mxu0
    %2757 = vmatpush.bf16.msra.mxu0 %v2352
    %2758 = vmatpush.bf16.msra.mxu0 %v2344
    %2759 = vmatpush.bf16.msra.mxu0 %v2336
    %2760 = vmatpush.bf16.msra.mxu0 %v2328
    %2761 = vmatpush.bf16.msra.mxu0 %v2320
    %2762 = vmatpush.bf16.msra.mxu0 %v2312
    %2763 = vmatpush.bf16.msra.mxu0 %v2304
    %2764 = vmatpush.bf16.msra.mxu0 %v2296
    %2765 = vmatmul.bf16.gmra.mxu0 %v1461
    %v2766 = vpop.f32.mrf.mxu0
    %v2767 = vadd.f32 %v2754, %v2766
    %v2768 = vpop.f32.mrf.mxu0
    %2769 = vdwg.mxu0
    %2770 = vmatpush.bf16.msra.mxu0 %v2416
    %2771 = vmatpush.bf16.msra.mxu0 %v2408
    %2772 = vmatpush.bf16.msra.mxu0 %v2400
    %2773 = vmatpush.bf16.msra.mxu0 %v2392
    %2774 = vmatpush.bf16.msra.mxu0 %v2384
    %2775 = vmatpush.bf16.msra.mxu0 %v2376
    %2776 = vmatpush.bf16.msra.mxu0 %v2368
    %2777 = vmatpush.bf16.msra.mxu0 %v2360
    %2778 = vmatmul.bf16.gmra.mxu0 %v1462
    %v2779 = vpop.f32.mrf.mxu0
    %v2780 = vadd.f32 %v2767, %v2779
    %v2781 = vpop.f32.mrf.mxu0
    %2782 = vdwg.mxu0
    %2783 = vmatpush.bf16.msra.mxu0 %v2480
    %2784 = vmatpush.bf16.msra.mxu0 %v2472
    %2785 = vmatpush.bf16.msra.mxu0 %v2464
    %2786 = vmatpush.bf16.msra.mxu0 %v2456
    %2787 = vmatpush.bf16.msra.mxu0 %v2448
    %2788 = vmatpush.bf16.msra.mxu0 %v2440
    %2789 = vmatpush.bf16.msra.mxu0 %v2432
    %2790 = vmatpush.bf16.msra.mxu0 %v2424
    %2791 = vmatmul.bf16.gmra.mxu0 %v1463
    %v2792 = vpop.f32.mrf.mxu0
    %v2793 = vadd.f32 %v2780, %v2792
    %v2794 = vpop.f32.mrf.mxu0
    %2795 = vdwg.mxu0
    %2796 = vmatpush.bf16.msra.mxu0 %v2289
    %2797 = vmatpush.bf16.msra.mxu0 %v2281
    %2798 = vmatpush.bf16.msra.mxu0 %v2273
    %2799 = vmatpush.bf16.msra.mxu0 %v2265
    %2800 = vmatpush.bf16.msra.mxu0 %v2257
    %2801 = vmatpush.bf16.msra.mxu0 %v2249
    %2802 = vmatpush.bf16.msra.mxu0 %v2241
    %2803 = vmatpush.bf16.msra.mxu0 %v2233
    %2804 = vmatmul.bf16.gmra.mxu0 %v1460
    %v2805 = vpop.f32.mrf.mxu0
    %v2806 = vadd.f32 0.0, %v2805
    %v2807 = vpop.f32.mrf.mxu0
    %2808 = vdwg.mxu0
    %2809 = vmatpush.bf16.msra.mxu0 %v2353
    %2810 = vmatpush.bf16.msra.mxu0 %v2345
    %2811 = vmatpush.bf16.msra.mxu0 %v2337
    %2812 = vmatpush.bf16.msra.mxu0 %v2329
    %2813 = vmatpush.bf16.msra.mxu0 %v2321
    %2814 = vmatpush.bf16.msra.mxu0 %v2313
    %2815 = vmatpush.bf16.msra.mxu0 %v2305
    %2816 = vmatpush.bf16.msra.mxu0 %v2297
    %2817 = vmatmul.bf16.gmra.mxu0 %v1461
    %v2818 = vpop.f32.mrf.mxu0
    %v2819 = vadd.f32 %v2806, %v2818
    %v2820 = vpop.f32.mrf.mxu0
    %2821 = vdwg.mxu0
    %2822 = vmatpush.bf16.msra.mxu0 %v2417
    %2823 = vmatpush.bf16.msra.mxu0 %v2409
    %2824 = vmatpush.bf16.msra.mxu0 %v2401
    %2825 = vmatpush.bf16.msra.mxu0 %v2393
    %2826 = vmatpush.bf16.msra.mxu0 %v2385
    %2827 = vmatpush.bf16.msra.mxu0 %v2377
    %2828 = vmatpush.bf16.msra.mxu0 %v2369
    %2829 = vmatpush.bf16.msra.mxu0 %v2361
    %2830 = vmatmul.bf16.gmra.mxu0 %v1462
    %v2831 = vpop.f32.mrf.mxu0
    %v2832 = vadd.f32 %v2819, %v2831
    %v2833 = vpop.f32.mrf.mxu0
    %2834 = vdwg.mxu0
    %2835 = vmatpush.bf16.msra.mxu0 %v2481
    %2836 = vmatpush.bf16.msra.mxu0 %v2473
    %2837 = vmatpush.bf16.msra.mxu0 %v2465
    %2838 = vmatpush.bf16.msra.mxu0 %v2457
    %2839 = vmatpush.bf16.msra.mxu0 %v2449
    %2840 = vmatpush.bf16.msra.mxu0 %v2441
    %2841 = vmatpush.bf16.msra.mxu0 %v2433
    %2842 = vmatpush.bf16.msra.mxu0 %v2425
    %2843 = vmatmul.bf16.gmra.mxu0 %v1463
    %v2844 = vpop.f32.mrf.mxu0
    %v2845 = vadd.f32 %v2832, %v2844
    %v2846 = vpop.f32.mrf.mxu0
    %2847 = vdwg.mxu0
    %2848 = vmatpush.bf16.msra.mxu0 %v2290
    %2849 = vmatpush.bf16.msra.mxu0 %v2282
    %2850 = vmatpush.bf16.msra.mxu0 %v2274
    %2851 = vmatpush.bf16.msra.mxu0 %v2266
    %2852 = vmatpush.bf16.msra.mxu0 %v2258
    %2853 = vmatpush.bf16.msra.mxu0 %v2250
    %2854 = vmatpush.bf16.msra.mxu0 %v2242
    %2855 = vmatpush.bf16.msra.mxu0 %v2234
    %2856 = vmatmul.bf16.gmra.mxu0 %v1460
    %v2857 = vpop.f32.mrf.mxu0
    %v2858 = vadd.f32 0.0, %v2857
    %v2859 = vpop.f32.mrf.mxu0
    %2860 = vdwg.mxu0
    %2861 = vmatpush.bf16.msra.mxu0 %v2354
    %2862 = vmatpush.bf16.msra.mxu0 %v2346
    %2863 = vmatpush.bf16.msra.mxu0 %v2338
    %2864 = vmatpush.bf16.msra.mxu0 %v2330
    %2865 = vmatpush.bf16.msra.mxu0 %v2322
    %2866 = vmatpush.bf16.msra.mxu0 %v2314
    %2867 = vmatpush.bf16.msra.mxu0 %v2306
    %2868 = vmatpush.bf16.msra.mxu0 %v2298
    %2869 = vmatmul.bf16.gmra.mxu0 %v1461
    %v2870 = vpop.f32.mrf.mxu0
    %v2871 = vadd.f32 %v2858, %v2870
    %v2872 = vpop.f32.mrf.mxu0
    %2873 = vdwg.mxu0
    %2874 = vmatpush.bf16.msra.mxu0 %v2418
    %2875 = vmatpush.bf16.msra.mxu0 %v2410
    %2876 = vmatpush.bf16.msra.mxu0 %v2402
    %2877 = vmatpush.bf16.msra.mxu0 %v2394
    %2878 = vmatpush.bf16.msra.mxu0 %v2386
    %2879 = vmatpush.bf16.msra.mxu0 %v2378
    %2880 = vmatpush.bf16.msra.mxu0 %v2370
    %2881 = vmatpush.bf16.msra.mxu0 %v2362
    %2882 = vmatmul.bf16.gmra.mxu0 %v1462
    %v2883 = vpop.f32.mrf.mxu0
    %v2884 = vadd.f32 %v2871, %v2883
    %v2885 = vpop.f32.mrf.mxu0
    %2886 = vdwg.mxu0
    %2887 = vmatpush.bf16.msra.mxu0 %v2482
    %2888 = vmatpush.bf16.msra.mxu0 %v2474
    %2889 = vmatpush.bf16.msra.mxu0 %v2466
    %2890 = vmatpush.bf16.msra.mxu0 %v2458
    %2891 = vmatpush.bf16.msra.mxu0 %v2450
    %2892 = vmatpush.bf16.msra.mxu0 %v2442
    %2893 = vmatpush.bf16.msra.mxu0 %v2434
    %2894 = vmatpush.bf16.msra.mxu0 %v2426
    %2895 = vmatmul.bf16.gmra.mxu0 %v1463
    %v2896 = vpop.f32.mrf.mxu0
    %v2897 = vadd.f32 %v2884, %v2896
    %v2898 = vpop.f32.mrf.mxu0
    %2899 = vdwg.mxu0
    %2900 = vmatpush.bf16.msra.mxu0 %v2291
    %2901 = vmatpush.bf16.msra.mxu0 %v2283
    %2902 = vmatpush.bf16.msra.mxu0 %v2275
    %2903 = vmatpush.bf16.msra.mxu0 %v2267
    %2904 = vmatpush.bf16.msra.mxu0 %v2259
    %2905 = vmatpush.bf16.msra.mxu0 %v2251
    %2906 = vmatpush.bf16.msra.mxu0 %v2243
    %2907 = vmatpush.bf16.msra.mxu0 %v2235
    %2908 = vmatmul.bf16.gmra.mxu0 %v1460
    %v2909 = vpop.f32.mrf.mxu0
    %v2910 = vadd.f32 0.0, %v2909
    %v2911 = vpop.f32.mrf.mxu0
    %2912 = vdwg.mxu0
    %2913 = vmatpush.bf16.msra.mxu0 %v2355
    %2914 = vmatpush.bf16.msra.mxu0 %v2347
    %2915 = vmatpush.bf16.msra.mxu0 %v2339
    %2916 = vmatpush.bf16.msra.mxu0 %v2331
    %2917 = vmatpush.bf16.msra.mxu0 %v2323
    %2918 = vmatpush.bf16.msra.mxu0 %v2315
    %2919 = vmatpush.bf16.msra.mxu0 %v2307
    %2920 = vmatpush.bf16.msra.mxu0 %v2299
    %2921 = vmatmul.bf16.gmra.mxu0 %v1461
    %v2922 = vpop.f32.mrf.mxu0
    %v2923 = vadd.f32 %v2910, %v2922
    %v2924 = vpop.f32.mrf.mxu0
    %2925 = vdwg.mxu0
    %2926 = vmatpush.bf16.msra.mxu0 %v2419
    %2927 = vmatpush.bf16.msra.mxu0 %v2411
    %2928 = vmatpush.bf16.msra.mxu0 %v2403
    %2929 = vmatpush.bf16.msra.mxu0 %v2395
    %2930 = vmatpush.bf16.msra.mxu0 %v2387
    %2931 = vmatpush.bf16.msra.mxu0 %v2379
    %2932 = vmatpush.bf16.msra.mxu0 %v2371
    %2933 = vmatpush.bf16.msra.mxu0 %v2363
    %2934 = vmatmul.bf16.gmra.mxu0 %v1462
    %v2935 = vpop.f32.mrf.mxu0
    %v2936 = vadd.f32 %v2923, %v2935
    %v2937 = vpop.f32.mrf.mxu0
    %2938 = vdwg.mxu0
    %2939 = vmatpush.bf16.msra.mxu0 %v2483
    %2940 = vmatpush.bf16.msra.mxu0 %v2475
    %2941 = vmatpush.bf16.msra.mxu0 %v2467
    %2942 = vmatpush.bf16.msra.mxu0 %v2459
    %2943 = vmatpush.bf16.msra.mxu0 %v2451
    %2944 = vmatpush.bf16.msra.mxu0 %v2443
    %2945 = vmatpush.bf16.msra.mxu0 %v2435
    %2946 = vmatpush.bf16.msra.mxu0 %v2427
    %2947 = vmatmul.bf16.gmra.mxu0 %v1463
    %v2948 = vpop.f32.mrf.mxu0
    %v2949 = vadd.f32 %v2936, %v2948
    %v2950 = vpop.f32.mrf.mxu0
    %2951 = vdwg.mxu0
    %2952 = vmatpush.bf16.msra.mxu0 %v2292
    %2953 = vmatpush.bf16.msra.mxu0 %v2284
    %2954 = vmatpush.bf16.msra.mxu0 %v2276
    %2955 = vmatpush.bf16.msra.mxu0 %v2268
    %2956 = vmatpush.bf16.msra.mxu0 %v2260
    %2957 = vmatpush.bf16.msra.mxu0 %v2252
    %2958 = vmatpush.bf16.msra.mxu0 %v2244
    %2959 = vmatpush.bf16.msra.mxu0 %v2236
    %2960 = vmatmul.bf16.gmra.mxu0 %v1460
    %v2961 = vpop.f32.mrf.mxu0
    %v2962 = vadd.f32 0.0, %v2961
    %v2963 = vpop.f32.mrf.mxu0
    %2964 = vdwg.mxu0
    %2965 = vmatpush.bf16.msra.mxu0 %v2356
    %2966 = vmatpush.bf16.msra.mxu0 %v2348
    %2967 = vmatpush.bf16.msra.mxu0 %v2340
    %2968 = vmatpush.bf16.msra.mxu0 %v2332
    %2969 = vmatpush.bf16.msra.mxu0 %v2324
    %2970 = vmatpush.bf16.msra.mxu0 %v2316
    %2971 = vmatpush.bf16.msra.mxu0 %v2308
    %2972 = vmatpush.bf16.msra.mxu0 %v2300
    %2973 = vmatmul.bf16.gmra.mxu0 %v1461
    %v2974 = vpop.f32.mrf.mxu0
    %v2975 = vadd.f32 %v2962, %v2974
    %v2976 = vpop.f32.mrf.mxu0
    %2977 = vdwg.mxu0
    %2978 = vmatpush.bf16.msra.mxu0 %v2420
    %2979 = vmatpush.bf16.msra.mxu0 %v2412
    %2980 = vmatpush.bf16.msra.mxu0 %v2404
    %2981 = vmatpush.bf16.msra.mxu0 %v2396
    %2982 = vmatpush.bf16.msra.mxu0 %v2388
    %2983 = vmatpush.bf16.msra.mxu0 %v2380
    %2984 = vmatpush.bf16.msra.mxu0 %v2372
    %2985 = vmatpush.bf16.msra.mxu0 %v2364
    %2986 = vmatmul.bf16.gmra.mxu0 %v1462
    %v2987 = vpop.f32.mrf.mxu0
    %v2988 = vadd.f32 %v2975, %v2987
    %v2989 = vpop.f32.mrf.mxu0
    %2990 = vdwg.mxu0
    %2991 = vmatpush.bf16.msra.mxu0 %v2484
    %2992 = vmatpush.bf16.msra.mxu0 %v2476
    %2993 = vmatpush.bf16.msra.mxu0 %v2468
    %2994 = vmatpush.bf16.msra.mxu0 %v2460
    %2995 = vmatpush.bf16.msra.mxu0 %v2452
    %2996 = vmatpush.bf16.msra.mxu0 %v2444
    %2997 = vmatpush.bf16.msra.mxu0 %v2436
    %2998 = vmatpush.bf16.msra.mxu0 %v2428
    %2999 = vmatmul.bf16.gmra.mxu0 %v1463
    %v3000 = vpop.f32.mrf.mxu0
    %v3001 = vadd.f32 %v2988, %v3000
    %v3002 = vpop.f32.mrf.mxu0
    %3003 = vdwg.mxu0
    %3004 = vmatpush.bf16.msra.mxu0 %v2293
    %3005 = vmatpush.bf16.msra.mxu0 %v2285
    %3006 = vmatpush.bf16.msra.mxu0 %v2277
    %3007 = vmatpush.bf16.msra.mxu0 %v2269
    %3008 = vmatpush.bf16.msra.mxu0 %v2261
    %3009 = vmatpush.bf16.msra.mxu0 %v2253
    %3010 = vmatpush.bf16.msra.mxu0 %v2245
    %3011 = vmatpush.bf16.msra.mxu0 %v2237
    %3012 = vmatmul.bf16.gmra.mxu0 %v1460
    %v3013 = vpop.f32.mrf.mxu0
    %v3014 = vadd.f32 0.0, %v3013
    %v3015 = vpop.f32.mrf.mxu0
    %3016 = vdwg.mxu0
    %3017 = vmatpush.bf16.msra.mxu0 %v2357
    %3018 = vmatpush.bf16.msra.mxu0 %v2349
    %3019 = vmatpush.bf16.msra.mxu0 %v2341
    %3020 = vmatpush.bf16.msra.mxu0 %v2333
    %3021 = vmatpush.bf16.msra.mxu0 %v2325
    %3022 = vmatpush.bf16.msra.mxu0 %v2317
    %3023 = vmatpush.bf16.msra.mxu0 %v2309
    %3024 = vmatpush.bf16.msra.mxu0 %v2301
    %3025 = vmatmul.bf16.gmra.mxu0 %v1461
    %v3026 = vpop.f32.mrf.mxu0
    %v3027 = vadd.f32 %v3014, %v3026
    %v3028 = vpop.f32.mrf.mxu0
    %3029 = vdwg.mxu0
    %3030 = vmatpush.bf16.msra.mxu0 %v2421
    %3031 = vmatpush.bf16.msra.mxu0 %v2413
    %3032 = vmatpush.bf16.msra.mxu0 %v2405
    %3033 = vmatpush.bf16.msra.mxu0 %v2397
    %3034 = vmatpush.bf16.msra.mxu0 %v2389
    %3035 = vmatpush.bf16.msra.mxu0 %v2381
    %3036 = vmatpush.bf16.msra.mxu0 %v2373
    %3037 = vmatpush.bf16.msra.mxu0 %v2365
    %3038 = vmatmul.bf16.gmra.mxu0 %v1462
    %v3039 = vpop.f32.mrf.mxu0
    %v3040 = vadd.f32 %v3027, %v3039
    %v3041 = vpop.f32.mrf.mxu0
    %3042 = vdwg.mxu0
    %3043 = vmatpush.bf16.msra.mxu0 %v2485
    %3044 = vmatpush.bf16.msra.mxu0 %v2477
    %3045 = vmatpush.bf16.msra.mxu0 %v2469
    %3046 = vmatpush.bf16.msra.mxu0 %v2461
    %3047 = vmatpush.bf16.msra.mxu0 %v2453
    %3048 = vmatpush.bf16.msra.mxu0 %v2445
    %3049 = vmatpush.bf16.msra.mxu0 %v2437
    %3050 = vmatpush.bf16.msra.mxu0 %v2429
    %3051 = vmatmul.bf16.gmra.mxu0 %v1463
    %v3052 = vpop.f32.mrf.mxu0
    %v3053 = vadd.f32 %v3040, %v3052
    %v3054 = vpop.f32.mrf.mxu0
    %3055 = vdwg.mxu0
    %3056 = vmatpush.bf16.msra.mxu0 %v2294
    %3057 = vmatpush.bf16.msra.mxu0 %v2286
    %3058 = vmatpush.bf16.msra.mxu0 %v2278
    %3059 = vmatpush.bf16.msra.mxu0 %v2270
    %3060 = vmatpush.bf16.msra.mxu0 %v2262
    %3061 = vmatpush.bf16.msra.mxu0 %v2254
    %3062 = vmatpush.bf16.msra.mxu0 %v2246
    %3063 = vmatpush.bf16.msra.mxu0 %v2238
    %3064 = vmatmul.bf16.gmra.mxu0 %v1460
    %v3065 = vpop.f32.mrf.mxu0
    %v3066 = vadd.f32 0.0, %v3065
    %v3067 = vpop.f32.mrf.mxu0
    %3068 = vdwg.mxu0
    %3069 = vmatpush.bf16.msra.mxu0 %v2358
    %3070 = vmatpush.bf16.msra.mxu0 %v2350
    %3071 = vmatpush.bf16.msra.mxu0 %v2342
    %3072 = vmatpush.bf16.msra.mxu0 %v2334
    %3073 = vmatpush.bf16.msra.mxu0 %v2326
    %3074 = vmatpush.bf16.msra.mxu0 %v2318
    %3075 = vmatpush.bf16.msra.mxu0 %v2310
    %3076 = vmatpush.bf16.msra.mxu0 %v2302
    %3077 = vmatmul.bf16.gmra.mxu0 %v1461
    %v3078 = vpop.f32.mrf.mxu0
    %v3079 = vadd.f32 %v3066, %v3078
    %v3080 = vpop.f32.mrf.mxu0
    %3081 = vdwg.mxu0
    %3082 = vmatpush.bf16.msra.mxu0 %v2422
    %3083 = vmatpush.bf16.msra.mxu0 %v2414
    %3084 = vmatpush.bf16.msra.mxu0 %v2406
    %3085 = vmatpush.bf16.msra.mxu0 %v2398
    %3086 = vmatpush.bf16.msra.mxu0 %v2390
    %3087 = vmatpush.bf16.msra.mxu0 %v2382
    %3088 = vmatpush.bf16.msra.mxu0 %v2374
    %3089 = vmatpush.bf16.msra.mxu0 %v2366
    %3090 = vmatmul.bf16.gmra.mxu0 %v1462
    %v3091 = vpop.f32.mrf.mxu0
    %v3092 = vadd.f32 %v3079, %v3091
    %v3093 = vpop.f32.mrf.mxu0
    %3094 = vdwg.mxu0
    %3095 = vmatpush.bf16.msra.mxu0 %v2486
    %3096 = vmatpush.bf16.msra.mxu0 %v2478
    %3097 = vmatpush.bf16.msra.mxu0 %v2470
    %3098 = vmatpush.bf16.msra.mxu0 %v2462
    %3099 = vmatpush.bf16.msra.mxu0 %v2454
    %3100 = vmatpush.bf16.msra.mxu0 %v2446
    %3101 = vmatpush.bf16.msra.mxu0 %v2438
    %3102 = vmatpush.bf16.msra.mxu0 %v2430
    %3103 = vmatmul.bf16.gmra.mxu0 %v1463
    %v3104 = vpop.f32.mrf.mxu0
    %v3105 = vadd.f32 %v3092, %v3104
    %v3106 = vpop.f32.mrf.mxu0
    %3107 = vdwg.mxu0
    %3108 = vmatpush.bf16.msra.mxu0 %v2295
    %3109 = vmatpush.bf16.msra.mxu0 %v2287
    %3110 = vmatpush.bf16.msra.mxu0 %v2279
    %3111 = vmatpush.bf16.msra.mxu0 %v2271
    %3112 = vmatpush.bf16.msra.mxu0 %v2263
    %3113 = vmatpush.bf16.msra.mxu0 %v2255
    %3114 = vmatpush.bf16.msra.mxu0 %v2247
    %3115 = vmatpush.bf16.msra.mxu0 %v2239
    %3116 = vmatmul.bf16.gmra.mxu0 %v1460
    %v3117 = vpop.f32.mrf.mxu0
    %v3118 = vadd.f32 0.0, %v3117
    %v3119 = vpop.f32.mrf.mxu0
    %3120 = vdwg.mxu0
    %3121 = vmatpush.bf16.msra.mxu0 %v2359
    %3122 = vmatpush.bf16.msra.mxu0 %v2351
    %3123 = vmatpush.bf16.msra.mxu0 %v2343
    %3124 = vmatpush.bf16.msra.mxu0 %v2335
    %3125 = vmatpush.bf16.msra.mxu0 %v2327
    %3126 = vmatpush.bf16.msra.mxu0 %v2319
    %3127 = vmatpush.bf16.msra.mxu0 %v2311
    %3128 = vmatpush.bf16.msra.mxu0 %v2303
    %3129 = vmatmul.bf16.gmra.mxu0 %v1461
    %v3130 = vpop.f32.mrf.mxu0
    %v3131 = vadd.f32 %v3118, %v3130
    %v3132 = vpop.f32.mrf.mxu0
    %3133 = vdwg.mxu0
    %3134 = vmatpush.bf16.msra.mxu0 %v2423
    %3135 = vmatpush.bf16.msra.mxu0 %v2415
    %3136 = vmatpush.bf16.msra.mxu0 %v2407
    %3137 = vmatpush.bf16.msra.mxu0 %v2399
    %3138 = vmatpush.bf16.msra.mxu0 %v2391
    %3139 = vmatpush.bf16.msra.mxu0 %v2383
    %3140 = vmatpush.bf16.msra.mxu0 %v2375
    %3141 = vmatpush.bf16.msra.mxu0 %v2367
    %3142 = vmatmul.bf16.gmra.mxu0 %v1462
    %v3143 = vpop.f32.mrf.mxu0
    %v3144 = vadd.f32 %v3131, %v3143
    %v3145 = vpop.f32.mrf.mxu0
    %3146 = vdwg.mxu0
    %3147 = vmatpush.bf16.msra.mxu0 %v2487
    %3148 = vmatpush.bf16.msra.mxu0 %v2479
    %3149 = vmatpush.bf16.msra.mxu0 %v2471
    %3150 = vmatpush.bf16.msra.mxu0 %v2463
    %3151 = vmatpush.bf16.msra.mxu0 %v2455
    %3152 = vmatpush.bf16.msra.mxu0 %v2447
    %3153 = vmatpush.bf16.msra.mxu0 %v2439
    %3154 = vmatpush.bf16.msra.mxu0 %v2431
    %3155 = vmatmul.bf16.gmra.mxu0 %v1463
    %v3156 = vpop.f32.mrf.mxu0
    %v3157 = vadd.f32 %v3144, %v3156
    %v3158 = vpop.f32.mrf.mxu0
    %3159 = vdwg.mxu0
    %v3160 = vrot.slane %v2793, 4
    %v3161 = vadd.f32 %v2793, %v3160
    %v3162 = vrot.slane %v3161, 2
    %v3163 = vadd.f32 %v3161, %v3162
    %v3164 = vrot.slane %v3163, 1
    %v3165 = vadd.f32 %v3163, %v3164
    %v3166 = vrot.slane %v2845, 4
    %v3167 = vadd.f32 %v2845, %v3166
    %v3168 = vrot.slane %v3167, 2
    %v3169 = vadd.f32 %v3167, %v3168
    %v3170 = vrot.slane %v3169, 1
    %v3171 = vadd.f32 %v3169, %v3170
    %v3172 = vrot.slane %v2897, 4
    %v3173 = vadd.f32 %v2897, %v3172
    %v3174 = vrot.slane %v3173, 2
    %v3175 = vadd.f32 %v3173, %v3174
    %v3176 = vrot.slane %v3175, 1
    %v3177 = vadd.f32 %v3175, %v3176
    %v3178 = vrot.slane %v2949, 4
    %v3179 = vadd.f32 %v2949, %v3178
    %v3180 = vrot.slane %v3179, 2
    %v3181 = vadd.f32 %v3179, %v3180
    %v3182 = vrot.slane %v3181, 1
    %v3183 = vadd.f32 %v3181, %v3182
    %v3184 = vrot.slane %v3001, 4
    %v3185 = vadd.f32 %v3001, %v3184
    %v3186 = vrot.slane %v3185, 2
    %v3187 = vadd.f32 %v3185, %v3186
    %v3188 = vrot.slane %v3187, 1
    %v3189 = vadd.f32 %v3187, %v3188
    %v3190 = vrot.slane %v3053, 4
    %v3191 = vadd.f32 %v3053, %v3190
    %v3192 = vrot.slane %v3191, 2
    %v3193 = vadd.f32 %v3191, %v3192
    %v3194 = vrot.slane %v3193, 1
    %v3195 = vadd.f32 %v3193, %v3194
    %v3196 = vrot.slane %v3105, 4
    %v3197 = vadd.f32 %v3105, %v3196
    %v3198 = vrot.slane %v3197, 2
    %v3199 = vadd.f32 %v3197, %v3198
    %v3200 = vrot.slane %v3199, 1
    %v3201 = vadd.f32 %v3199, %v3200
    %v3202 = vrot.slane %v3157, 4
    %v3203 = vadd.f32 %v3157, %v3202
    %v3204 = vrot.slane %v3203, 2
    %v3205 = vadd.f32 %v3203, %v3204
    %v3206 = vrot.slane %v3205, 1
    %v3207 = vadd.f32 %v3205, %v3206
    %v3208 = vmul.f32 %v3165, %v269
    %v3209 = vmul.f32 %v3171, %v269
    %v3210 = vmul.f32 %v3177, %v269
    %v3211 = vmul.f32 %v3183, %v269
    %v3212 = vmul.f32 %v3189, %v269
    %v3213 = vmul.f32 %v3195, %v269
    %v3214 = vmul.f32 %v3201, %v269
    %v3215 = vmul.f32 %v3207, %v269
    %v3216 = vmul.f32 %v2793, %v2793
    %v3217 = vmul.f32 %v2845, %v2845
    %v3218 = vmul.f32 %v2897, %v2897
    %v3219 = vmul.f32 %v2949, %v2949
    %v3220 = vmul.f32 %v3001, %v3001
    %v3221 = vmul.f32 %v3053, %v3053
    %v3222 = vmul.f32 %v3105, %v3105
    %v3223 = vmul.f32 %v3157, %v3157
    %v3224 = vrot.slane %v3216, 4
    %v3225 = vadd.f32 %v3216, %v3224
    %v3226 = vrot.slane %v3225, 2
    %v3227 = vadd.f32 %v3225, %v3226
    %v3228 = vrot.slane %v3227, 1
    %v3229 = vadd.f32 %v3227, %v3228
    %v3230 = vrot.slane %v3217, 4
    %v3231 = vadd.f32 %v3217, %v3230
    %v3232 = vrot.slane %v3231, 2
    %v3233 = vadd.f32 %v3231, %v3232
    %v3234 = vrot.slane %v3233, 1
    %v3235 = vadd.f32 %v3233, %v3234
    %v3236 = vrot.slane %v3218, 4
    %v3237 = vadd.f32 %v3218, %v3236
    %v3238 = vrot.slane %v3237, 2
    %v3239 = vadd.f32 %v3237, %v3238
    %v3240 = vrot.slane %v3239, 1
    %v3241 = vadd.f32 %v3239, %v3240
    %v3242 = vrot.slane %v3219, 4
    %v3243 = vadd.f32 %v3219, %v3242
    %v3244 = vrot.slane %v3243, 2
    %v3245 = vadd.f32 %v3243, %v3244
    %v3246 = vrot.slane %v3245, 1
    %v3247 = vadd.f32 %v3245, %v3246
    %v3248 = vrot.slane %v3220, 4
    %v3249 = vadd.f32 %v3220, %v3248
    %v3250 = vrot.slane %v3249, 2
    %v3251 = vadd.f32 %v3249, %v3250
    %v3252 = vrot.slane %v3251, 1
    %v3253 = vadd.f32 %v3251, %v3252
    %v3254 = vrot.slane %v3221, 4
    %v3255 = vadd.f32 %v3221, %v3254
    %v3256 = vrot.slane %v3255, 2
    %v3257 = vadd.f32 %v3255, %v3256
    %v3258 = vrot.slane %v3257, 1
    %v3259 = vadd.f32 %v3257, %v3258
    %v3260 = vrot.slane %v3222, 4
    %v3261 = vadd.f32 %v3222, %v3260
    %v3262 = vrot.slane %v3261, 2
    %v3263 = vadd.f32 %v3261, %v3262
    %v3264 = vrot.slane %v3263, 1
    %v3265 = vadd.f32 %v3263, %v3264
    %v3266 = vrot.slane %v3223, 4
    %v3267 = vadd.f32 %v3223, %v3266
    %v3268 = vrot.slane %v3267, 2
    %v3269 = vadd.f32 %v3267, %v3268
    %v3270 = vrot.slane %v3269, 1
    %v3271 = vadd.f32 %v3269, %v3270
    %v3272 = vmul.f32 %v3229, %v269
    %v3273 = vmul.f32 %v3235, %v269
    %v3274 = vmul.f32 %v3241, %v269
    %v3275 = vmul.f32 %v3247, %v269
    %v3276 = vmul.f32 %v3253, %v269
    %v3277 = vmul.f32 %v3259, %v269
    %v3278 = vmul.f32 %v3265, %v269
    %v3279 = vmul.f32 %v3271, %v269
    %v3280 = vmul.f32 %v3208, %v3208
    %v3281 = vmul.f32 %v3209, %v3209
    %v3282 = vmul.f32 %v3210, %v3210
    %v3283 = vmul.f32 %v3211, %v3211
    %v3284 = vmul.f32 %v3212, %v3212
    %v3285 = vmul.f32 %v3213, %v3213
    %v3286 = vmul.f32 %v3214, %v3214
    %v3287 = vmul.f32 %v3215, %v3215
    %v3288 = vsub.f32 %v3272, %v3280
    %v3289 = vsub.f32 %v3273, %v3281
    %v3290 = vsub.f32 %v3274, %v3282
    %v3291 = vsub.f32 %v3275, %v3283
    %v3292 = vsub.f32 %v3276, %v3284
    %v3293 = vsub.f32 %v3277, %v3285
    %v3294 = vsub.f32 %v3278, %v3286
    %v3295 = vsub.f32 %v3279, %v3287
    %v3296 = vld [vmem:[%s9] sm:$0xff]
    %v3297 = vadd.f32 %v3288, 1e-05
    %v3298 = vadd.f32 %v3289, 1e-05
    %v3299 = vadd.f32 %v3290, 1e-05
    %v3300 = vadd.f32 %v3291, 1e-05
    %v3301 = vadd.f32 %v3292, 1e-05
    %v3302 = vadd.f32 %v3293, 1e-05
    %v3303 = vadd.f32 %v3294, 1e-05
    %v3304 = vadd.f32 %v3295, 1e-05
    %v3305 = vrsqrt.pop %v3297
    %v3306 = vmul.f32 %v3305, %v3297
    %v3307 = vmul.f32 %v3306, %v3305
    %v3308 = vmul.f32 0.5, %v3307
    %v3309 = vsub.f32 1.5, %v3308
    %v3310 = vmul.f32 %v3305, %v3309
    %vm3311 = vweird.f32 %v3297
    %vm3312 = vweird.f32 %v3305
    %vm3313 = vmor %vm3311, %vm3312
    %v3314 = vsel %vm3313, %v3305, %v3310
    %v3315 = vrsqrt.pop %v3298
    %v3316 = vmul.f32 %v3315, %v3298
    %v3317 = vmul.f32 %v3316, %v3315
    %v3318 = vmul.f32 0.5, %v3317
    %v3319 = vsub.f32 1.5, %v3318
    %v3320 = vmul.f32 %v3315, %v3319
    %vm3321 = vweird.f32 %v3298
    %vm3322 = vweird.f32 %v3315
    %vm3323 = vmor %vm3321, %vm3322
    %v3324 = vsel %vm3323, %v3315, %v3320
    %v3325 = vrsqrt.pop %v3299
    %v3326 = vmul.f32 %v3325, %v3299
    %v3327 = vmul.f32 %v3326, %v3325
    %v3328 = vmul.f32 0.5, %v3327
    %v3329 = vsub.f32 1.5, %v3328
    %v3330 = vmul.f32 %v3325, %v3329
    %vm3331 = vweird.f32 %v3299
    %vm3332 = vweird.f32 %v3325
    %vm3333 = vmor %vm3331, %vm3332
    %v3334 = vsel %vm3333, %v3325, %v3330
    %v3335 = vrsqrt.pop %v3300
    %v3336 = vmul.f32 %v3335, %v3300
    %v3337 = vmul.f32 %v3336, %v3335
    %v3338 = vmul.f32 0.5, %v3337
    %v3339 = vsub.f32 1.5, %v3338
    %v3340 = vmul.f32 %v3335, %v3339
    %vm3341 = vweird.f32 %v3300
    %vm3342 = vweird.f32 %v3335
    %vm3343 = vmor %vm3341, %vm3342
    %v3344 = vsel %vm3343, %v3335, %v3340
    %v3345 = vrsqrt.pop %v3301
    %v3346 = vmul.f32 %v3345, %v3301
    %v3347 = vmul.f32 %v3346, %v3345
    %v3348 = vmul.f32 0.5, %v3347
    %v3349 = vsub.f32 1.5, %v3348
    %v3350 = vmul.f32 %v3345, %v3349
    %vm3351 = vweird.f32 %v3301
    %vm3352 = vweird.f32 %v3345
    %vm3353 = vmor %vm3351, %vm3352
    %v3354 = vsel %vm3353, %v3345, %v3350
    %v3355 = vrsqrt.pop %v3302
    %v3356 = vmul.f32 %v3355, %v3302
    %v3357 = vmul.f32 %v3356, %v3355
    %v3358 = vmul.f32 0.5, %v3357
    %v3359 = vsub.f32 1.5, %v3358
    %v3360 = vmul.f32 %v3355, %v3359
    %vm3361 = vweird.f32 %v3302
    %vm3362 = vweird.f32 %v3355
    %vm3363 = vmor %vm3361, %vm3362
    %v3364 = vsel %vm3363, %v3355, %v3360
    %v3365 = vrsqrt.pop %v3303
    %v3366 = vmul.f32 %v3365, %v3303
    %v3367 = vmul.f32 %v3366, %v3365
    %v3368 = vmul.f32 0.5, %v3367
    %v3369 = vsub.f32 1.5, %v3368
    %v3370 = vmul.f32 %v3365, %v3369
    %vm3371 = vweird.f32 %v3303
    %vm3372 = vweird.f32 %v3365
    %vm3373 = vmor %vm3371, %vm3372
    %v3374 = vsel %vm3373, %v3365, %v3370
    %v3375 = vrsqrt.pop %v3304
    %v3376 = vmul.f32 %v3375, %v3304
    %v3377 = vmul.f32 %v3376, %v3375
    %v3378 = vmul.f32 0.5, %v3377
    %v3379 = vsub.f32 1.5, %v3378
    %v3380 = vmul.f32 %v3375, %v3379
    %vm3381 = vweird.f32 %v3304
    %vm3382 = vweird.f32 %v3375
    %vm3383 = vmor %vm3381, %vm3382
    %v3384 = vsel %vm3383, %v3375, %v3380
    %v3393 = vrot.slane %v3324, 7
    %v3394 = vrot.slane %v3334, 6
    %v3395 = vrot.slane %v3344, 5
    %v3396 = vrot.slane %v3354, 4
    %v3397 = vrot.slane %v3364, 3
    %v3398 = vrot.slane %v3374, 2
    %v3399 = vrot.slane %v3384, 1
    %v3400 = vsel %vm491, %v3314, %v3393
    %v3401 = vsel %vm1139, %v3394, %v3395
    %v3402 = vsel %vm1141, %v3400, %v3401
    %vm3403 = vcmask 1044484
    %v3404 = vsel %vm3403, %v3396, %v3397
    %vm3405 = vcmask 1046534
    %v3406 = vsel %vm3405, %v3398, %v3399
    %vm3407 = vcmask 1045508
    %v3408 = vsel %vm3407, %v3404, %v3406
    %vm3409 = vcmask 1043456
    %v3410 = vsel %vm3409, %v3402, %v3408
    %v3412 = vmul.f32 %v3296, %v3410
    %v3413 = vld [vmem:[#allocation21] sm:$0xff]
    %v3415 = vperm.slane %v3412, 0
    %v3416 = vperm.slane %v3412, 1
    %v3417 = vperm.slane %v3412, 2
    %v3418 = vperm.slane %v3412, 3
    %v3419 = vperm.slane %v3412, 4
    %v3420 = vperm.slane %v3412, 5
    %v3421 = vperm.slane %v3412, 6
    %v3422 = vperm.slane %v3412, 7
    %v3431 = vmul.f32 %v3208, %v3415
    %v3432 = vmul.f32 %v3209, %v3416
    %v3433 = vmul.f32 %v3210, %v3417
    %v3434 = vmul.f32 %v3211, %v3418
    %v3435 = vmul.f32 %v3212, %v3419
    %v3436 = vmul.f32 %v3213, %v3420
    %v3437 = vmul.f32 %v3214, %v3421
    %v3438 = vmul.f32 %v3215, %v3422
    %v3447 = vrot.slane %v3432, 7
    %v3448 = vrot.slane %v3433, 6
    %v3449 = vrot.slane %v3434, 5
    %v3450 = vrot.slane %v3435, 4
    %v3451 = vrot.slane %v3436, 3
    %v3452 = vrot.slane %v3437, 2
    %v3453 = vrot.slane %v3438, 1
    %v3454 = vsel %vm491, %v3431, %v3447
    %v3455 = vsel %vm1139, %v3448, %v3449
    %v3456 = vsel %vm1141, %v3454, %v3455
    %v3457 = vsel %vm3403, %v3450, %v3451
    %v3458 = vsel %vm3405, %v3452, %v3453
    %v3459 = vsel %vm3407, %v3457, %v3458
    %v3460 = vsel %vm3409, %v3456, %v3459
    %v3462 = vsub.f32 %v3413, %v3460
    %v3463 = vmul.f32 %v2793, %v3415
    %v3464 = vmul.f32 %v2845, %v3416
    %v3465 = vmul.f32 %v2897, %v3417
    %v3466 = vmul.f32 %v2949, %v3418
    %v3467 = vmul.f32 %v3001, %v3419
    %v3468 = vmul.f32 %v3053, %v3420
    %v3469 = vmul.f32 %v3105, %v3421
    %v3470 = vmul.f32 %v3157, %v3422
    %v3472 = vperm.slane %v3462, 0
    %v3473 = vperm.slane %v3462, 1
    %v3474 = vperm.slane %v3462, 2
    %v3475 = vperm.slane %v3462, 3
    %v3476 = vperm.slane %v3462, 4
    %v3477 = vperm.slane %v3462, 5
    %v3478 = vperm.slane %v3462, 6
    %v3479 = vperm.slane %v3462, 7
    %v3488 = vadd.f32 %v3463, %v3472
    %v3489 = vadd.f32 %v3464, %v3473
    %v3490 = vadd.f32 %v3465, %v3474
    %v3491 = vadd.f32 %v3466, %v3475
    %v3492 = vadd.f32 %v3467, %v3476
    %v3493 = vadd.f32 %v3468, %v3477
    %v3494 = vadd.f32 %v3469, %v3478
    %v3495 = vadd.f32 %v3470, %v3479
    %vm3496 = vcmp.gt.f32.partialorder %v3488, 0.0
    %vm3497 = vcmp.gt.f32.partialorder %v3489, 0.0
    %vm3498 = vcmp.gt.f32.partialorder %v3490, 0.0
    %vm3499 = vcmp.gt.f32.partialorder %v3491, 0.0
    %vm3500 = vcmp.gt.f32.partialorder %v3492, 0.0
    %vm3501 = vcmp.gt.f32.partialorder %v3493, 0.0
    %vm3502 = vcmp.gt.f32.partialorder %v3494, 0.0
    %vm3503 = vcmp.gt.f32.partialorder %v3495, 0.0
    %v3504 = vmul.f32 %v3488, 0.2
    %v3505 = vmul.f32 %v3489, 0.2
    %v3506 = vmul.f32 %v3490, 0.2
    %v3507 = vmul.f32 %v3491, 0.2
    %v3508 = vmul.f32 %v3492, 0.2
    %v3509 = vmul.f32 %v3493, 0.2
    %v3510 = vmul.f32 %v3494, 0.2
    %v3511 = vmul.f32 %v3495, 0.2
    %v3512 = vsel %vm3496, %v3488, %v3504
    %v3513 = vsel %vm3497, %v3489, %v3505
    %v3514 = vsel %vm3498, %v3490, %v3506
    %v3515 = vsel %vm3499, %v3491, %v3507
    %v3516 = vsel %vm3500, %v3492, %v3508
    %v3517 = vsel %vm3501, %v3493, %v3509
    %v3518 = vsel %vm3502, %v3494, %v3510
    %v3519 = vsel %vm3503, %v3495, %v3511
    %s3520 = smul.u32 4, 128
    %s3521 = smul.u32 %s3520, 2
    %s3522 = sshll.u32 %s3521, 4
    %3523 = dma.done %s213, %s3522
    %v3524 = vpack.c.bf16 %v3512, %v3512
    %v3525 = vpack.c.bf16 %v3513, %v3513
    %v3526 = vpack.c.bf16 %v3514, %v3514
    %v3527 = vpack.c.bf16 %v3515, %v3515
    %v3528 = vpack.c.bf16 %v3516, %v3516
    %v3529 = vpack.c.bf16 %v3517, %v3517
    %v3530 = vpack.c.bf16 %v3518, %v3518
    %v3531 = vpack.c.bf16 %v3519, %v3519
    %v3532 = vld [vmem:[#allocation4] sm:$0xff]
    %v3533 = vld [vmem:[#allocation4 + $0x8] sm:$0xff]
    %v3534 = vld [vmem:[#allocation4 + $0x10] sm:$0xff]
    %v3535 = vld [vmem:[#allocation4 + $0x18] sm:$0xff]
    %v3536 = vld [vmem:[#allocation4 + $0x20] sm:$0xff]
    %v3537 = vld [vmem:[#allocation4 + $0x28] sm:$0xff]
    %v3538 = vld [vmem:[#allocation4 + $0x30] sm:$0xff]
    %v3539 = vld [vmem:[#allocation4 + $0x38] sm:$0xff]
    %v3540 = vld [vmem:[#allocation4 + $0x40] sm:$0xff]
    %v3541 = vld [vmem:[#allocation4 + $0x48] sm:$0xff]
    %v3542 = vld [vmem:[#allocation4 + $0x50] sm:$0xff]
    %v3543 = vld [vmem:[#allocation4 + $0x58] sm:$0xff]
    %v3544 = vld [vmem:[#allocation4 + $0x60] sm:$0xff]
    %v3545 = vld [vmem:[#allocation4 + $0x68] sm:$0xff]
    %v3546 = vld [vmem:[#allocation4 + $0x70] sm:$0xff]
    %v3547 = vld [vmem:[#allocation4 + $0x78] sm:$0xff]
    %v3548 = vld [vmem:[#allocation4 + $0x80] sm:$0xff]
    %v3549 = vld [vmem:[#allocation4 + $0x88] sm:$0xff]
    %v3550 = vld [vmem:[#allocation4 + $0x90] sm:$0xff]
    %v3551 = vld [vmem:[#allocation4 + $0x98] sm:$0xff]
    %v3552 = vld [vmem:[#allocation4 + $0xa0] sm:$0xff]
    %v3553 = vld [vmem:[#allocation4 + $0xa8] sm:$0xff]
    %v3554 = vld [vmem:[#allocation4 + $0xb0] sm:$0xff]
    %v3555 = vld [vmem:[#allocation4 + $0xb8] sm:$0xff]
    %v3556 = vld [vmem:[#allocation4 + $0xc0] sm:$0xff]
    %v3557 = vld [vmem:[#allocation4 + $0xc8] sm:$0xff]
    %v3558 = vld [vmem:[#allocation4 + $0xd0] sm:$0xff]
    %v3559 = vld [vmem:[#allocation4 + $0xd8] sm:$0xff]
    %v3560 = vld [vmem:[#allocation4 + $0xe0] sm:$0xff]
    %v3561 = vld [vmem:[#allocation4 + $0xe8] sm:$0xff]
    %v3562 = vld [vmem:[#allocation4 + $0xf0] sm:$0xff]
    %v3563 = vld [vmem:[#allocation4 + $0xf8] sm:$0xff]
    %v3564 = vld [vmem:[#allocation4 + $0x100] sm:$0xff]
    %v3565 = vld [vmem:[#allocation4 + $0x108] sm:$0xff]
    %v3566 = vld [vmem:[#allocation4 + $0x110] sm:$0xff]
    %v3567 = vld [vmem:[#allocation4 + $0x118] sm:$0xff]
    %v3568 = vld [vmem:[#allocation4 + $0x120] sm:$0xff]
    %v3569 = vld [vmem:[#allocation4 + $0x128] sm:$0xff]
    %v3570 = vld [vmem:[#allocation4 + $0x130] sm:$0xff]
    %v3571 = vld [vmem:[#allocation4 + $0x138] sm:$0xff]
    %v3572 = vld [vmem:[#allocation4 + $0x140] sm:$0xff]
    %v3573 = vld [vmem:[#allocation4 + $0x148] sm:$0xff]
    %v3574 = vld [vmem:[#allocation4 + $0x150] sm:$0xff]
    %v3575 = vld [vmem:[#allocation4 + $0x158] sm:$0xff]
    %v3576 = vld [vmem:[#allocation4 + $0x160] sm:$0xff]
    %v3577 = vld [vmem:[#allocation4 + $0x168] sm:$0xff]
    %v3578 = vld [vmem:[#allocation4 + $0x170] sm:$0xff]
    %v3579 = vld [vmem:[#allocation4 + $0x178] sm:$0xff]
    %v3580 = vld [vmem:[#allocation4 + $0x180] sm:$0xff]
    %v3581 = vld [vmem:[#allocation4 + $0x188] sm:$0xff]
    %v3582 = vld [vmem:[#allocation4 + $0x190] sm:$0xff]
    %v3583 = vld [vmem:[#allocation4 + $0x198] sm:$0xff]
    %v3584 = vld [vmem:[#allocation4 + $0x1a0] sm:$0xff]
    %v3585 = vld [vmem:[#allocation4 + $0x1a8] sm:$0xff]
    %v3586 = vld [vmem:[#allocation4 + $0x1b0] sm:$0xff]
    %v3587 = vld [vmem:[#allocation4 + $0x1b8] sm:$0xff]
    %v3588 = vld [vmem:[#allocation4 + $0x1c0] sm:$0xff]
    %v3589 = vld [vmem:[#allocation4 + $0x1c8] sm:$0xff]
    %v3590 = vld [vmem:[#allocation4 + $0x1d0] sm:$0xff]
    %v3591 = vld [vmem:[#allocation4 + $0x1d8] sm:$0xff]
    %v3592 = vld [vmem:[#allocation4 + $0x1e0] sm:$0xff]
    %v3593 = vld [vmem:[#allocation4 + $0x1e8] sm:$0xff]
    %v3594 = vld [vmem:[#allocation4 + $0x1f0] sm:$0xff]
    %v3595 = vld [vmem:[#allocation4 + $0x1f8] sm:$0xff]
    %v3596 = vld [vmem:[#allocation4 + $0x200] sm:$0xff]
    %v3597 = vld [vmem:[#allocation4 + $0x208] sm:$0xff]
    %v3598 = vld [vmem:[#allocation4 + $0x210] sm:$0xff]
    %v3599 = vld [vmem:[#allocation4 + $0x218] sm:$0xff]
    %v3600 = vld [vmem:[#allocation4 + $0x220] sm:$0xff]
    %v3601 = vld [vmem:[#allocation4 + $0x228] sm:$0xff]
    %v3602 = vld [vmem:[#allocation4 + $0x230] sm:$0xff]
    %v3603 = vld [vmem:[#allocation4 + $0x238] sm:$0xff]
    %v3604 = vld [vmem:[#allocation4 + $0x240] sm:$0xff]
    %v3605 = vld [vmem:[#allocation4 + $0x248] sm:$0xff]
    %v3606 = vld [vmem:[#allocation4 + $0x250] sm:$0xff]
    %v3607 = vld [vmem:[#allocation4 + $0x258] sm:$0xff]
    %v3608 = vld [vmem:[#allocation4 + $0x260] sm:$0xff]
    %v3609 = vld [vmem:[#allocation4 + $0x268] sm:$0xff]
    %v3610 = vld [vmem:[#allocation4 + $0x270] sm:$0xff]
    %v3611 = vld [vmem:[#allocation4 + $0x278] sm:$0xff]
    %v3612 = vld [vmem:[#allocation4 + $0x280] sm:$0xff]
    %v3613 = vld [vmem:[#allocation4 + $0x288] sm:$0xff]
    %v3614 = vld [vmem:[#allocation4 + $0x290] sm:$0xff]
    %v3615 = vld [vmem:[#allocation4 + $0x298] sm:$0xff]
    %v3616 = vld [vmem:[#allocation4 + $0x2a0] sm:$0xff]
    %v3617 = vld [vmem:[#allocation4 + $0x2a8] sm:$0xff]
    %v3618 = vld [vmem:[#allocation4 + $0x2b0] sm:$0xff]
    %v3619 = vld [vmem:[#allocation4 + $0x2b8] sm:$0xff]
    %v3620 = vld [vmem:[#allocation4 + $0x2c0] sm:$0xff]
    %v3621 = vld [vmem:[#allocation4 + $0x2c8] sm:$0xff]
    %v3622 = vld [vmem:[#allocation4 + $0x2d0] sm:$0xff]
    %v3623 = vld [vmem:[#allocation4 + $0x2d8] sm:$0xff]
    %v3624 = vld [vmem:[#allocation4 + $0x2e0] sm:$0xff]
    %v3625 = vld [vmem:[#allocation4 + $0x2e8] sm:$0xff]
    %v3626 = vld [vmem:[#allocation4 + $0x2f0] sm:$0xff]
    %v3627 = vld [vmem:[#allocation4 + $0x2f8] sm:$0xff]
    %v3628 = vld [vmem:[#allocation4 + $0x300] sm:$0xff]
    %v3629 = vld [vmem:[#allocation4 + $0x308] sm:$0xff]
    %v3630 = vld [vmem:[#allocation4 + $0x310] sm:$0xff]
    %v3631 = vld [vmem:[#allocation4 + $0x318] sm:$0xff]
    %v3632 = vld [vmem:[#allocation4 + $0x320] sm:$0xff]
    %v3633 = vld [vmem:[#allocation4 + $0x328] sm:$0xff]
    %v3634 = vld [vmem:[#allocation4 + $0x330] sm:$0xff]
    %v3635 = vld [vmem:[#allocation4 + $0x338] sm:$0xff]
    %v3636 = vld [vmem:[#allocation4 + $0x340] sm:$0xff]
    %v3637 = vld [vmem:[#allocation4 + $0x348] sm:$0xff]
    %v3638 = vld [vmem:[#allocation4 + $0x350] sm:$0xff]
    %v3639 = vld [vmem:[#allocation4 + $0x358] sm:$0xff]
    %v3640 = vld [vmem:[#allocation4 + $0x360] sm:$0xff]
    %v3641 = vld [vmem:[#allocation4 + $0x368] sm:$0xff]
    %v3642 = vld [vmem:[#allocation4 + $0x370] sm:$0xff]
    %v3643 = vld [vmem:[#allocation4 + $0x378] sm:$0xff]
    %v3644 = vld [vmem:[#allocation4 + $0x380] sm:$0xff]
    %v3645 = vld [vmem:[#allocation4 + $0x388] sm:$0xff]
    %v3646 = vld [vmem:[#allocation4 + $0x390] sm:$0xff]
    %v3647 = vld [vmem:[#allocation4 + $0x398] sm:$0xff]
    %v3648 = vld [vmem:[#allocation4 + $0x3a0] sm:$0xff]
    %v3649 = vld [vmem:[#allocation4 + $0x3a8] sm:$0xff]
    %v3650 = vld [vmem:[#allocation4 + $0x3b0] sm:$0xff]
    %v3651 = vld [vmem:[#allocation4 + $0x3b8] sm:$0xff]
    %v3652 = vld [vmem:[#allocation4 + $0x3c0] sm:$0xff]
    %v3653 = vld [vmem:[#allocation4 + $0x3c8] sm:$0xff]
    %v3654 = vld [vmem:[#allocation4 + $0x3d0] sm:$0xff]
    %v3655 = vld [vmem:[#allocation4 + $0x3d8] sm:$0xff]
    %v3656 = vld [vmem:[#allocation4 + $0x3e0] sm:$0xff]
    %v3657 = vld [vmem:[#allocation4 + $0x3e8] sm:$0xff]
    %v3658 = vld [vmem:[#allocation4 + $0x3f0] sm:$0xff]
    %v3659 = vld [vmem:[#allocation4 + $0x3f8] sm:$0xff]
    %v3660 = vld [vmem:[%s11] sm:$0x3]
    %v3662 = vperm.slane %v3660, 0
    %v3663 = vperm.slane %v3660, 1
    %v3794 = vunpack.c.l.b16 %v3532
    %v3795 = vunpack.c.h.b16 %v3532
    %v3796 = vunpack.c.l.b16 %v3533
    %v3797 = vunpack.c.h.b16 %v3533
    %v3798 = vunpack.c.l.b16 %v3534
    %v3799 = vunpack.c.h.b16 %v3534
    %v3800 = vunpack.c.l.b16 %v3535
    %v3801 = vunpack.c.h.b16 %v3535
    %v3802 = vunpack.c.l.b16 %v3536
    %v3803 = vunpack.c.h.b16 %v3536
    %v3804 = vunpack.c.l.b16 %v3537
    %v3805 = vunpack.c.h.b16 %v3537
    %v3806 = vunpack.c.l.b16 %v3538
    %v3807 = vunpack.c.h.b16 %v3538
    %v3808 = vunpack.c.l.b16 %v3539
    %v3809 = vunpack.c.h.b16 %v3539
    %v3810 = vunpack.c.l.b16 %v3540
    %v3811 = vunpack.c.h.b16 %v3540
    %v3812 = vunpack.c.l.b16 %v3541
    %v3813 = vunpack.c.h.b16 %v3541
    %v3814 = vunpack.c.l.b16 %v3542
    %v3815 = vunpack.c.h.b16 %v3542
    %v3816 = vunpack.c.l.b16 %v3543
    %v3817 = vunpack.c.h.b16 %v3543
    %v3818 = vunpack.c.l.b16 %v3544
    %v3819 = vunpack.c.h.b16 %v3544
    %v3820 = vunpack.c.l.b16 %v3545
    %v3821 = vunpack.c.h.b16 %v3545
    %v3822 = vunpack.c.l.b16 %v3546
    %v3823 = vunpack.c.h.b16 %v3546
    %v3824 = vunpack.c.l.b16 %v3547
    %v3825 = vunpack.c.h.b16 %v3547
    %v3826 = vunpack.c.l.b16 %v3548
    %v3827 = vunpack.c.h.b16 %v3548
    %v3828 = vunpack.c.l.b16 %v3549
    %v3829 = vunpack.c.h.b16 %v3549
    %v3830 = vunpack.c.l.b16 %v3550
    %v3831 = vunpack.c.h.b16 %v3550
    %v3832 = vunpack.c.l.b16 %v3551
    %v3833 = vunpack.c.h.b16 %v3551
    %v3834 = vunpack.c.l.b16 %v3552
    %v3835 = vunpack.c.h.b16 %v3552
    %v3836 = vunpack.c.l.b16 %v3553
    %v3837 = vunpack.c.h.b16 %v3553
    %v3838 = vunpack.c.l.b16 %v3554
    %v3839 = vunpack.c.h.b16 %v3554
    %v3840 = vunpack.c.l.b16 %v3555
    %v3841 = vunpack.c.h.b16 %v3555
    %v3842 = vunpack.c.l.b16 %v3556
    %v3843 = vunpack.c.h.b16 %v3556
    %v3844 = vunpack.c.l.b16 %v3557
    %v3845 = vunpack.c.h.b16 %v3557
    %v3846 = vunpack.c.l.b16 %v3558
    %v3847 = vunpack.c.h.b16 %v3558
    %v3848 = vunpack.c.l.b16 %v3559
    %v3849 = vunpack.c.h.b16 %v3559
    %v3850 = vunpack.c.l.b16 %v3560
    %v3851 = vunpack.c.h.b16 %v3560
    %v3852 = vunpack.c.l.b16 %v3561
    %v3853 = vunpack.c.h.b16 %v3561
    %v3854 = vunpack.c.l.b16 %v3562
    %v3855 = vunpack.c.h.b16 %v3562
    %v3856 = vunpack.c.l.b16 %v3563
    %v3857 = vunpack.c.h.b16 %v3563
    %v3858 = vunpack.c.l.b16 %v3564
    %v3859 = vunpack.c.h.b16 %v3564
    %v3860 = vunpack.c.l.b16 %v3565
    %v3861 = vunpack.c.h.b16 %v3565
    %v3862 = vunpack.c.l.b16 %v3566
    %v3863 = vunpack.c.h.b16 %v3566
    %v3864 = vunpack.c.l.b16 %v3567
    %v3865 = vunpack.c.h.b16 %v3567
    %v3866 = vunpack.c.l.b16 %v3568
    %v3867 = vunpack.c.h.b16 %v3568
    %v3868 = vunpack.c.l.b16 %v3569
    %v3869 = vunpack.c.h.b16 %v3569
    %v3870 = vunpack.c.l.b16 %v3570
    %v3871 = vunpack.c.h.b16 %v3570
    %v3872 = vunpack.c.l.b16 %v3571
    %v3873 = vunpack.c.h.b16 %v3571
    %v3874 = vunpack.c.l.b16 %v3572
    %v3875 = vunpack.c.h.b16 %v3572
    %v3876 = vunpack.c.l.b16 %v3573
    %v3877 = vunpack.c.h.b16 %v3573
    %v3878 = vunpack.c.l.b16 %v3574
    %v3879 = vunpack.c.h.b16 %v3574
    %v3880 = vunpack.c.l.b16 %v3575
    %v3881 = vunpack.c.h.b16 %v3575
    %v3882 = vunpack.c.l.b16 %v3576
    %v3883 = vunpack.c.h.b16 %v3576
    %v3884 = vunpack.c.l.b16 %v3577
    %v3885 = vunpack.c.h.b16 %v3577
    %v3886 = vunpack.c.l.b16 %v3578
    %v3887 = vunpack.c.h.b16 %v3578
    %v3888 = vunpack.c.l.b16 %v3579
    %v3889 = vunpack.c.h.b16 %v3579
    %v3890 = vunpack.c.l.b16 %v3580
    %v3891 = vunpack.c.h.b16 %v3580
    %v3892 = vunpack.c.l.b16 %v3581
    %v3893 = vunpack.c.h.b16 %v3581
    %v3894 = vunpack.c.l.b16 %v3582
    %v3895 = vunpack.c.h.b16 %v3582
    %v3896 = vunpack.c.l.b16 %v3583
    %v3897 = vunpack.c.h.b16 %v3583
    %v3898 = vunpack.c.l.b16 %v3584
    %v3899 = vunpack.c.h.b16 %v3584
    %v3900 = vunpack.c.l.b16 %v3585
    %v3901 = vunpack.c.h.b16 %v3585
    %v3902 = vunpack.c.l.b16 %v3586
    %v3903 = vunpack.c.h.b16 %v3586
    %v3904 = vunpack.c.l.b16 %v3587
    %v3905 = vunpack.c.h.b16 %v3587
    %v3906 = vunpack.c.l.b16 %v3588
    %v3907 = vunpack.c.h.b16 %v3588
    %v3908 = vunpack.c.l.b16 %v3589
    %v3909 = vunpack.c.h.b16 %v3589
    %v3910 = vunpack.c.l.b16 %v3590
    %v3911 = vunpack.c.h.b16 %v3590
    %v3912 = vunpack.c.l.b16 %v3591
    %v3913 = vunpack.c.h.b16 %v3591
    %v3914 = vunpack.c.l.b16 %v3592
    %v3915 = vunpack.c.h.b16 %v3592
    %v3916 = vunpack.c.l.b16 %v3593
    %v3917 = vunpack.c.h.b16 %v3593
    %v3918 = vunpack.c.l.b16 %v3594
    %v3919 = vunpack.c.h.b16 %v3594
    %v3920 = vunpack.c.l.b16 %v3595
    %v3921 = vunpack.c.h.b16 %v3595
    %v3922 = vunpack.c.l.b16 %v3596
    %v3923 = vunpack.c.h.b16 %v3596
    %v3924 = vunpack.c.l.b16 %v3597
    %v3925 = vunpack.c.h.b16 %v3597
    %v3926 = vunpack.c.l.b16 %v3598
    %v3927 = vunpack.c.h.b16 %v3598
    %v3928 = vunpack.c.l.b16 %v3599
    %v3929 = vunpack.c.h.b16 %v3599
    %v3930 = vunpack.c.l.b16 %v3600
    %v3931 = vunpack.c.h.b16 %v3600
    %v3932 = vunpack.c.l.b16 %v3601
    %v3933 = vunpack.c.h.b16 %v3601
    %v3934 = vunpack.c.l.b16 %v3602
    %v3935 = vunpack.c.h.b16 %v3602
    %v3936 = vunpack.c.l.b16 %v3603
    %v3937 = vunpack.c.h.b16 %v3603
    %v3938 = vunpack.c.l.b16 %v3604
    %v3939 = vunpack.c.h.b16 %v3604
    %v3940 = vunpack.c.l.b16 %v3605
    %v3941 = vunpack.c.h.b16 %v3605
    %v3942 = vunpack.c.l.b16 %v3606
    %v3943 = vunpack.c.h.b16 %v3606
    %v3944 = vunpack.c.l.b16 %v3607
    %v3945 = vunpack.c.h.b16 %v3607
    %v3946 = vunpack.c.l.b16 %v3608
    %v3947 = vunpack.c.h.b16 %v3608
    %v3948 = vunpack.c.l.b16 %v3609
    %v3949 = vunpack.c.h.b16 %v3609
    %v3950 = vunpack.c.l.b16 %v3610
    %v3951 = vunpack.c.h.b16 %v3610
    %v3952 = vunpack.c.l.b16 %v3611
    %v3953 = vunpack.c.h.b16 %v3611
    %v3954 = vunpack.c.l.b16 %v3612
    %v3955 = vunpack.c.h.b16 %v3612
    %v3956 = vunpack.c.l.b16 %v3613
    %v3957 = vunpack.c.h.b16 %v3613
    %v3958 = vunpack.c.l.b16 %v3614
    %v3959 = vunpack.c.h.b16 %v3614
    %v3960 = vunpack.c.l.b16 %v3615
    %v3961 = vunpack.c.h.b16 %v3615
    %v3962 = vunpack.c.l.b16 %v3616
    %v3963 = vunpack.c.h.b16 %v3616
    %v3964 = vunpack.c.l.b16 %v3617
    %v3965 = vunpack.c.h.b16 %v3617
    %v3966 = vunpack.c.l.b16 %v3618
    %v3967 = vunpack.c.h.b16 %v3618
    %v3968 = vunpack.c.l.b16 %v3619
    %v3969 = vunpack.c.h.b16 %v3619
    %v3970 = vunpack.c.l.b16 %v3620
    %v3971 = vunpack.c.h.b16 %v3620
    %v3972 = vunpack.c.l.b16 %v3621
    %v3973 = vunpack.c.h.b16 %v3621
    %v3974 = vunpack.c.l.b16 %v3622
    %v3975 = vunpack.c.h.b16 %v3622
    %v3976 = vunpack.c.l.b16 %v3623
    %v3977 = vunpack.c.h.b16 %v3623
    %v3978 = vunpack.c.l.b16 %v3624
    %v3979 = vunpack.c.h.b16 %v3624
    %v3980 = vunpack.c.l.b16 %v3625
    %v3981 = vunpack.c.h.b16 %v3625
    %v3982 = vunpack.c.l.b16 %v3626
    %v3983 = vunpack.c.h.b16 %v3626
    %v3984 = vunpack.c.l.b16 %v3627
    %v3985 = vunpack.c.h.b16 %v3627
    %v3986 = vunpack.c.l.b16 %v3628
    %v3987 = vunpack.c.h.b16 %v3628
    %v3988 = vunpack.c.l.b16 %v3629
    %v3989 = vunpack.c.h.b16 %v3629
    %v3990 = vunpack.c.l.b16 %v3630
    %v3991 = vunpack.c.h.b16 %v3630
    %v3992 = vunpack.c.l.b16 %v3631
    %v3993 = vunpack.c.h.b16 %v3631
    %v3994 = vunpack.c.l.b16 %v3632
    %v3995 = vunpack.c.h.b16 %v3632
    %v3996 = vunpack.c.l.b16 %v3633
    %v3997 = vunpack.c.h.b16 %v3633
    %v3998 = vunpack.c.l.b16 %v3634
    %v3999 = vunpack.c.h.b16 %v3634
    %v4000 = vunpack.c.l.b16 %v3635
    %v4001 = vunpack.c.h.b16 %v3635
    %v4002 = vunpack.c.l.b16 %v3636
    %v4003 = vunpack.c.h.b16 %v3636
    %v4004 = vunpack.c.l.b16 %v3637
    %v4005 = vunpack.c.h.b16 %v3637
    %v4006 = vunpack.c.l.b16 %v3638
    %v4007 = vunpack.c.h.b16 %v3638
    %v4008 = vunpack.c.l.b16 %v3639
    %v4009 = vunpack.c.h.b16 %v3639
    %v4010 = vunpack.c.l.b16 %v3640
    %v4011 = vunpack.c.h.b16 %v3640
    %v4012 = vunpack.c.l.b16 %v3641
    %v4013 = vunpack.c.h.b16 %v3641
    %v4014 = vunpack.c.l.b16 %v3642
    %v4015 = vunpack.c.h.b16 %v3642
    %v4016 = vunpack.c.l.b16 %v3643
    %v4017 = vunpack.c.h.b16 %v3643
    %v4018 = vunpack.c.l.b16 %v3644
    %v4019 = vunpack.c.h.b16 %v3644
    %v4020 = vunpack.c.l.b16 %v3645
    %v4021 = vunpack.c.h.b16 %v3645
    %v4022 = vunpack.c.l.b16 %v3646
    %v4023 = vunpack.c.h.b16 %v3646
    %v4024 = vunpack.c.l.b16 %v3647
    %v4025 = vunpack.c.h.b16 %v3647
    %v4026 = vunpack.c.l.b16 %v3648
    %v4027 = vunpack.c.h.b16 %v3648
    %v4028 = vunpack.c.l.b16 %v3649
    %v4029 = vunpack.c.h.b16 %v3649
    %v4030 = vunpack.c.l.b16 %v3650
    %v4031 = vunpack.c.h.b16 %v3650
    %v4032 = vunpack.c.l.b16 %v3651
    %v4033 = vunpack.c.h.b16 %v3651
    %v4034 = vunpack.c.l.b16 %v3652
    %v4035 = vunpack.c.h.b16 %v3652
    %v4036 = vunpack.c.l.b16 %v3653
    %v4037 = vunpack.c.h.b16 %v3653
    %v4038 = vunpack.c.l.b16 %v3654
    %v4039 = vunpack.c.h.b16 %v3654
    %v4040 = vunpack.c.l.b16 %v3655
    %v4041 = vunpack.c.h.b16 %v3655
    %v4042 = vunpack.c.l.b16 %v3656
    %v4043 = vunpack.c.h.b16 %v3656
    %v4044 = vunpack.c.l.b16 %v3657
    %v4045 = vunpack.c.h.b16 %v3657
    %v4046 = vunpack.c.l.b16 %v3658
    %v4047 = vunpack.c.h.b16 %v3658
    %v4048 = vunpack.c.l.b16 %v3659
    %v4049 = vunpack.c.h.b16 %v3659
    %v4050 = vpack.c.b16 %v3796, %v3794
    %v4051 = vpack.c.b16 %v3797, %v3795
    %v4052 = vpack.c.b16 %v3800, %v3798
    %v4053 = vpack.c.b16 %v3801, %v3799
    %v4054 = vpack.c.b16 %v3804, %v3802
    %v4055 = vpack.c.b16 %v3805, %v3803
    %v4056 = vpack.c.b16 %v3808, %v3806
    %v4057 = vpack.c.b16 %v3809, %v3807
    %v4058 = vpack.c.b16 %v3812, %v3810
    %v4059 = vpack.c.b16 %v3813, %v3811
    %v4060 = vpack.c.b16 %v3816, %v3814
    %v4061 = vpack.c.b16 %v3817, %v3815
    %v4062 = vpack.c.b16 %v3820, %v3818
    %v4063 = vpack.c.b16 %v3821, %v3819
    %v4064 = vpack.c.b16 %v3824, %v3822
    %v4065 = vpack.c.b16 %v3825, %v3823
    %v4066 = vpack.c.b16 %v3828, %v3826
    %v4067 = vpack.c.b16 %v3829, %v3827
    %v4068 = vpack.c.b16 %v3832, %v3830
    %v4069 = vpack.c.b16 %v3833, %v3831
    %v4070 = vpack.c.b16 %v3836, %v3834
    %v4071 = vpack.c.b16 %v3837, %v3835
    %v4072 = vpack.c.b16 %v3840, %v3838
    %v4073 = vpack.c.b16 %v3841, %v3839
    %v4074 = vpack.c.b16 %v3844, %v3842
    %v4075 = vpack.c.b16 %v3845, %v3843
    %v4076 = vpack.c.b16 %v3848, %v3846
    %v4077 = vpack.c.b16 %v3849, %v3847
    %v4078 = vpack.c.b16 %v3852, %v3850
    %v4079 = vpack.c.b16 %v3853, %v3851
    %v4080 = vpack.c.b16 %v3856, %v3854
    %v4081 = vpack.c.b16 %v3857, %v3855
    %v4082 = vpack.c.b16 %v3860, %v3858
    %v4083 = vpack.c.b16 %v3861, %v3859
    %v4084 = vpack.c.b16 %v3864, %v3862
    %v4085 = vpack.c.b16 %v3865, %v3863
    %v4086 = vpack.c.b16 %v3868, %v3866
    %v4087 = vpack.c.b16 %v3869, %v3867
    %v4088 = vpack.c.b16 %v3872, %v3870
    %v4089 = vpack.c.b16 %v3873, %v3871
    %v4090 = vpack.c.b16 %v3876, %v3874
    %v4091 = vpack.c.b16 %v3877, %v3875
    %v4092 = vpack.c.b16 %v3880, %v3878
    %v4093 = vpack.c.b16 %v3881, %v3879
    %v4094 = vpack.c.b16 %v3884, %v3882
    %v4095 = vpack.c.b16 %v3885, %v3883
    %v4096 = vpack.c.b16 %v3888, %v3886
    %v4097 = vpack.c.b16 %v3889, %v3887
    %v4098 = vpack.c.b16 %v3892, %v3890
    %v4099 = vpack.c.b16 %v3893, %v3891
    %v4100 = vpack.c.b16 %v3896, %v3894
    %v4101 = vpack.c.b16 %v3897, %v3895
    %v4102 = vpack.c.b16 %v3900, %v3898
    %v4103 = vpack.c.b16 %v3901, %v3899
    %v4104 = vpack.c.b16 %v3904, %v3902
    %v4105 = vpack.c.b16 %v3905, %v3903
    %v4106 = vpack.c.b16 %v3908, %v3906
    %v4107 = vpack.c.b16 %v3909, %v3907
    %v4108 = vpack.c.b16 %v3912, %v3910
    %v4109 = vpack.c.b16 %v3913, %v3911
    %v4110 = vpack.c.b16 %v3916, %v3914
    %v4111 = vpack.c.b16 %v3917, %v3915
    %v4112 = vpack.c.b16 %v3920, %v3918
    %v4113 = vpack.c.b16 %v3921, %v3919
    %v4114 = vpack.c.b16 %v3924, %v3922
    %v4115 = vpack.c.b16 %v3925, %v3923
    %v4116 = vpack.c.b16 %v3928, %v3926
    %v4117 = vpack.c.b16 %v3929, %v3927
    %v4118 = vpack.c.b16 %v3932, %v3930
    %v4119 = vpack.c.b16 %v3933, %v3931
    %v4120 = vpack.c.b16 %v3936, %v3934
    %v4121 = vpack.c.b16 %v3937, %v3935
    %v4122 = vpack.c.b16 %v3940, %v3938
    %v4123 = vpack.c.b16 %v3941, %v3939
    %v4124 = vpack.c.b16 %v3944, %v3942
    %v4125 = vpack.c.b16 %v3945, %v3943
    %v4126 = vpack.c.b16 %v3948, %v3946
    %v4127 = vpack.c.b16 %v3949, %v3947
    %v4128 = vpack.c.b16 %v3952, %v3950
    %v4129 = vpack.c.b16 %v3953, %v3951
    %v4130 = vpack.c.b16 %v3956, %v3954
    %v4131 = vpack.c.b16 %v3957, %v3955
    %v4132 = vpack.c.b16 %v3960, %v3958
    %v4133 = vpack.c.b16 %v3961, %v3959
    %v4134 = vpack.c.b16 %v3964, %v3962
    %v4135 = vpack.c.b16 %v3965, %v3963
    %v4136 = vpack.c.b16 %v3968, %v3966
    %v4137 = vpack.c.b16 %v3969, %v3967
    %v4138 = vpack.c.b16 %v3972, %v3970
    %v4139 = vpack.c.b16 %v3973, %v3971
    %v4140 = vpack.c.b16 %v3976, %v3974
    %v4141 = vpack.c.b16 %v3977, %v3975
    %v4142 = vpack.c.b16 %v3980, %v3978
    %v4143 = vpack.c.b16 %v3981, %v3979
    %v4144 = vpack.c.b16 %v3984, %v3982
    %v4145 = vpack.c.b16 %v3985, %v3983
    %v4146 = vpack.c.b16 %v3988, %v3986
    %v4147 = vpack.c.b16 %v3989, %v3987
    %v4148 = vpack.c.b16 %v3992, %v3990
    %v4149 = vpack.c.b16 %v3993, %v3991
    %v4150 = vpack.c.b16 %v3996, %v3994
    %v4151 = vpack.c.b16 %v3997, %v3995
    %v4152 = vpack.c.b16 %v4000, %v3998
    %v4153 = vpack.c.b16 %v4001, %v3999
    %v4154 = vpack.c.b16 %v4004, %v4002
    %v4155 = vpack.c.b16 %v4005, %v4003
    %v4156 = vpack.c.b16 %v4008, %v4006
    %v4157 = vpack.c.b16 %v4009, %v4007
    %v4158 = vpack.c.b16 %v4012, %v4010
    %v4159 = vpack.c.b16 %v4013, %v4011
    %v4160 = vpack.c.b16 %v4016, %v4014
    %v4161 = vpack.c.b16 %v4017, %v4015
    %v4162 = vpack.c.b16 %v4020, %v4018
    %v4163 = vpack.c.b16 %v4021, %v4019
    %v4164 = vpack.c.b16 %v4024, %v4022
    %v4165 = vpack.c.b16 %v4025, %v4023
    %v4166 = vpack.c.b16 %v4028, %v4026
    %v4167 = vpack.c.b16 %v4029, %v4027
    %v4168 = vpack.c.b16 %v4032, %v4030
    %v4169 = vpack.c.b16 %v4033, %v4031
    %v4170 = vpack.c.b16 %v4036, %v4034
    %v4171 = vpack.c.b16 %v4037, %v4035
    %v4172 = vpack.c.b16 %v4040, %v4038
    %v4173 = vpack.c.b16 %v4041, %v4039
    %v4174 = vpack.c.b16 %v4044, %v4042
    %v4175 = vpack.c.b16 %v4045, %v4043
    %v4176 = vpack.c.b16 %v4048, %v4046
    %v4177 = vpack.c.b16 %v4049, %v4047
    %4306 = vmatpush.bf16.msra.mxu0 %v4064
    %4307 = vmatpush.bf16.msra.mxu0 %v4062
    %4308 = vmatpush.bf16.msra.mxu0 %v4060
    %4309 = vmatpush.bf16.msra.mxu0 %v4058
    %4310 = vmatpush.bf16.msra.mxu0 %v4056
    %4311 = vmatpush.bf16.msra.mxu0 %v4054
    %4312 = vmatpush.bf16.msra.mxu0 %v4052
    %4313 = vmatpush.bf16.msra.mxu0 %v4050
    %4314 = vmatmul.bf16.gmra.mxu0 %v3524
    %v4315 = vpop.f32.mrf.mxu0
    %v4316 = vadd.f32 %v3662, %v4315
    %v4317 = vpop.f32.mrf.mxu0
    %4318 = vdwg.mxu0
    %4319 = vmatpush.bf16.msra.mxu0 %v4080
    %4320 = vmatpush.bf16.msra.mxu0 %v4078
    %4321 = vmatpush.bf16.msra.mxu0 %v4076
    %4322 = vmatpush.bf16.msra.mxu0 %v4074
    %4323 = vmatpush.bf16.msra.mxu0 %v4072
    %4324 = vmatpush.bf16.msra.mxu0 %v4070
    %4325 = vmatpush.bf16.msra.mxu0 %v4068
    %4326 = vmatpush.bf16.msra.mxu0 %v4066
    %4327 = vmatmul.bf16.gmra.mxu0 %v3525
    %v4328 = vpop.f32.mrf.mxu0
    %v4329 = vadd.f32 %v4316, %v4328
    %v4330 = vpop.f32.mrf.mxu0
    %4331 = vdwg.mxu0
    %4332 = vmatpush.bf16.msra.mxu0 %v4096
    %4333 = vmatpush.bf16.msra.mxu0 %v4094
    %4334 = vmatpush.bf16.msra.mxu0 %v4092
    %4335 = vmatpush.bf16.msra.mxu0 %v4090
    %4336 = vmatpush.bf16.msra.mxu0 %v4088
    %4337 = vmatpush.bf16.msra.mxu0 %v4086
    %4338 = vmatpush.bf16.msra.mxu0 %v4084
    %4339 = vmatpush.bf16.msra.mxu0 %v4082
    %4340 = vmatmul.bf16.gmra.mxu0 %v3526
    %v4341 = vpop.f32.mrf.mxu0
    %v4342 = vadd.f32 %v4329, %v4341
    %v4343 = vpop.f32.mrf.mxu0
    %4344 = vdwg.mxu0
    %4345 = vmatpush.bf16.msra.mxu0 %v4112
    %4346 = vmatpush.bf16.msra.mxu0 %v4110
    %4347 = vmatpush.bf16.msra.mxu0 %v4108
    %4348 = vmatpush.bf16.msra.mxu0 %v4106
    %4349 = vmatpush.bf16.msra.mxu0 %v4104
    %4350 = vmatpush.bf16.msra.mxu0 %v4102
    %4351 = vmatpush.bf16.msra.mxu0 %v4100
    %4352 = vmatpush.bf16.msra.mxu0 %v4098
    %4353 = vmatmul.bf16.gmra.mxu0 %v3527
    %v4354 = vpop.f32.mrf.mxu0
    %v4355 = vadd.f32 %v4342, %v4354
    %v4356 = vpop.f32.mrf.mxu0
    %4357 = vdwg.mxu0
    %4358 = vmatpush.bf16.msra.mxu0 %v4128
    %4359 = vmatpush.bf16.msra.mxu0 %v4126
    %4360 = vmatpush.bf16.msra.mxu0 %v4124
    %4361 = vmatpush.bf16.msra.mxu0 %v4122
    %4362 = vmatpush.bf16.msra.mxu0 %v4120
    %4363 = vmatpush.bf16.msra.mxu0 %v4118
    %4364 = vmatpush.bf16.msra.mxu0 %v4116
    %4365 = vmatpush.bf16.msra.mxu0 %v4114
    %4366 = vmatmul.bf16.gmra.mxu0 %v3528
    %v4367 = vpop.f32.mrf.mxu0
    %v4368 = vadd.f32 %v4355, %v4367
    %v4369 = vpop.f32.mrf.mxu0
    %4370 = vdwg.mxu0
    %4371 = vmatpush.bf16.msra.mxu0 %v4144
    %4372 = vmatpush.bf16.msra.mxu0 %v4142
    %4373 = vmatpush.bf16.msra.mxu0 %v4140
    %4374 = vmatpush.bf16.msra.mxu0 %v4138
    %4375 = vmatpush.bf16.msra.mxu0 %v4136
    %4376 = vmatpush.bf16.msra.mxu0 %v4134
    %4377 = vmatpush.bf16.msra.mxu0 %v4132
    %4378 = vmatpush.bf16.msra.mxu0 %v4130
    %4379 = vmatmul.bf16.gmra.mxu0 %v3529
    %v4380 = vpop.f32.mrf.mxu0
    %v4381 = vadd.f32 %v4368, %v4380
    %v4382 = vpop.f32.mrf.mxu0
    %4383 = vdwg.mxu0
    %4384 = vmatpush.bf16.msra.mxu0 %v4160
    %4385 = vmatpush.bf16.msra.mxu0 %v4158
    %4386 = vmatpush.bf16.msra.mxu0 %v4156
    %4387 = vmatpush.bf16.msra.mxu0 %v4154
    %4388 = vmatpush.bf16.msra.mxu0 %v4152
    %4389 = vmatpush.bf16.msra.mxu0 %v4150
    %4390 = vmatpush.bf16.msra.mxu0 %v4148
    %4391 = vmatpush.bf16.msra.mxu0 %v4146
    %4392 = vmatmul.bf16.gmra.mxu0 %v3530
    %v4393 = vpop.f32.mrf.mxu0
    %v4394 = vadd.f32 %v4381, %v4393
    %v4395 = vpop.f32.mrf.mxu0
    %4396 = vdwg.mxu0
    %4397 = vmatpush.bf16.msra.mxu0 %v4176
    %4398 = vmatpush.bf16.msra.mxu0 %v4174
    %4399 = vmatpush.bf16.msra.mxu0 %v4172
    %4400 = vmatpush.bf16.msra.mxu0 %v4170
    %4401 = vmatpush.bf16.msra.mxu0 %v4168
    %4402 = vmatpush.bf16.msra.mxu0 %v4166
    %4403 = vmatpush.bf16.msra.mxu0 %v4164
    %4404 = vmatpush.bf16.msra.mxu0 %v4162
    %4405 = vmatmul.bf16.gmra.mxu0 %v3531
    %v4406 = vpop.f32.mrf.mxu0
    %v4407 = vadd.f32 %v4394, %v4406
    %v4408 = vpop.f32.mrf.mxu0
    %4409 = vdwg.mxu0
    %4410 = vmatpush.bf16.msra.mxu0 %v4065
    %4411 = vmatpush.bf16.msra.mxu0 %v4063
    %4412 = vmatpush.bf16.msra.mxu0 %v4061
    %4413 = vmatpush.bf16.msra.mxu0 %v4059
    %4414 = vmatpush.bf16.msra.mxu0 %v4057
    %4415 = vmatpush.bf16.msra.mxu0 %v4055
    %4416 = vmatpush.bf16.msra.mxu0 %v4053
    %4417 = vmatpush.bf16.msra.mxu0 %v4051
    %4418 = vmatmul.bf16.gmra.mxu0 %v3524
    %v4419 = vpop.f32.mrf.mxu0
    %v4420 = vadd.f32 %v3663, %v4419
    %v4421 = vpop.f32.mrf.mxu0
    %4422 = vdwg.mxu0
    %4423 = vmatpush.bf16.msra.mxu0 %v4081
    %4424 = vmatpush.bf16.msra.mxu0 %v4079
    %4425 = vmatpush.bf16.msra.mxu0 %v4077
    %4426 = vmatpush.bf16.msra.mxu0 %v4075
    %4427 = vmatpush.bf16.msra.mxu0 %v4073
    %4428 = vmatpush.bf16.msra.mxu0 %v4071
    %4429 = vmatpush.bf16.msra.mxu0 %v4069
    %4430 = vmatpush.bf16.msra.mxu0 %v4067
    %4431 = vmatmul.bf16.gmra.mxu0 %v3525
    %v4432 = vpop.f32.mrf.mxu0
    %v4433 = vadd.f32 %v4420, %v4432
    %v4434 = vpop.f32.mrf.mxu0
    %4435 = vdwg.mxu0
    %4436 = vmatpush.bf16.msra.mxu0 %v4097
    %4437 = vmatpush.bf16.msra.mxu0 %v4095
    %4438 = vmatpush.bf16.msra.mxu0 %v4093
    %4439 = vmatpush.bf16.msra.mxu0 %v4091
    %4440 = vmatpush.bf16.msra.mxu0 %v4089
    %4441 = vmatpush.bf16.msra.mxu0 %v4087
    %4442 = vmatpush.bf16.msra.mxu0 %v4085
    %4443 = vmatpush.bf16.msra.mxu0 %v4083
    %4444 = vmatmul.bf16.gmra.mxu0 %v3526
    %v4445 = vpop.f32.mrf.mxu0
    %v4446 = vadd.f32 %v4433, %v4445
    %v4447 = vpop.f32.mrf.mxu0
    %4448 = vdwg.mxu0
    %4449 = vmatpush.bf16.msra.mxu0 %v4113
    %4450 = vmatpush.bf16.msra.mxu0 %v4111
    %4451 = vmatpush.bf16.msra.mxu0 %v4109
    %4452 = vmatpush.bf16.msra.mxu0 %v4107
    %4453 = vmatpush.bf16.msra.mxu0 %v4105
    %4454 = vmatpush.bf16.msra.mxu0 %v4103
    %4455 = vmatpush.bf16.msra.mxu0 %v4101
    %4456 = vmatpush.bf16.msra.mxu0 %v4099
    %4457 = vmatmul.bf16.gmra.mxu0 %v3527
    %v4458 = vpop.f32.mrf.mxu0
    %v4459 = vadd.f32 %v4446, %v4458
    %v4460 = vpop.f32.mrf.mxu0
    %4461 = vdwg.mxu0
    %4462 = vmatpush.bf16.msra.mxu0 %v4129
    %4463 = vmatpush.bf16.msra.mxu0 %v4127
    %4464 = vmatpush.bf16.msra.mxu0 %v4125
    %4465 = vmatpush.bf16.msra.mxu0 %v4123
    %4466 = vmatpush.bf16.msra.mxu0 %v4121
    %4467 = vmatpush.bf16.msra.mxu0 %v4119
    %4468 = vmatpush.bf16.msra.mxu0 %v4117
    %4469 = vmatpush.bf16.msra.mxu0 %v4115
    %4470 = vmatmul.bf16.gmra.mxu0 %v3528
    %v4471 = vpop.f32.mrf.mxu0
    %v4472 = vadd.f32 %v4459, %v4471
    %v4473 = vpop.f32.mrf.mxu0
    %4474 = vdwg.mxu0
    %4475 = vmatpush.bf16.msra.mxu0 %v4145
    %4476 = vmatpush.bf16.msra.mxu0 %v4143
    %4477 = vmatpush.bf16.msra.mxu0 %v4141
    %4478 = vmatpush.bf16.msra.mxu0 %v4139
    %4479 = vmatpush.bf16.msra.mxu0 %v4137
    %4480 = vmatpush.bf16.msra.mxu0 %v4135
    %4481 = vmatpush.bf16.msra.mxu0 %v4133
    %4482 = vmatpush.bf16.msra.mxu0 %v4131
    %4483 = vmatmul.bf16.gmra.mxu0 %v3529
    %v4484 = vpop.f32.mrf.mxu0
    %v4485 = vadd.f32 %v4472, %v4484
    %v4486 = vpop.f32.mrf.mxu0
    %4487 = vdwg.mxu0
    %4488 = vmatpush.bf16.msra.mxu0 %v4161
    %4489 = vmatpush.bf16.msra.mxu0 %v4159
    %4490 = vmatpush.bf16.msra.mxu0 %v4157
    %4491 = vmatpush.bf16.msra.mxu0 %v4155
    %4492 = vmatpush.bf16.msra.mxu0 %v4153
    %4493 = vmatpush.bf16.msra.mxu0 %v4151
    %4494 = vmatpush.bf16.msra.mxu0 %v4149
    %4495 = vmatpush.bf16.msra.mxu0 %v4147
    %4496 = vmatmul.bf16.gmra.mxu0 %v3530
    %v4497 = vpop.f32.mrf.mxu0
    %v4498 = vadd.f32 %v4485, %v4497
    %v4499 = vpop.f32.mrf.mxu0
    %4500 = vdwg.mxu0
    %4501 = vmatpush.bf16.msra.mxu0 %v4177
    %4502 = vmatpush.bf16.msra.mxu0 %v4175
    %4503 = vmatpush.bf16.msra.mxu0 %v4173
    %4504 = vmatpush.bf16.msra.mxu0 %v4171
    %4505 = vmatpush.bf16.msra.mxu0 %v4169
    %4506 = vmatpush.bf16.msra.mxu0 %v4167
    %4507 = vmatpush.bf16.msra.mxu0 %v4165
    %4508 = vmatpush.bf16.msra.mxu0 %v4163
    %4509 = vmatmul.bf16.gmra.mxu0 %v3531
    %v4510 = vpop.f32.mrf.mxu0
    %v4511 = vadd.f32 %v4498, %v4510
    %v4512 = vpop.f32.mrf.mxu0
    %4513 = vdwg.mxu0
    %v4514 = vtanh.pop %v4407
    %v4515 = vtanh.pop %v4511
    %4516 = vst [vmem:[#allocation23] sm:$0xff] %v4514
    %4517 = vst [vmem:[#allocation23 + $0x8] sm:$0xff] %v4515
    // Predicated region
    $region102: #{tpu_custom_call.1} parent=1 // pred_check
      _
    $region103: #{tpu_custom_call.1} parent=1 // pred_check_branch
      %4519 = sbr.rel (0) target = $region105
    $region104: #{tpu_custom_call.1} parent=1 // pred_region
      %4521 = vsyncadd [#allocation8], 0
      %s4523 = sshll.u32 [#allocation23], 4
      %s4524 = int_to_ptr.vmem [resolvable:$true] %s4523
      %s4525 = sshll.u32 %s15, 4
      %s4526 = int_to_ptr.hbm [resolvable:$true] %s4525
      %4528 = dma.vmem_to_hbm [thread:$0]  %s4524, 256, %s4526, [#allocation8]
    $region105: #{tpu_custom_call.1} parent=1 // pred_fallthru
      _
    // Predicated region
    $region106: #{tpu_custom_call.1} parent=1 // pred_check
      _
    $region107: #{tpu_custom_call.1} parent=1 // pred_check_branch
      %4530 = sbr.rel (0) target = $region109
    $region108: #{tpu_custom_call.1} parent=1 // pred_region
      %4532 = dma.done [#allocation8], 256
    $region109: #{tpu_custom_call.1} parent=1 // pred_fallthru
      _
    %4533 = vsyncpa [#allocation7], 1
    %4534 = vsyncpa [#allocation10], 1
    %4535 = vsyncpa [#allocation13], 1
    %4536 = vsyncpa [#allocation16], 1
    %4537 = vsyncpa [#allocation19], 1
    %4538 = vsyncpa [#allocation22], 1
    %4539 = vsyncpa [#allocation8], 1
  %4540 = vsyncmov [#allocation5]
  %s4541 = vpop.sfrf %4540
  %p4542 = scmp.eq.s32.totalorder %s4541, 0
  %p4543 = pneg %p4542
  %4545 = shalt.err (%p4543)
  %s4546 = scalar_lea.sflag [#allocation5], 1
  %4547 = vsyncmov %s4546
  %s4548 = vpop.sfrf %4547
  %p4549 = scmp.eq.s32.totalorder %s4548, 0
  %p4550 = pneg %p4549
  %4552 = shalt.err (%p4550)
  %s4553 = scalar_lea.sflag [#allocation5], 2
  %4554 = vsyncmov %s4553
  %s4555 = vpop.sfrf %4554
  %p4556 = scmp.eq.s32.totalorder %s4555, 0
  %p4557 = pneg %p4556
  %4559 = shalt.err (%p4557)

</llo_original>
